<compile_context>
chip_gen: v6e
topology: v6e:2x2x1
jax: 0.10.0
libtpu: 0.0.40
codegen_flags: <defaults>
</compile_context>

<pallas_src>
import functools
import math

import jax
import jax.numpy as jnp
import numpy as np
from jax.experimental import pallas as pl
from jax.experimental.pallas import tpu as pltpu

_BN_EPS = 1e-5
_LANE = 128      # lane width: pad all feature dims to a multiple of this
_ROW_BLOCK = 8   # rows (batch elements) per grid step, sublane aligned

# (kh, kw, stride, pad, bn+gelu?)
_CONFIGS = [
    (6, 3, 2, 1, True),   # cnn_block1: Conv2d(2, 4)   + BN + GELU
    (5, 4, 2, 1, True),   # cnn_block2: Conv2d(4, 8)   + BN + GELU
    (3, 3, 1, 1, True),   # cnn_block3: Conv2d(8, 16)  + BN + GELU
    (3, 3, 1, 1, True),   # cnn_block4: Conv2d(16, 32) + BN + GELU
    (3, 3, 1, 1, True),   # cnn_block5: Conv2d(32, 64) + BN + GELU
    (3, 3, 1, 1, False),  # cnn_block6: Conv2d(64, 64) only
]
_NUM_LAYERS = len(_CONFIGS)


def _round_up(x, m):
    return (x + m - 1) // m * m


# ---------------------------------------------------------------------------
# Pallas kernel: full encoder = 6 chained MXU matmuls + BN affine + GELU
# ---------------------------------------------------------------------------
def _encoder_kernel(*refs, num_layers, apply_gelu):
    # refs = x, w_1..w_L, scale_1..scale_L, bias_1..bias_L, out
    x_ref = refs[0]
    w_refs = refs[1:1 + num_layers]
    s_refs = refs[1 + num_layers:1 + 2 * num_layers]
    b_refs = refs[1 + 2 * num_layers:1 + 3 * num_layers]
    o_ref = refs[1 + 3 * num_layers]

    inv_sqrt2 = 1.0 / math.sqrt(2.0)
    a = x_ref[...]                                    # (ROW_BLOCK, D0_pad) f32
    for l in range(num_layers):
        # bf16 operands on the MXU, f32 accumulate
        acc = jnp.dot(a.astype(jnp.bfloat16), w_refs[l][...],
                      preferred_element_type=jnp.float32)
        y = acc * s_refs[l][...] + b_refs[l][...]     # fused conv-bias + BN
        if apply_gelu[l]:
            # exact (erf-based) GELU, matching torch.nn.GELU() default
            y = 0.5 * y * (1.0 + jax.lax.erf(y * inv_sqrt2))
        a = y
    o_ref[...] = a.astype(o_ref.dtype)


def _fused_forward_call(xp, weights, scales, biases):
    rows, d0_pad = xp.shape
    out_cols = weights[-1].shape[1]
    kernel = functools.partial(
        _encoder_kernel,
        num_layers=len(weights),
        apply_gelu=tuple(c[4] for c in _CONFIGS))

    in_specs = [pl.BlockSpec((_ROW_BLOCK, d0_pad), lambda i: (i, 0))]
    for arr in (*weights, *scales, *biases):
        # full-array blocks with constant index maps -> VMEM-resident
        in_specs.append(pl.BlockSpec(arr.shape, lambda i: (0, 0)))

    return pl.pallas_call(
        kernel,
        out_shape=jax.ShapeDtypeStruct((rows, out_cols), jnp.float32),
        grid_spec=pltpu.PrefetchScalarGridSpec(
            num_scalar_prefetch=0,
            grid=(rows // _ROW_BLOCK,),
            in_specs=in_specs,
            out_specs=pl.BlockSpec((_ROW_BLOCK, out_cols), lambda i: (i, 0)),
        ),
        compiler_params=pltpu.CompilerParams(
            dimension_semantics=("parallel",),     # rows split across TCs (v7x)
            vmem_limit_bytes=32 * 1024 * 1024,     # far above ~4 MB footprint
        ),
    )(xp, *weights, *scales, *biases)


# ---------------------------------------------------------------------------
# One-time weight preparation: fold conv (+ BN) into dense per-layer matmuls
# ---------------------------------------------------------------------------
def _patch_matrix(hin, win, kh, kw, stride, pad):
    """Static 0/1 matrix P[t, m, p]: output position m takes input pixel p at tap t."""
    hout = (hin + 2 * pad - kh) // stride + 1
    wout = (win + 2 * pad - kw) // stride + 1
    p = np.zeros((kh * kw, hout * wout, hin * win), np.float32)
    for oh in range(hout):
        for ow in range(wout):
            m = oh * wout + ow
            for i in range(kh):
                for j in range(kw):
                    h = oh * stride - pad + i
                    w = ow * stride - pad + j
                    if 0 <= h < hin and 0 <= w < win:
                        p[i * kw + j, m, h * win + w] = 1.0
    return p, hout, wout


def prepare_encoder(params, in_hw):
    """Fold conv + eval-mode BN into padded dense matmuls (runs once)."""
    hin, win = in_hw
    cin0 = int(params[0]["w"].shape[1])
    d0 = hin * win * cin0

    weights, scales, biases = [], [], []
    for p, (kh, kw, stride, pad, bn_gelu) in zip(params, _CONFIGS):
        w = p["w"]                                   # (Cout, Cin, kh, kw)
        cout, cin = int(w.shape[0]), int(w.shape[1])
        pm, hout, wout = _patch_matrix(hin, win, kh, kw, stride, pad)
        d_in = hin * win * cin
        d_out = hout * wout * cout

        # tap-major weight tensor (kh*kw, Cin, Cout), matching the patch matrix
        w3 = jnp.transpose(w, (2, 3, 1, 0)).reshape(kh * kw, cin, cout)
        # dense (Toeplitz) fold of the convolution:
        #   W_eff[(p,cin), (m,cout)] = sum_t P[t,m,p] * w3[t,cin,cout]
        w_eff = jnp.einsum("tmp,tio->pimo", jnp.asarray(pm), w3,
                           precision=jax.lax.Precision.HIGHEST)
        w_eff = w_eff.reshape(d_in, d_out)

        # fold conv bias + eval-mode BatchNorm into per-channel scale / bias
        if bn_gelu:
            ch_scale = p["gamma"] / jnp.sqrt(p["rvar"] + _BN_EPS)
            ch_bias = (p["b"] - p["rmean"]) * ch_scale + p["beta"]
        else:
            ch_scale = jnp.ones((cout,), jnp.float32)
            ch_bias = p["b"]
        scale_col = jnp.tile(ch_scale, hout * wout)   # (m, cout) ordering
        bias_col = jnp.tile(ch_bias, hout * wout)

        # zero-pad to lane multiples (padding contributes exact zeros)
        d_in_pad = _round_up(d_in, _LANE)
        d_out_pad = _round_up(d_out, _LANE)
        w_eff = jnp.pad(w_eff, ((0, d_in_pad - d_in), (0, d_out_pad - d_out)))
        scale_col = jnp.pad(scale_col, (0, d_out_pad - d_out))
        bias_col = jnp.pad(bias_col, (0, d_out_pad - d_out))

        weights.append(w_eff.astype(jnp.bfloat16))
        scales.append(scale_col.reshape(1, d_out_pad).astype(jnp.float32))
        biases.append(bias_col.reshape(1, d_out_pad).astype(jnp.float32))
        hin, win = hout, wout

    last_cout = int(params[-1]["w"].shape[0])
    meta = dict(d0=d0, d0_pad=_round_up(d0, _LANE),
                hout=hin, wout=win, cout=last_cout,
                d_out=hin * win * last_cout)
    return (weights, scales, biases), meta


# ---------------------------------------------------------------------------
# Forward
# ---------------------------------------------------------------------------
def _forward_impl(x_nchw, prepared, *, meta):
    weights, scales, biases = prepared
    n, cin, h, w = x_nchw.shape
    assert h * w * cin == meta["d0"], (h, w, cin, meta["d0"])

    x_flat = jnp.transpose(x_nchw, (0, 2, 3, 1)).reshape(n, h * w * cin)
    rows = max(_round_up(n, _ROW_BLOCK), 2 * _ROW_BLOCK)   # >=2 grid blocks (v7x)
    xp = jnp.pad(x_flat.astype(jnp.float32),
                 ((0, rows - n), (0, meta["d0_pad"] - meta["d0"])))

    out = _fused_forward_call(xp, weights, scales, biases)
    y = out[:n, :meta["d_out"]].reshape(n, meta["hout"], meta["wout"],
                                        meta["cout"])
    return jnp.transpose(y, (0, 3, 1, 2))                  # NHWC -> NCHW


def make_cnn_encoder(params, in_hw):
    prepared, meta = prepare_encoder(params, in_hw)        # one-time fold
    fwd = jax.jit(functools.partial(_forward_impl, meta=meta))

    def forward(x_nchw):
        return fwd(x_nchw, prepared)
    return forward


# ---------------------------------------------------------------------------
# Deterministic parameter init (matches shapes / init of the nn.Module)
# ---------------------------------------------------------------------------
def init_params(key):
    shapes = [(2, 4, 6, 3), (4, 8, 5, 4), (8, 16, 3, 3),
              (16, 32, 3, 3), (32, 64, 3, 3), (64, 64, 3, 3)]
    params = []
    for cin, cout, kh, kw in shapes:
        key, k_w, k_b = jax.random.split(key, 3)
        fan_in = cin * kh * kw
        std = math.sqrt(2.0 / (1.0 + 0.1 ** 2)) / math.sqrt(fan_in)  # kaiming, a=0.1
        w = std * jax.random.normal(k_w, (cout, cin, kh, kw), jnp.float32)
        bound = 1.0 / math.sqrt(fan_in)
        b = jax.random.uniform(k_b, (cout,), jnp.float32, -bound, bound)
        params.append(dict(
            w=w, b=b,
            gamma=jnp.ones((cout,), jnp.float32),
            beta=jnp.zeros((cout,), jnp.float32),
            rmean=jnp.zeros((cout,), jnp.float32),
            rvar=jnp.ones((cout,), jnp.float32),
        ))
    return params


# ---------------------------------------------------------------------------
# Pure-JAX reference (lax.conv, f32) for correctness checking
# ---------------------------------------------------------------------------
def _reference_forward(x_nchw, params):
    x = x_nchw
    for p, (kh, kw, stride, pad, act) in zip(params, _CONFIGS):
        y = jax.lax.conv_general_dilated(
            x, p["w"], window_strides=(stride, stride),
            padding=((pad, pad), (pad, pad)),
            dimension_numbers=("NCHW", "OIHW", "NCHW"))
        y = y + p["b"][None, :, None, None]
        if act:
            y = (y - p["rmean"][None, :, None, None]) / jnp.sqrt(
                p["rvar"][None, :, None, None] + _BN_EPS)
            y = y * p["gamma"][None, :, None, None] + p["beta"][None, :, None, None]
            y = 0.5 * y * (1.0 + jax.lax.erf(y * (1.0 / math.sqrt(2.0))))
        x = y
    return x


if __name__ == "__main__":
    key = jax.random.PRNGKey(0)
    key, k_x = jax.random.split(key)
    # small input consistent with the module: batch=2, in_channels=2, 16x16
    x = jax.random.normal(k_x, (2, 2, 16, 16), jnp.float32)
    params = init_params(key)

    forward = make_cnn_encoder(params, in_hw=(16, 16))
    out = jax.block_until_ready(forward(x))

    ref = jax.block_until_ready(_reference_forward(x, params))
    assert out.shape == ref.shape, (out.shape, ref.shape)
    # bf16 MXU operands (f32 accumulate) vs the f32 lax.conv reference:
    # tolerance relaxed accordingly; structural bugs would give O(1) errors.
    np.testing.assert_allclose(np.asarray(out), np.asarray(ref),
                               atol=5e-2, rtol=5e-2)
    print("KERNEL_OK")
</pallas_src>

<mosaic_0001>
module attributes {stable_mosaic.version = 11 : i64} {
  func.func @_encoder_kernel(%arg0: i32, %arg1: memref<8x512xf32, #tpu.memory_space<vmem>>, %arg2: memref<512x256xbf16, #tpu.memory_space<vmem>>, %arg3: memref<256x128xbf16, #tpu.memory_space<vmem>>, %arg4: memref<128x256xbf16, #tpu.memory_space<vmem>>, %arg5: memref<256x384xbf16, #tpu.memory_space<vmem>>, %arg6: memref<384x768xbf16, #tpu.memory_space<vmem>>, %arg7: memref<768x768xbf16, #tpu.memory_space<vmem>>, %arg8: memref<1x256xf32, #tpu.memory_space<vmem>>, %arg9: memref<1x128xf32, #tpu.memory_space<vmem>>, %arg10: memref<1x256xf32, #tpu.memory_space<vmem>>, %arg11: memref<1x384xf32, #tpu.memory_space<vmem>>, %arg12: memref<1x768xf32, #tpu.memory_space<vmem>>, %arg13: memref<1x768xf32, #tpu.memory_space<vmem>>, %arg14: memref<1x256xf32, #tpu.memory_space<vmem>>, %arg15: memref<1x128xf32, #tpu.memory_space<vmem>>, %arg16: memref<1x256xf32, #tpu.memory_space<vmem>>, %arg17: memref<1x384xf32, #tpu.memory_space<vmem>>, %arg18: memref<1x768xf32, #tpu.memory_space<vmem>>, %arg19: memref<1x768xf32, #tpu.memory_space<vmem>>, %arg20: memref<8x768xf32, #tpu.memory_space<vmem>>) attributes {dimension_semantics = [#tpu.dimension_semantics<parallel>], iteration_bounds = array<i64: 2>, scalar_prefetch = 0 : i64, scratch_operands = 0 : i64, tpu.core_type = #tpu.core_type<tc>, window_params = [{transform_indices = @transform_0, window_bounds = array<i64: 8, 512>}, {pipeline_mode = #tpu.pipeline_mode<synchronous>, transform_indices = @transform_1, window_bounds = array<i64: 512, 256>}, {pipeline_mode = #tpu.pipeline_mode<synchronous>, transform_indices = @transform_2, window_bounds = array<i64: 256, 128>}, {pipeline_mode = #tpu.pipeline_mode<synchronous>, transform_indices = @transform_3, window_bounds = array<i64: 128, 256>}, {pipeline_mode = #tpu.pipeline_mode<synchronous>, transform_indices = @transform_4, window_bounds = array<i64: 256, 384>}, {pipeline_mode = #tpu.pipeline_mode<synchronous>, transform_indices = @transform_5, window_bounds = array<i64: 384, 768>}, {pipeline_mode = #tpu.pipeline_mode<synchronous>, transform_indices = @transform_6, window_bounds = array<i64: 768, 768>}, {pipeline_mode = #tpu.pipeline_mode<synchronous>, transform_indices = @transform_7, window_bounds = array<i64: 1, 256>}, {pipeline_mode = #tpu.pipeline_mode<synchronous>, transform_indices = @transform_8, window_bounds = array<i64: 1, 128>}, {pipeline_mode = #tpu.pipeline_mode<synchronous>, transform_indices = @transform_9, window_bounds = array<i64: 1, 256>}, {pipeline_mode = #tpu.pipeline_mode<synchronous>, transform_indices = @transform_10, window_bounds = array<i64: 1, 384>}, {pipeline_mode = #tpu.pipeline_mode<synchronous>, transform_indices = @transform_11, window_bounds = array<i64: 1, 768>}, {pipeline_mode = #tpu.pipeline_mode<synchronous>, transform_indices = @transform_12, window_bounds = array<i64: 1, 768>}, {pipeline_mode = #tpu.pipeline_mode<synchronous>, transform_indices = @transform_13, window_bounds = array<i64: 1, 256>}, {pipeline_mode = #tpu.pipeline_mode<synchronous>, transform_indices = @transform_14, window_bounds = array<i64: 1, 128>}, {pipeline_mode = #tpu.pipeline_mode<synchronous>, transform_indices = @transform_15, window_bounds = array<i64: 1, 256>}, {pipeline_mode = #tpu.pipeline_mode<synchronous>, transform_indices = @transform_16, window_bounds = array<i64: 1, 384>}, {pipeline_mode = #tpu.pipeline_mode<synchronous>, transform_indices = @transform_17, window_bounds = array<i64: 1, 768>}, {pipeline_mode = #tpu.pipeline_mode<synchronous>, transform_indices = @transform_18, window_bounds = array<i64: 1, 768>}, {transform_indices = @transform_19, window_bounds = array<i64: 8, 768>}]} {
    %c0 = arith.constant 0 : index
    %c0_0 = arith.constant 0 : index
    %0 = vector.load %arg1[%c0, %c0_0] : memref<8x512xf32, #tpu.memory_space<vmem>>, vector<8x512xf32>
    %1 = arith.truncf %0 : vector<8x512xf32> to vector<8x512xbf16>
    %c0_1 = arith.constant 0 : index
    %c0_2 = arith.constant 0 : index
    %2 = vector.load %arg2[%c0_1, %c0_2] : memref<512x256xbf16, #tpu.memory_space<vmem>>, vector<512x256xbf16>
    %cst = arith.constant dense<0.000000e+00> : vector<8x256xf32>
    %3 = tpu.matmul %1, %2, %cst {dimension_numbers = #tpu.dot_dimension_numbers<[1], [0], [0], [1], [0, 0, 1, 1], [], []>} : vector<8x512xbf16>, vector<512x256xbf16>, vector<8x256xf32> -> vector<8x256xf32>
    %c0_3 = arith.constant 0 : index
    %c0_4 = arith.constant 0 : index
    %4 = vector.load %arg8[%c0_3, %c0_4] : memref<1x256xf32, #tpu.memory_space<vmem>>, vector<1x256xf32>
    %5 = vector.broadcast %4 : vector<1x256xf32> to vector<8x256xf32>
    %6 = arith.mulf %3, %5 : vector<8x256xf32>
    %c0_5 = arith.constant 0 : index
    %c0_6 = arith.constant 0 : index
    %7 = vector.load %arg14[%c0_5, %c0_6] : memref<1x256xf32, #tpu.memory_space<vmem>>, vector<1x256xf32>
    %8 = vector.broadcast %7 : vector<1x256xf32> to vector<8x256xf32>
    %9 = arith.addf %6, %8 : vector<8x256xf32>
    %cst_7 = arith.constant 5.000000e-01 : f32
    %10 = vector.broadcast %cst_7 : f32 to vector<8x256xf32>
    %11 = arith.mulf %10, %9 : vector<8x256xf32>
    %cst_8 = arith.constant 0.707106769 : f32
    %12 = vector.broadcast %cst_8 : f32 to vector<8x256xf32>
    %13 = arith.mulf %9, %12 : vector<8x256xf32>
    %14 = math.erf %13 : vector<8x256xf32>
    %cst_9 = arith.constant 1.000000e+00 : f32
    %15 = vector.broadcast %cst_9 : f32 to vector<8x256xf32>
    %16 = arith.addf %15, %14 : vector<8x256xf32>
    %17 = arith.mulf %11, %16 : vector<8x256xf32>
    %18 = arith.truncf %17 : vector<8x256xf32> to vector<8x256xbf16>
    %c0_10 = arith.constant 0 : index
    %c0_11 = arith.constant 0 : index
    %19 = vector.load %arg3[%c0_10, %c0_11] : memref<256x128xbf16, #tpu.memory_space<vmem>>, vector<256x128xbf16>
    %cst_12 = arith.constant dense<0.000000e+00> : vector<8x128xf32>
    %20 = tpu.matmul %18, %19, %cst_12 {dimension_numbers = #tpu.dot_dimension_numbers<[1], [0], [0], [1], [0, 0, 1, 1], [], []>} : vector<8x256xbf16>, vector<256x128xbf16>, vector<8x128xf32> -> vector<8x128xf32>
    %c0_13 = arith.constant 0 : index
    %c0_14 = arith.constant 0 : index
    %21 = vector.load %arg9[%c0_13, %c0_14] : memref<1x128xf32, #tpu.memory_space<vmem>>, vector<1x128xf32>
    %22 = vector.broadcast %21 : vector<1x128xf32> to vector<8x128xf32>
    %23 = arith.mulf %20, %22 : vector<8x128xf32>
    %c0_15 = arith.constant 0 : index
    %c0_16 = arith.constant 0 : index
    %24 = vector.load %arg15[%c0_15, %c0_16] : memref<1x128xf32, #tpu.memory_space<vmem>>, vector<1x128xf32>
    %25 = vector.broadcast %24 : vector<1x128xf32> to vector<8x128xf32>
    %26 = arith.addf %23, %25 : vector<8x128xf32>
    %cst_17 = arith.constant 5.000000e-01 : f32
    %27 = vector.broadcast %cst_17 : f32 to vector<8x128xf32>
    %28 = arith.mulf %27, %26 : vector<8x128xf32>
    %cst_18 = arith.constant 0.707106769 : f32
    %29 = vector.broadcast %cst_18 : f32 to vector<8x128xf32>
    %30 = arith.mulf %26, %29 : vector<8x128xf32>
    %31 = math.erf %30 : vector<8x128xf32>
    %cst_19 = arith.constant 1.000000e+00 : f32
    %32 = vector.broadcast %cst_19 : f32 to vector<8x128xf32>
    %33 = arith.addf %32, %31 : vector<8x128xf32>
    %34 = arith.mulf %28, %33 : vector<8x128xf32>
    %35 = arith.truncf %34 : vector<8x128xf32> to vector<8x128xbf16>
    %c0_20 = arith.constant 0 : index
    %c0_21 = arith.constant 0 : index
    %36 = vector.load %arg4[%c0_20, %c0_21] : memref<128x256xbf16, #tpu.memory_space<vmem>>, vector<128x256xbf16>
    %cst_22 = arith.constant dense<0.000000e+00> : vector<8x256xf32>
    %37 = tpu.matmul %35, %36, %cst_22 {dimension_numbers = #tpu.dot_dimension_numbers<[1], [0], [0], [1], [0, 0, 1, 1], [], []>} : vector<8x128xbf16>, vector<128x256xbf16>, vector<8x256xf32> -> vector<8x256xf32>
    %c0_23 = arith.constant 0 : index
    %c0_24 = arith.constant 0 : index
    %38 = vector.load %arg10[%c0_23, %c0_24] : memref<1x256xf32, #tpu.memory_space<vmem>>, vector<1x256xf32>
    %39 = vector.broadcast %38 : vector<1x256xf32> to vector<8x256xf32>
    %40 = arith.mulf %37, %39 : vector<8x256xf32>
    %c0_25 = arith.constant 0 : index
    %c0_26 = arith.constant 0 : index
    %41 = vector.load %arg16[%c0_25, %c0_26] : memref<1x256xf32, #tpu.memory_space<vmem>>, vector<1x256xf32>
    %42 = vector.broadcast %41 : vector<1x256xf32> to vector<8x256xf32>
    %43 = arith.addf %40, %42 : vector<8x256xf32>
    %cst_27 = arith.constant 5.000000e-01 : f32
    %44 = vector.broadcast %cst_27 : f32 to vector<8x256xf32>
    %45 = arith.mulf %44, %43 : vector<8x256xf32>
    %cst_28 = arith.constant 0.707106769 : f32
    %46 = vector.broadcast %cst_28 : f32 to vector<8x256xf32>
    %47 = arith.mulf %43, %46 : vector<8x256xf32>
    %48 = math.erf %47 : vector<8x256xf32>
    %cst_29 = arith.constant 1.000000e+00 : f32
    %49 = vector.broadcast %cst_29 : f32 to vector<8x256xf32>
    %50 = arith.addf %49, %48 : vector<8x256xf32>
    %51 = arith.mulf %45, %50 : vector<8x256xf32>
    %52 = arith.truncf %51 : vector<8x256xf32> to vector<8x256xbf16>
    %c0_30 = arith.constant 0 : index
    %c0_31 = arith.constant 0 : index
    %53 = vector.load %arg5[%c0_30, %c0_31] : memref<256x384xbf16, #tpu.memory_space<vmem>>, vector<256x384xbf16>
    %cst_32 = arith.constant dense<0.000000e+00> : vector<8x384xf32>
    %54 = tpu.matmul %52, %53, %cst_32 {dimension_numbers = #tpu.dot_dimension_numbers<[1], [0], [0], [1], [0, 0, 1, 1], [], []>} : vector<8x256xbf16>, vector<256x384xbf16>, vector<8x384xf32> -> vector<8x384xf32>
    %c0_33 = arith.constant 0 : index
    %c0_34 = arith.constant 0 : index
    %55 = vector.load %arg11[%c0_33, %c0_34] : memref<1x384xf32, #tpu.memory_space<vmem>>, vector<1x384xf32>
    %56 = vector.broadcast %55 : vector<1x384xf32> to vector<8x384xf32>
    %57 = arith.mulf %54, %56 : vector<8x384xf32>
    %c0_35 = arith.constant 0 : index
    %c0_36 = arith.constant 0 : index
    %58 = vector.load %arg17[%c0_35, %c0_36] : memref<1x384xf32, #tpu.memory_space<vmem>>, vector<1x384xf32>
    %59 = vector.broadcast %58 : vector<1x384xf32> to vector<8x384xf32>
    %60 = arith.addf %57, %59 : vector<8x384xf32>
    %cst_37 = arith.constant 5.000000e-01 : f32
    %61 = vector.broadcast %cst_37 : f32 to vector<8x384xf32>
    %62 = arith.mulf %61, %60 : vector<8x384xf32>
    %cst_38 = arith.constant 0.707106769 : f32
    %63 = vector.broadcast %cst_38 : f32 to vector<8x384xf32>
    %64 = arith.mulf %60, %63 : vector<8x384xf32>
    %65 = math.erf %64 : vector<8x384xf32>
    %cst_39 = arith.constant 1.000000e+00 : f32
    %66 = vector.broadcast %cst_39 : f32 to vector<8x384xf32>
    %67 = arith.addf %66, %65 : vector<8x384xf32>
    %68 = arith.mulf %62, %67 : vector<8x384xf32>
    %69 = arith.truncf %68 : vector<8x384xf32> to vector<8x384xbf16>
    %c0_40 = arith.constant 0 : index
    %c0_41 = arith.constant 0 : index
    %70 = vector.load %arg6[%c0_40, %c0_41] : memref<384x768xbf16, #tpu.memory_space<vmem>>, vector<384x768xbf16>
    %cst_42 = arith.constant dense<0.000000e+00> : vector<8x768xf32>
    %71 = tpu.matmul %69, %70, %cst_42 {dimension_numbers = #tpu.dot_dimension_numbers<[1], [0], [0], [1], [0, 0, 1, 1], [], []>} : vector<8x384xbf16>, vector<384x768xbf16>, vector<8x768xf32> -> vector<8x768xf32>
    %c0_43 = arith.constant 0 : index
    %c0_44 = arith.constant 0 : index
    %72 = vector.load %arg12[%c0_43, %c0_44] : memref<1x768xf32, #tpu.memory_space<vmem>>, vector<1x768xf32>
    %73 = vector.broadcast %72 : vector<1x768xf32> to vector<8x768xf32>
    %74 = arith.mulf %71, %73 : vector<8x768xf32>
    %c0_45 = arith.constant 0 : index
    %c0_46 = arith.constant 0 : index
    %75 = vector.load %arg18[%c0_45, %c0_46] : memref<1x768xf32, #tpu.memory_space<vmem>>, vector<1x768xf32>
    %76 = vector.broadcast %75 : vector<1x768xf32> to vector<8x768xf32>
    %77 = arith.addf %74, %76 : vector<8x768xf32>
    %cst_47 = arith.constant 5.000000e-01 : f32
    %78 = vector.broadcast %cst_47 : f32 to vector<8x768xf32>
    %79 = arith.mulf %78, %77 : vector<8x768xf32>
    %cst_48 = arith.constant 0.707106769 : f32
    %80 = vector.broadcast %cst_48 : f32 to vector<8x768xf32>
    %81 = arith.mulf %77, %80 : vector<8x768xf32>
    %82 = math.erf %81 : vector<8x768xf32>
    %cst_49 = arith.constant 1.000000e+00 : f32
    %83 = vector.broadcast %cst_49 : f32 to vector<8x768xf32>
    %84 = arith.addf %83, %82 : vector<8x768xf32>
    %85 = arith.mulf %79, %84 : vector<8x768xf32>
    %86 = arith.truncf %85 : vector<8x768xf32> to vector<8x768xbf16>
    %c0_50 = arith.constant 0 : index
    %c0_51 = arith.constant 0 : index
    %87 = vector.load %arg7[%c0_50, %c0_51] : memref<768x768xbf16, #tpu.memory_space<vmem>>, vector<768x768xbf16>
    %cst_52 = arith.constant dense<0.000000e+00> : vector<8x768xf32>
    %88 = tpu.matmul %86, %87, %cst_52 {dimension_numbers = #tpu.dot_dimension_numbers<[1], [0], [0], [1], [0, 0, 1, 1], [], []>} : vector<8x768xbf16>, vector<768x768xbf16>, vector<8x768xf32> -> vector<8x768xf32>
    %c0_53 = arith.constant 0 : index
    %c0_54 = arith.constant 0 : index
    %89 = vector.load %arg13[%c0_53, %c0_54] : memref<1x768xf32, #tpu.memory_space<vmem>>, vector<1x768xf32>
    %90 = vector.broadcast %89 : vector<1x768xf32> to vector<8x768xf32>
    %91 = arith.mulf %88, %90 : vector<8x768xf32>
    %c0_55 = arith.constant 0 : index
    %c0_56 = arith.constant 0 : index
    %92 = vector.load %arg19[%c0_55, %c0_56] : memref<1x768xf32, #tpu.memory_space<vmem>>, vector<1x768xf32>
    %93 = vector.broadcast %92 : vector<1x768xf32> to vector<8x768xf32>
    %94 = arith.addf %91, %93 : vector<8x768xf32>
    %c0_57 = arith.constant 0 : index
    %c0_58 = arith.constant 0 : index
    %95 = vector.load %arg20[%c0_57, %c0_58] : memref<8x768xf32, #tpu.memory_space<vmem>>, vector<8x768xf32>
    tpu.vector_store %arg20[%c0_57, %c0_58], %94 {strides = array<i32>} : memref<8x768xf32, #tpu.memory_space<vmem>>, vector<8x768xf32>,
    return
  }
  func.func @transform_0(%arg0: i32) -> (i32, i32) {
    %c0_i32 = arith.constant 0 : i32
    %c0_i32_0 = arith.constant 0 : i32
    return %arg0, %c0_i32 : i32, i32
  }
  func.func @transform_1(%arg0: i32) -> (i32, i32) {
    %c0_i32 = arith.constant 0 : i32
    %c0_i32_0 = arith.constant 0 : i32
    %c0_i32_1 = arith.constant 0 : i32
    return %c0_i32, %c0_i32_0 : i32, i32
  }
  func.func @transform_2(%arg0: i32) -> (i32, i32) {
    %c0_i32 = arith.constant 0 : i32
    %c0_i32_0 = arith.constant 0 : i32
    %c0_i32_1 = arith.constant 0 : i32
    return %c0_i32, %c0_i32_0 : i32, i32
  }
  func.func @transform_3(%arg0: i32) -> (i32, i32) {
    %c0_i32 = arith.constant 0 : i32
    %c0_i32_0 = arith.constant 0 : i32
    %c0_i32_1 = arith.constant 0 : i32
    return %c0_i32, %c0_i32_0 : i32, i32
  }
  func.func @transform_4(%arg0: i32) -> (i32, i32) {
    %c0_i32 = arith.constant 0 : i32
    %c0_i32_0 = arith.constant 0 : i32
    %c0_i32_1 = arith.constant 0 : i32
    return %c0_i32, %c0_i32_0 : i32, i32
  }
  func.func @transform_5(%arg0: i32) -> (i32, i32) {
    %c0_i32 = arith.constant 0 : i32
    %c0_i32_0 = arith.constant 0 : i32
    %c0_i32_1 = arith.constant 0 : i32
    return %c0_i32, %c0_i32_0 : i32, i32
  }
  func.func @transform_6(%arg0: i32) -> (i32, i32) {
    %c0_i32 = arith.constant 0 : i32
    %c0_i32_0 = arith.constant 0 : i32
    %c0_i32_1 = arith.constant 0 : i32
    return %c0_i32, %c0_i32_0 : i32, i32
  }
  func.func @transform_7(%arg0: i32) -> (i32, i32) {
    %c0_i32 = arith.constant 0 : i32
    %c0_i32_0 = arith.constant 0 : i32
    %c0_i32_1 = arith.constant 0 : i32
    return %c0_i32, %c0_i32_0 : i32, i32
  }
  func.func @transform_8(%arg0: i32) -> (i32, i32) {
    %c0_i32 = arith.constant 0 : i32
    %c0_i32_0 = arith.constant 0 : i32
    %c0_i32_1 = arith.constant 0 : i32
    return %c0_i32, %c0_i32_0 : i32, i32
  }
  func.func @transform_9(%arg0: i32) -> (i32, i32) {
    %c0_i32 = arith.constant 0 : i32
    %c0_i32_0 = arith.constant 0 : i32
    %c0_i32_1 = arith.constant 0 : i32
    return %c0_i32, %c0_i32_0 : i32, i32
  }
  func.func @transform_10(%arg0: i32) -> (i32, i32) {
    %c0_i32 = arith.constant 0 : i32
    %c0_i32_0 = arith.constant 0 : i32
    %c0_i32_1 = arith.constant 0 : i32
    return %c0_i32, %c0_i32_0 : i32, i32
  }
  func.func @transform_11(%arg0: i32) -> (i32, i32) {
    %c0_i32 = arith.constant 0 : i32
    %c0_i32_0 = arith.constant 0 : i32
    %c0_i32_1 = arith.constant 0 : i32
    return %c0_i32, %c0_i32_0 : i32, i32
  }
  func.func @transform_12(%arg0: i32) -> (i32, i32) {
    %c0_i32 = arith.constant 0 : i32
    %c0_i32_0 = arith.constant 0 : i32
    %c0_i32_1 = arith.constant 0 : i32
    return %c0_i32, %c0_i32_0 : i32, i32
  }
  func.func @transform_13(%arg0: i32) -> (i32, i32) {
    %c0_i32 = arith.constant 0 : i32
    %c0_i32_0 = arith.constant 0 : i32
    %c0_i32_1 = arith.constant 0 : i32
    return %c0_i32, %c0_i32_0 : i32, i32
  }
  func.func @transform_14(%arg0: i32) -> (i32, i32) {
    %c0_i32 = arith.constant 0 : i32
    %c0_i32_0 = arith.constant 0 : i32
    %c0_i32_1 = arith.constant 0 : i32
    return %c0_i32, %c0_i32_0 : i32, i32
  }
  func.func @transform_15(%arg0: i32) -> (i32, i32) {
    %c0_i32 = arith.constant 0 : i32
    %c0_i32_0 = arith.constant 0 : i32
    %c0_i32_1 = arith.constant 0 : i32
    return %c0_i32, %c0_i32_0 : i32, i32
  }
  func.func @transform_16(%arg0: i32) -> (i32, i32) {
    %c0_i32 = arith.constant 0 : i32
    %c0_i32_0 = arith.constant 0 : i32
    %c0_i32_1 = arith.constant 0 : i32
    return %c0_i32, %c0_i32_0 : i32, i32
  }
  func.func @transform_17(%arg0: i32) -> (i32, i32) {
    %c0_i32 = arith.constant 0 : i32
    %c0_i32_0 = arith.constant 0 : i32
    %c0_i32_1 = arith.constant 0 : i32
    return %c0_i32, %c0_i32_0 : i32, i32
  }
  func.func @transform_18(%arg0: i32) -> (i32, i32) {
    %c0_i32 = arith.constant 0 : i32
    %c0_i32_0 = arith.constant 0 : i32
    %c0_i32_1 = arith.constant 0 : i32
    return %c0_i32, %c0_i32_0 : i32, i32
  }
  func.func @transform_19(%arg0: i32) -> (i32, i32) {
    %c0_i32 = arith.constant 0 : i32
    %c0_i32_0 = arith.constant 0 : i32
    return %arg0, %c0_i32 : i32, i32
  }
}

</mosaic_0001>

<llo_original>
// kernel: _forward_impl.1
$region0: #{_forward_impl.1}
  #allocation0 [shape = 'u32[]', space=smem, size = 0x4, offset = 0x4, fixed_abs, tag = 'smem constant byte address 0x4 - core index']
  #allocation1 [shape = 'u32[144,128]{1,0:T(1,128)}', space=vmem, size = 0x12000, scoped, tag = 'internal scratch']
  %s0 = inlined_call_operand.vmem [shape: f32[16,512], index: 0, kind: input, shape index: {}]
  %s1 = inlined_call_operand.hbm [shape: bf16[512,256], index: 1, kind: input, shape index: {}]
  %s2 = inlined_call_operand.hbm [shape: bf16[256,128], index: 2, kind: input, shape index: {}]
  %s3 = inlined_call_operand.hbm [shape: bf16[128,256], index: 3, kind: input, shape index: {}]
  %s4 = inlined_call_operand.hbm [shape: bf16[256,384], index: 4, kind: input, shape index: {}]
  %s5 = inlined_call_operand.hbm [shape: bf16[384,768], index: 5, kind: input, shape index: {}]
  %s6 = inlined_call_operand.hbm [shape: bf16[768,768], index: 6, kind: input, shape index: {}]
  %s7 = inlined_call_operand.hbm [shape: f32[1,256], index: 7, kind: input, shape index: {}]
  %s8 = inlined_call_operand.hbm [shape: f32[1,128], index: 8, kind: input, shape index: {}]
  %s9 = inlined_call_operand.hbm [shape: f32[1,256], index: 9, kind: input, shape index: {}]
  %s10 = inlined_call_operand.hbm [shape: f32[1,384], index: 10, kind: input, shape index: {}]
  %s11 = inlined_call_operand.hbm [shape: f32[1,768], index: 11, kind: input, shape index: {}]
  %s12 = inlined_call_operand.hbm [shape: f32[1,768], index: 12, kind: input, shape index: {}]
  %s13 = inlined_call_operand.hbm [shape: f32[1,256], index: 13, kind: input, shape index: {}]
  %s14 = inlined_call_operand.hbm [shape: f32[1,128], index: 14, kind: input, shape index: {}]
  %s15 = inlined_call_operand.hbm [shape: f32[1,256], index: 15, kind: input, shape index: {}]
  %s16 = inlined_call_operand.hbm [shape: f32[1,384], index: 16, kind: input, shape index: {}]
  %s17 = inlined_call_operand.hbm [shape: f32[1,768], index: 17, kind: input, shape index: {}]
  %s18 = inlined_call_operand.hbm [shape: f32[1,768], index: 18, kind: input, shape index: {}]
  %s19 = inlined_call_operand.vmem [shape: f32[16,768], index: 19, kind: output, shape index: {}]
  %s20 = sld [smem:[#allocation0]]
  $region181: #{_forward_impl.1} parent=0
    _
  %s22 = ssub.s32 1, %s20
  %s23 = scalar_select 0, %s22, %s20
  $region1: #{_forward_impl.1} parent=0
    #allocation2 [shape = 'u8[262144]{0}', space=vmem, size = 0x40000, scoped, tag = 'input window, operand 1, single buffered']
    #allocation3 [shape = 's32[2]{0}', space=sflag, size = 0x8, scoped, tag = 'scoped memory for _forward_impl.1']
    #allocation4 [shape = 'u8[65536]{0}', space=vmem, size = 0x10000, scoped, tag = 'input window, operand 2, single buffered']
    #allocation5 [shape = 's32[1]{0}', space=sflag, size = 0x4, scoped, tag = 'scoped memory for _forward_impl.1']
    #allocation6 [shape = 'u8[65536]{0}', space=vmem, size = 0x10000, scoped, tag = 'input window, operand 3, single buffered']
    #allocation7 [shape = 'u8[196608]{0}', space=vmem, size = 0x30000, scoped, tag = 'input window, operand 4, single buffered']
    #allocation8 [shape = 's32[1]{0}', space=sflag, size = 0x4, scoped, tag = 'scoped memory for _forward_impl.1']
    #allocation9 [shape = 'u8[589824]{0}', space=vmem, size = 0x90000, scoped, tag = 'input window, operand 5, single buffered']
    #allocation10 [shape = 'u8[1179648]{0}', space=vmem, size = 0x120000, scoped, tag = 'input window, operand 6, single buffered']
    #allocation11 [shape = 's32[1]{0}', space=sflag, size = 0x4, scoped, tag = 'scoped memory for _forward_impl.1']
    #allocation12 [shape = 'u8[1024]{0}', space=vmem, size = 0x400, scoped, tag = 'input window, operand 7, single buffered']
    #allocation13 [shape = 'u8[512]{0}', space=vmem, size = 0x400, scoped, tag = 'input window, operand 8, single buffered']
    #allocation14 [shape = 's32[1]{0}', space=sflag, size = 0x4, scoped, tag = 'scoped memory for _forward_impl.1']
    #allocation15 [shape = 'u8[1024]{0}', space=vmem, size = 0x400, scoped, tag = 'input window, operand 9, single buffered']
    #allocation16 [shape = 'u8[1536]{0}', space=vmem, size = 0x800, scoped, tag = 'input window, operand 10, single buffered']
    #allocation17 [shape = 's32[1]{0}', space=sflag, size = 0x4, scoped, tag = 'scoped memory for _forward_impl.1']
    #allocation18 [shape = 'u8[3072]{0}', space=vmem, size = 0xc00, scoped, tag = 'input window, operand 11, single buffered']
    #allocation19 [shape = 'u8[3072]{0}', space=vmem, size = 0xc00, scoped, tag = 'input window, operand 12, single buffered']
    #allocation20 [shape = 's32[1]{0}', space=sflag, size = 0x4, scoped, tag = 'scoped memory for _forward_impl.1']
    #allocation21 [shape = 'u8[1024]{0}', space=vmem, size = 0x400, scoped, tag = 'input window, operand 13, single buffered']
    #allocation22 [shape = 'u8[512]{0}', space=vmem, size = 0x400, scoped, tag = 'input window, operand 14, single buffered']
    #allocation23 [shape = 's32[1]{0}', space=sflag, size = 0x4, scoped, tag = 'scoped memory for _forward_impl.1']
    #allocation24 [shape = 'u8[1024]{0}', space=vmem, size = 0x400, scoped, tag = 'input window, operand 15, single buffered']
    #allocation25 [shape = 'u8[1536]{0}', space=vmem, size = 0x800, scoped, tag = 'input window, operand 16, single buffered']
    #allocation26 [shape = 's32[1]{0}', space=sflag, size = 0x4, scoped, tag = 'scoped memory for _forward_impl.1']
    #allocation27 [shape = 'u8[3072]{0}', space=vmem, size = 0xc00, scoped, tag = 'input window, operand 17, single buffered']
    #allocation28 [shape = 'u8[3072]{0}', space=vmem, size = 0xc00, scoped, tag = 'input window, operand 18, single buffered']
    #allocation29 [shape = 's32[1]{0}', space=sflag, size = 0x4, scoped, tag = 'scoped memory for _forward_impl.1']
    %24 = vsyncpa [#allocation3], 0
    %25 = vsyncpa [#allocation5], 0
    %26 = vsyncpa [#allocation8], 0
    %27 = vsyncpa [#allocation11], 0
    %28 = vsyncpa [#allocation14], 0
    %29 = vsyncpa [#allocation17], 0
    %30 = vsyncpa [#allocation20], 0
    %31 = vsyncpa [#allocation23], 0
    %32 = vsyncpa [#allocation26], 0
    %33 = vsyncpa [#allocation29], 0
    loop: start=0, step=1, limit=4
    $region2: #{_forward_impl.1} parent=1 // loop_pre_header
      _
    $region3: #{_forward_impl.1} parent=1 // loop_header
      %s35 = sphi 0, %s39
      %p36 = scmp.ge.s32.totalorder %s35, 4
      %s45 = sphi 0, %s47
      %s48 = sphi 0, %s45
      %s49 = sphi 0, %s48
      %s65 = sphi 0, %s49
      %s69 = sphi 0, %s69
      %s71 = sphi 0, %s69
      %s72 = sphi 0, %s71
      %s86 = sphi 0, %s72
      %s90 = sphi 0, %s90
      %s92 = sphi 0, %s90
      %s93 = sphi 0, %s92
      %s107 = sphi 0, %s93
      %s111 = sphi 0, %s111
      %s113 = sphi 0, %s111
      %s114 = sphi 0, %s113
      %s128 = sphi 0, %s114
      %s132 = sphi 0, %s132
      %s134 = sphi 0, %s132
      %s135 = sphi 0, %s134
      %s149 = sphi 0, %s135
      %s153 = sphi 0, %s153
      %s155 = sphi 0, %s153
      %s156 = sphi 0, %s155
      %s170 = sphi 0, %s156
      %s174 = sphi 0, %s174
      %s176 = sphi 0, %s174
      %s177 = sphi 0, %s176
      %s191 = sphi 0, %s177
      %s195 = sphi 0, %s195
      %s197 = sphi 0, %s195
      %s198 = sphi 0, %s197
      %s212 = sphi 0, %s198
      %s216 = sphi 0, %s216
      %s218 = sphi 0, %s216
      %s219 = sphi 0, %s218
      %s233 = sphi 0, %s219
      %s237 = sphi 0, %s237
      %s239 = sphi 0, %s237
      %s240 = sphi 0, %s239
      %s254 = sphi 0, %s240
      %s258 = sphi 0, %s258
      %s260 = sphi 0, %s258
      %s261 = sphi 0, %s260
      %s275 = sphi 0, %s261
      %s279 = sphi 0, %s279
      %s281 = sphi 0, %s279
      %s282 = sphi 0, %s281
      %s296 = sphi 0, %s282
      %s300 = sphi 0, %s300
      %s302 = sphi 0, %s300
      %s303 = sphi 0, %s302
      %s317 = sphi 0, %s303
      %s321 = sphi 0, %s321
      %s323 = sphi 0, %s321
      %s324 = sphi 0, %s323
      %s338 = sphi 0, %s324
      %s342 = sphi 0, %s342
      %s344 = sphi 0, %s342
      %s345 = sphi 0, %s344
      %s359 = sphi 0, %s345
      %s363 = sphi 0, %s363
      %s365 = sphi 0, %s363
      %s366 = sphi 0, %s365
      %s380 = sphi 0, %s366
      %s384 = sphi 0, %s384
      %s386 = sphi 0, %s384
      %s387 = sphi 0, %s386
      %s401 = sphi 0, %s387
      %s405 = sphi 0, %s405
      %s407 = sphi 0, %s405
      %s408 = sphi 0, %s407
      %s422 = sphi 0, %s408
      %s426 = sphi 0, %s426
      %s428 = sphi 0, %s426
      %s429 = sphi 0, %s428
      %s443 = sphi 0, %s429
      %s449 = sphi 0, %s451
      %s452 = sphi 0, %s449
      %s453 = sphi 0, %s452
      %s469 = sphi 0, %s453
    $region4: #{_forward_impl.1} parent=1 // loop_header_branch
      %38 = sbr.rel (%p36) target = $region8
    $region5: #{_forward_impl.1} parent=1 // loop_body
      %s40 = ssub.s32 %s35, 1
      %s41 = ssub.s32 %s35, 2
      %s42 = sadd.s32 %s35, 1
      %s43 = ssub.s32 %s35, %s42
      %p44 = scmp.eq.s32.totalorder %s43, 0
      %s46 = sadd.s32 %s45, 1
      %s47 = scalar_select %p44, %s45, %s46
      %p50 = pneg %p44
      %p51 = scmp.eq.s32.totalorder %s35, 1
      %p52 = por %p50, %p51
      %p53 = scmp.ne.s32.totalorder %s45, %s48
      %p54 = scmp.eq.s32.totalorder %s35, 0
      %p55 = por %p53, %p54
      %p56 = scmp.ne.s32.totalorder %s45, %s48
      %p57 = scmp.eq.s32.totalorder %s40, 1
      %p58 = por %p56, %p57
      %p59 = scmp.ne.s32.totalorder %s48, %s49
      %p60 = scmp.eq.s32.totalorder %s40, 0
      %p61 = por %p59, %p60
      %p62 = scmp.ne.s32.totalorder %s48, %s49
      %p63 = scmp.eq.s32.totalorder %s41, 1
      %p64 = por %p62, %p63
      %p66 = scmp.ne.s32.totalorder %s49, %s65
      %p67 = scmp.eq.s32.totalorder %s41, 0
      %p68 = por %p66, %p67
      %s70 = sadd.s32 %s69, 1
      %p73 = scmp.eq.s32.totalorder %s35, 1
      %p74 = scmp.ne.s32.totalorder %s69, %s71
      %p75 = scmp.eq.s32.totalorder %s35, 0
      %p76 = por %p74, %p75
      %p77 = scmp.ne.s32.totalorder %s69, %s71
      %p78 = scmp.eq.s32.totalorder %s40, 1
      %p79 = por %p77, %p78
      %p80 = scmp.ne.s32.totalorder %s71, %s72
      %p81 = scmp.eq.s32.totalorder %s40, 0
      %p82 = por %p80, %p81
      %p83 = scmp.ne.s32.totalorder %s71, %s72
      %p84 = scmp.eq.s32.totalorder %s41, 1
      %p85 = por %p83, %p84
      %p87 = scmp.ne.s32.totalorder %s72, %s86
      %p88 = scmp.eq.s32.totalorder %s41, 0
      %p89 = por %p87, %p88
      %s91 = sadd.s32 %s90, 1
      %p94 = scmp.eq.s32.totalorder %s35, 1
      %p95 = scmp.ne.s32.totalorder %s90, %s92
      %p96 = scmp.eq.s32.totalorder %s35, 0
      %p97 = por %p95, %p96
      %p98 = scmp.ne.s32.totalorder %s90, %s92
      %p99 = scmp.eq.s32.totalorder %s40, 1
      %p100 = por %p98, %p99
      %p101 = scmp.ne.s32.totalorder %s92, %s93
      %p102 = scmp.eq.s32.totalorder %s40, 0
      %p103 = por %p101, %p102
      %p104 = scmp.ne.s32.totalorder %s92, %s93
      %p105 = scmp.eq.s32.totalorder %s41, 1
      %p106 = por %p104, %p105
      %p108 = scmp.ne.s32.totalorder %s93, %s107
      %p109 = scmp.eq.s32.totalorder %s41, 0
      %p110 = por %p108, %p109
      %s112 = sadd.s32 %s111, 1
      %p115 = scmp.eq.s32.totalorder %s35, 1
      %p116 = scmp.ne.s32.totalorder %s111, %s113
      %p117 = scmp.eq.s32.totalorder %s35, 0
      %p118 = por %p116, %p117
      %p119 = scmp.ne.s32.totalorder %s111, %s113
      %p120 = scmp.eq.s32.totalorder %s40, 1
      %p121 = por %p119, %p120
      %p122 = scmp.ne.s32.totalorder %s113, %s114
      %p123 = scmp.eq.s32.totalorder %s40, 0
      %p124 = por %p122, %p123
      %p125 = scmp.ne.s32.totalorder %s113, %s114
      %p126 = scmp.eq.s32.totalorder %s41, 1
      %p127 = por %p125, %p126
      %p129 = scmp.ne.s32.totalorder %s114, %s128
      %p130 = scmp.eq.s32.totalorder %s41, 0
      %p131 = por %p129, %p130
      %s133 = sadd.s32 %s132, 1
      %p136 = scmp.eq.s32.totalorder %s35, 1
      %p137 = scmp.ne.s32.totalorder %s132, %s134
      %p138 = scmp.eq.s32.totalorder %s35, 0
      %p139 = por %p137, %p138
      %p140 = scmp.ne.s32.totalorder %s132, %s134
      %p141 = scmp.eq.s32.totalorder %s40, 1
      %p142 = por %p140, %p141
      %p143 = scmp.ne.s32.totalorder %s134, %s135
      %p144 = scmp.eq.s32.totalorder %s40, 0
      %p145 = por %p143, %p144
      %p146 = scmp.ne.s32.totalorder %s134, %s135
      %p147 = scmp.eq.s32.totalorder %s41, 1
      %p148 = por %p146, %p147
      %p150 = scmp.ne.s32.totalorder %s135, %s149
      %p151 = scmp.eq.s32.totalorder %s41, 0
      %p152 = por %p150, %p151
      %s154 = sadd.s32 %s153, 1
      %p157 = scmp.eq.s32.totalorder %s35, 1
      %p158 = scmp.ne.s32.totalorder %s153, %s155
      %p159 = scmp.eq.s32.totalorder %s35, 0
      %p160 = por %p158, %p159
      %p161 = scmp.ne.s32.totalorder %s153, %s155
      %p162 = scmp.eq.s32.totalorder %s40, 1
      %p163 = por %p161, %p162
      %p164 = scmp.ne.s32.totalorder %s155, %s156
      %p165 = scmp.eq.s32.totalorder %s40, 0
      %p166 = por %p164, %p165
      %p167 = scmp.ne.s32.totalorder %s155, %s156
      %p168 = scmp.eq.s32.totalorder %s41, 1
      %p169 = por %p167, %p168
      %p171 = scmp.ne.s32.totalorder %s156, %s170
      %p172 = scmp.eq.s32.totalorder %s41, 0
      %p173 = por %p171, %p172
      %s175 = sadd.s32 %s174, 1
      %p178 = scmp.eq.s32.totalorder %s35, 1
      %p179 = scmp.ne.s32.totalorder %s174, %s176
      %p180 = scmp.eq.s32.totalorder %s35, 0
      %p181 = por %p179, %p180
      %p182 = scmp.ne.s32.totalorder %s174, %s176
      %p183 = scmp.eq.s32.totalorder %s40, 1
      %p184 = por %p182, %p183
      %p185 = scmp.ne.s32.totalorder %s176, %s177
      %p186 = scmp.eq.s32.totalorder %s40, 0
      %p187 = por %p185, %p186
      %p188 = scmp.ne.s32.totalorder %s176, %s177
      %p189 = scmp.eq.s32.totalorder %s41, 1
      %p190 = por %p188, %p189
      %p192 = scmp.ne.s32.totalorder %s177, %s191
      %p193 = scmp.eq.s32.totalorder %s41, 0
      %p194 = por %p192, %p193
      %s196 = sadd.s32 %s195, 1
      %p199 = scmp.eq.s32.totalorder %s35, 1
      %p200 = scmp.ne.s32.totalorder %s195, %s197
      %p201 = scmp.eq.s32.totalorder %s35, 0
      %p202 = por %p200, %p201
      %p203 = scmp.ne.s32.totalorder %s195, %s197
      %p204 = scmp.eq.s32.totalorder %s40, 1
      %p205 = por %p203, %p204
      %p206 = scmp.ne.s32.totalorder %s197, %s198
      %p207 = scmp.eq.s32.totalorder %s40, 0
      %p208 = por %p206, %p207
      %p209 = scmp.ne.s32.totalorder %s197, %s198
      %p210 = scmp.eq.s32.totalorder %s41, 1
      %p211 = por %p209, %p210
      %p213 = scmp.ne.s32.totalorder %s198, %s212
      %p214 = scmp.eq.s32.totalorder %s41, 0
      %p215 = por %p213, %p214
      %s217 = sadd.s32 %s216, 1
      %p220 = scmp.eq.s32.totalorder %s35, 1
      %p221 = scmp.ne.s32.totalorder %s216, %s218
      %p222 = scmp.eq.s32.totalorder %s35, 0
      %p223 = por %p221, %p222
      %p224 = scmp.ne.s32.totalorder %s216, %s218
      %p225 = scmp.eq.s32.totalorder %s40, 1
      %p226 = por %p224, %p225
      %p227 = scmp.ne.s32.totalorder %s218, %s219
      %p228 = scmp.eq.s32.totalorder %s40, 0
      %p229 = por %p227, %p228
      %p230 = scmp.ne.s32.totalorder %s218, %s219
      %p231 = scmp.eq.s32.totalorder %s41, 1
      %p232 = por %p230, %p231
      %p234 = scmp.ne.s32.totalorder %s219, %s233
      %p235 = scmp.eq.s32.totalorder %s41, 0
      %p236 = por %p234, %p235
      %s238 = sadd.s32 %s237, 1
      %p241 = scmp.eq.s32.totalorder %s35, 1
      %p242 = scmp.ne.s32.totalorder %s237, %s239
      %p243 = scmp.eq.s32.totalorder %s35, 0
      %p244 = por %p242, %p243
      %p245 = scmp.ne.s32.totalorder %s237, %s239
      %p246 = scmp.eq.s32.totalorder %s40, 1
      %p247 = por %p245, %p246
      %p248 = scmp.ne.s32.totalorder %s239, %s240
      %p249 = scmp.eq.s32.totalorder %s40, 0
      %p250 = por %p248, %p249
      %p251 = scmp.ne.s32.totalorder %s239, %s240
      %p252 = scmp.eq.s32.totalorder %s41, 1
      %p253 = por %p251, %p252
      %p255 = scmp.ne.s32.totalorder %s240, %s254
      %p256 = scmp.eq.s32.totalorder %s41, 0
      %p257 = por %p255, %p256
      %s259 = sadd.s32 %s258, 1
      %p262 = scmp.eq.s32.totalorder %s35, 1
      %p263 = scmp.ne.s32.totalorder %s258, %s260
      %p264 = scmp.eq.s32.totalorder %s35, 0
      %p265 = por %p263, %p264
      %p266 = scmp.ne.s32.totalorder %s258, %s260
      %p267 = scmp.eq.s32.totalorder %s40, 1
      %p268 = por %p266, %p267
      %p269 = scmp.ne.s32.totalorder %s260, %s261
      %p270 = scmp.eq.s32.totalorder %s40, 0
      %p271 = por %p269, %p270
      %p272 = scmp.ne.s32.totalorder %s260, %s261
      %p273 = scmp.eq.s32.totalorder %s41, 1
      %p274 = por %p272, %p273
      %p276 = scmp.ne.s32.totalorder %s261, %s275
      %p277 = scmp.eq.s32.totalorder %s41, 0
      %p278 = por %p276, %p277
      %s280 = sadd.s32 %s279, 1
      %p283 = scmp.eq.s32.totalorder %s35, 1
      %p284 = scmp.ne.s32.totalorder %s279, %s281
      %p285 = scmp.eq.s32.totalorder %s35, 0
      %p286 = por %p284, %p285
      %p287 = scmp.ne.s32.totalorder %s279, %s281
      %p288 = scmp.eq.s32.totalorder %s40, 1
      %p289 = por %p287, %p288
      %p290 = scmp.ne.s32.totalorder %s281, %s282
      %p291 = scmp.eq.s32.totalorder %s40, 0
      %p292 = por %p290, %p291
      %p293 = scmp.ne.s32.totalorder %s281, %s282
      %p294 = scmp.eq.s32.totalorder %s41, 1
      %p295 = por %p293, %p294
      %p297 = scmp.ne.s32.totalorder %s282, %s296
      %p298 = scmp.eq.s32.totalorder %s41, 0
      %p299 = por %p297, %p298
      %s301 = sadd.s32 %s300, 1
      %p304 = scmp.eq.s32.totalorder %s35, 1
      %p305 = scmp.ne.s32.totalorder %s300, %s302
      %p306 = scmp.eq.s32.totalorder %s35, 0
      %p307 = por %p305, %p306
      %p308 = scmp.ne.s32.totalorder %s300, %s302
      %p309 = scmp.eq.s32.totalorder %s40, 1
      %p310 = por %p308, %p309
      %p311 = scmp.ne.s32.totalorder %s302, %s303
      %p312 = scmp.eq.s32.totalorder %s40, 0
      %p313 = por %p311, %p312
      %p314 = scmp.ne.s32.totalorder %s302, %s303
      %p315 = scmp.eq.s32.totalorder %s41, 1
      %p316 = por %p314, %p315
      %p318 = scmp.ne.s32.totalorder %s303, %s317
      %p319 = scmp.eq.s32.totalorder %s41, 0
      %p320 = por %p318, %p319
      %s322 = sadd.s32 %s321, 1
      %p325 = scmp.eq.s32.totalorder %s35, 1
      %p326 = scmp.ne.s32.totalorder %s321, %s323
      %p327 = scmp.eq.s32.totalorder %s35, 0
      %p328 = por %p326, %p327
      %p329 = scmp.ne.s32.totalorder %s321, %s323
      %p330 = scmp.eq.s32.totalorder %s40, 1
      %p331 = por %p329, %p330
      %p332 = scmp.ne.s32.totalorder %s323, %s324
      %p333 = scmp.eq.s32.totalorder %s40, 0
      %p334 = por %p332, %p333
      %p335 = scmp.ne.s32.totalorder %s323, %s324
      %p336 = scmp.eq.s32.totalorder %s41, 1
      %p337 = por %p335, %p336
      %p339 = scmp.ne.s32.totalorder %s324, %s338
      %p340 = scmp.eq.s32.totalorder %s41, 0
      %p341 = por %p339, %p340
      %s343 = sadd.s32 %s342, 1
      %p346 = scmp.eq.s32.totalorder %s35, 1
      %p347 = scmp.ne.s32.totalorder %s342, %s344
      %p348 = scmp.eq.s32.totalorder %s35, 0
      %p349 = por %p347, %p348
      %p350 = scmp.ne.s32.totalorder %s342, %s344
      %p351 = scmp.eq.s32.totalorder %s40, 1
      %p352 = por %p350, %p351
      %p353 = scmp.ne.s32.totalorder %s344, %s345
      %p354 = scmp.eq.s32.totalorder %s40, 0
      %p355 = por %p353, %p354
      %p356 = scmp.ne.s32.totalorder %s344, %s345
      %p357 = scmp.eq.s32.totalorder %s41, 1
      %p358 = por %p356, %p357
      %p360 = scmp.ne.s32.totalorder %s345, %s359
      %p361 = scmp.eq.s32.totalorder %s41, 0
      %p362 = por %p360, %p361
      %s364 = sadd.s32 %s363, 1
      %p367 = scmp.eq.s32.totalorder %s35, 1
      %p368 = scmp.ne.s32.totalorder %s363, %s365
      %p369 = scmp.eq.s32.totalorder %s35, 0
      %p370 = por %p368, %p369
      %p371 = scmp.ne.s32.totalorder %s363, %s365
      %p372 = scmp.eq.s32.totalorder %s40, 1
      %p373 = por %p371, %p372
      %p374 = scmp.ne.s32.totalorder %s365, %s366
      %p375 = scmp.eq.s32.totalorder %s40, 0
      %p376 = por %p374, %p375
      %p377 = scmp.ne.s32.totalorder %s365, %s366
      %p378 = scmp.eq.s32.totalorder %s41, 1
      %p379 = por %p377, %p378
      %p381 = scmp.ne.s32.totalorder %s366, %s380
      %p382 = scmp.eq.s32.totalorder %s41, 0
      %p383 = por %p381, %p382
      %s385 = sadd.s32 %s384, 1
      %p388 = scmp.eq.s32.totalorder %s35, 1
      %p389 = scmp.ne.s32.totalorder %s384, %s386
      %p390 = scmp.eq.s32.totalorder %s35, 0
      %p391 = por %p389, %p390
      %p392 = scmp.ne.s32.totalorder %s384, %s386
      %p393 = scmp.eq.s32.totalorder %s40, 1
      %p394 = por %p392, %p393
      %p395 = scmp.ne.s32.totalorder %s386, %s387
      %p396 = scmp.eq.s32.totalorder %s40, 0
      %p397 = por %p395, %p396
      %p398 = scmp.ne.s32.totalorder %s386, %s387
      %p399 = scmp.eq.s32.totalorder %s41, 1
      %p400 = por %p398, %p399
      %p402 = scmp.ne.s32.totalorder %s387, %s401
      %p403 = scmp.eq.s32.totalorder %s41, 0
      %p404 = por %p402, %p403
      %s406 = sadd.s32 %s405, 1
      %p409 = scmp.eq.s32.totalorder %s35, 1
      %p410 = scmp.ne.s32.totalorder %s405, %s407
      %p411 = scmp.eq.s32.totalorder %s35, 0
      %p412 = por %p410, %p411
      %p413 = scmp.ne.s32.totalorder %s405, %s407
      %p414 = scmp.eq.s32.totalorder %s40, 1
      %p415 = por %p413, %p414
      %p416 = scmp.ne.s32.totalorder %s407, %s408
      %p417 = scmp.eq.s32.totalorder %s40, 0
      %p418 = por %p416, %p417
      %p419 = scmp.ne.s32.totalorder %s407, %s408
      %p420 = scmp.eq.s32.totalorder %s41, 1
      %p421 = por %p419, %p420
      %p423 = scmp.ne.s32.totalorder %s408, %s422
      %p424 = scmp.eq.s32.totalorder %s41, 0
      %p425 = por %p423, %p424
      %s427 = sadd.s32 %s426, 1
      %p430 = scmp.eq.s32.totalorder %s35, 1
      %p431 = scmp.ne.s32.totalorder %s426, %s428
      %p432 = scmp.eq.s32.totalorder %s35, 0
      %p433 = por %p431, %p432
      %p434 = scmp.ne.s32.totalorder %s426, %s428
      %p435 = scmp.eq.s32.totalorder %s40, 1
      %p436 = por %p434, %p435
      %p437 = scmp.ne.s32.totalorder %s428, %s429
      %p438 = scmp.eq.s32.totalorder %s40, 0
      %p439 = por %p437, %p438
      %p440 = scmp.ne.s32.totalorder %s428, %s429
      %p441 = scmp.eq.s32.totalorder %s41, 1
      %p442 = por %p440, %p441
      %p444 = scmp.ne.s32.totalorder %s429, %s443
      %p445 = scmp.eq.s32.totalorder %s41, 0
      %p446 = por %p444, %p445
      %s447 = ssub.s32 %s35, %s42
      %p448 = scmp.eq.s32.totalorder %s447, 0
      %s450 = sadd.s32 %s449, 1
      %s451 = scalar_select %p448, %s449, %s450
      %p454 = pneg %p448
      %p455 = scmp.eq.s32.totalorder %s35, 1
      %p456 = por %p454, %p455
      %p457 = scmp.ne.s32.totalorder %s449, %s452
      %p458 = scmp.eq.s32.totalorder %s35, 0
      %p459 = por %p457, %p458
      %p460 = scmp.ne.s32.totalorder %s449, %s452
      %p461 = scmp.eq.s32.totalorder %s40, 1
      %p462 = por %p460, %p461
      %p463 = scmp.ne.s32.totalorder %s452, %s453
      %p464 = scmp.eq.s32.totalorder %s40, 0
      %p465 = por %p463, %p464
      %p466 = scmp.ne.s32.totalorder %s452, %s453
      %p467 = scmp.eq.s32.totalorder %s41, 1
      %p468 = por %p466, %p467
      %p470 = scmp.ne.s32.totalorder %s453, %s469
      %p471 = scmp.eq.s32.totalorder %s41, 0
      %p472 = por %p470, %p471
      %p473 = scmp.le.s32.totalorder 1, %s35
      %p474 = scmp.lt.s32.totalorder %s35, 3
      %p475 = pnand %p473, %p474
      %p476 = pneg %p475
      // Predicated region
      $region9: #{_forward_impl.1} parent=5 // pred_check
        _
      $region10: #{_forward_impl.1} parent=5 // pred_check_branch
        %478 = sbr.rel (%p475) target = $region12
      $region11: #{_forward_impl.1} parent=5 // pred_region
        %s479 = ssub.s32 %s35, 1
        // Predicated region
        $region13: #{_forward_impl.1} parent=11 // pred_check
          %p480 = pneg %p82
        $region14: #{_forward_impl.1} parent=11 // pred_check_branch
          %482 = sbr.rel (%p480) target = $region16
        $region15: #{_forward_impl.1} parent=11 // pred_region
          %s484 = ssub.s32 8192, 8192
          %485 = vsyncadd [#allocation3], %s484
          %s486 = sshll.u32 [#allocation2], 4
          %s487 = int_to_ptr.vmem [resolvable:$true] %s486
          %492 = dma.hbm_to_vmem [thread:$0]  %s1, 8192, %s487, [#allocation3], 128, 128, 8
        $region16: #{_forward_impl.1} parent=11 // pred_fallthru
          _
        // Predicated region
        $region17: #{_forward_impl.1} parent=11 // pred_check
          %p493 = pneg %p103
        $region18: #{_forward_impl.1} parent=11 // pred_check_branch
          %495 = sbr.rel (%p493) target = $region20
        $region19: #{_forward_impl.1} parent=11 // pred_region
          %s497 = ssub.s32 2048, 2048
          %498 = vsyncadd [#allocation5], %s497
          %s499 = sshll.u32 [#allocation4], 4
          %s500 = int_to_ptr.vmem [resolvable:$true] %s499
          %505 = dma.hbm_to_vmem [thread:$0]  %s2, 2048, %s500, [#allocation5], 64, 64, 4
        $region20: #{_forward_impl.1} parent=11 // pred_fallthru
          _
        // Predicated region
        $region21: #{_forward_impl.1} parent=11 // pred_check
          %p506 = pneg %p124
        $region22: #{_forward_impl.1} parent=11 // pred_check_branch
          %508 = sbr.rel (%p506) target = $region24
        $region23: #{_forward_impl.1} parent=11 // pred_region
          %s510 = ssub.s32 2048, 2048
          %511 = vsyncadd [#allocation5], %s510
          %s512 = sshll.u32 [#allocation6], 4
          %s513 = int_to_ptr.vmem [resolvable:$true] %s512
          %518 = dma.hbm_to_vmem [thread:$0]  %s3, 2048, %s513, [#allocation5], 128, 128, 8
        $region24: #{_forward_impl.1} parent=11 // pred_fallthru
          _
        // Predicated region
        $region25: #{_forward_impl.1} parent=11 // pred_check
          %p519 = pneg %p145
        $region26: #{_forward_impl.1} parent=11 // pred_check_branch
          %521 = sbr.rel (%p519) target = $region28
        $region27: #{_forward_impl.1} parent=11 // pred_region
          %s523 = ssub.s32 6144, 6144
          %524 = vsyncadd [#allocation8], %s523
          %s525 = sshll.u32 [#allocation7], 4
          %s526 = int_to_ptr.vmem [resolvable:$true] %s525
          %531 = dma.hbm_to_vmem [thread:$0]  %s4, 6144, %s526, [#allocation8], 192, 192, 12
        $region28: #{_forward_impl.1} parent=11 // pred_fallthru
          _
        // Predicated region
        $region29: #{_forward_impl.1} parent=11 // pred_check
          %p532 = pneg %p166
        $region30: #{_forward_impl.1} parent=11 // pred_check_branch
          %534 = sbr.rel (%p532) target = $region32
        $region31: #{_forward_impl.1} parent=11 // pred_region
          %s536 = ssub.s32 18432, 18432
          %537 = vsyncadd [#allocation8], %s536
          %s538 = sshll.u32 [#allocation9], 4
          %s539 = int_to_ptr.vmem [resolvable:$true] %s538
          %544 = dma.hbm_to_vmem [thread:$0]  %s5, 18432, %s539, [#allocation8], 384, 384, 24
        $region32: #{_forward_impl.1} parent=11 // pred_fallthru
          _
        // Predicated region
        $region33: #{_forward_impl.1} parent=11 // pred_check
          %p545 = pneg %p187
        $region34: #{_forward_impl.1} parent=11 // pred_check_branch
          %547 = sbr.rel (%p545) target = $region36
        $region35: #{_forward_impl.1} parent=11 // pred_region
          %s549 = ssub.s32 36864, 36864
          %550 = vsyncadd [#allocation11], %s549
          %s551 = sshll.u32 [#allocation10], 4
          %s552 = int_to_ptr.vmem [resolvable:$true] %s551
          %557 = dma.hbm_to_vmem [thread:$0]  %s6, 36864, %s552, [#allocation11], 384, 384, 24
        $region36: #{_forward_impl.1} parent=11 // pred_fallthru
          _
        // Predicated region
        $region37: #{_forward_impl.1} parent=11 // pred_check
          %p558 = pneg %p208
        $region38: #{_forward_impl.1} parent=11 // pred_check_branch
          %560 = sbr.rel (%p558) target = $region40
        $region39: #{_forward_impl.1} parent=11 // pred_region
          %s562 = ssub.s32 32, 32
          %563 = vsyncadd [#allocation11], %s562
          %s565 = sshll.u32 [#allocation12], 4
          %s566 = int_to_ptr.vmem [resolvable:$true] %s565
          %568 = dma.hbm_to_vmem [thread:$0]  %s7, 32, %s566, [#allocation11]
        $region40: #{_forward_impl.1} parent=11 // pred_fallthru
          _
        // Predicated region
        $region41: #{_forward_impl.1} parent=11 // pred_check
          %p569 = pneg %p229
        $region42: #{_forward_impl.1} parent=11 // pred_check_branch
          %571 = sbr.rel (%p569) target = $region44
        $region43: #{_forward_impl.1} parent=11 // pred_region
          %s573 = ssub.s32 16, 16
          %574 = vsyncadd [#allocation14], %s573
          %s576 = sshll.u32 [#allocation13], 4
          %s577 = int_to_ptr.vmem [resolvable:$true] %s576
          %579 = dma.hbm_to_vmem [thread:$0]  %s8, 16, %s577, [#allocation14]
        $region44: #{_forward_impl.1} parent=11 // pred_fallthru
          _
        // Predicated region
        $region45: #{_forward_impl.1} parent=11 // pred_check
          %p580 = pneg %p250
        $region46: #{_forward_impl.1} parent=11 // pred_check_branch
          %582 = sbr.rel (%p580) target = $region48
        $region47: #{_forward_impl.1} parent=11 // pred_region
          %s584 = ssub.s32 32, 32
          %585 = vsyncadd [#allocation14], %s584
          %s587 = sshll.u32 [#allocation15], 4
          %s588 = int_to_ptr.vmem [resolvable:$true] %s587
          %590 = dma.hbm_to_vmem [thread:$0]  %s9, 32, %s588, [#allocation14]
        $region48: #{_forward_impl.1} parent=11 // pred_fallthru
          _
        // Predicated region
        $region49: #{_forward_impl.1} parent=11 // pred_check
          %p591 = pneg %p271
        $region50: #{_forward_impl.1} parent=11 // pred_check_branch
          %593 = sbr.rel (%p591) target = $region52
        $region51: #{_forward_impl.1} parent=11 // pred_region
          %s595 = ssub.s32 48, 48
          %596 = vsyncadd [#allocation17], %s595
          %s598 = sshll.u32 [#allocation16], 4
          %s599 = int_to_ptr.vmem [resolvable:$true] %s598
          %601 = dma.hbm_to_vmem [thread:$0]  %s10, 48, %s599, [#allocation17]
        $region52: #{_forward_impl.1} parent=11 // pred_fallthru
          _
        // Predicated region
        $region53: #{_forward_impl.1} parent=11 // pred_check
          %p602 = pneg %p292
        $region54: #{_forward_impl.1} parent=11 // pred_check_branch
          %604 = sbr.rel (%p602) target = $region56
        $region55: #{_forward_impl.1} parent=11 // pred_region
          %s606 = ssub.s32 96, 96
          %607 = vsyncadd [#allocation17], %s606
          %s609 = sshll.u32 [#allocation18], 4
          %s610 = int_to_ptr.vmem [resolvable:$true] %s609
          %612 = dma.hbm_to_vmem [thread:$0]  %s11, 96, %s610, [#allocation17]
        $region56: #{_forward_impl.1} parent=11 // pred_fallthru
          _
        // Predicated region
        $region57: #{_forward_impl.1} parent=11 // pred_check
          %p613 = pneg %p313
        $region58: #{_forward_impl.1} parent=11 // pred_check_branch
          %615 = sbr.rel (%p613) target = $region60
        $region59: #{_forward_impl.1} parent=11 // pred_region
          %s617 = ssub.s32 96, 96
          %618 = vsyncadd [#allocation20], %s617
          %s620 = sshll.u32 [#allocation19], 4
          %s621 = int_to_ptr.vmem [resolvable:$true] %s620
          %623 = dma.hbm_to_vmem [thread:$0]  %s12, 96, %s621, [#allocation20]
        $region60: #{_forward_impl.1} parent=11 // pred_fallthru
          _
        // Predicated region
        $region61: #{_forward_impl.1} parent=11 // pred_check
          %p624 = pneg %p334
        $region62: #{_forward_impl.1} parent=11 // pred_check_branch
          %626 = sbr.rel (%p624) target = $region64
        $region63: #{_forward_impl.1} parent=11 // pred_region
          %s628 = ssub.s32 32, 32
          %629 = vsyncadd [#allocation20], %s628
          %s631 = sshll.u32 [#allocation21], 4
          %s632 = int_to_ptr.vmem [resolvable:$true] %s631
          %634 = dma.hbm_to_vmem [thread:$0]  %s13, 32, %s632, [#allocation20]
        $region64: #{_forward_impl.1} parent=11 // pred_fallthru
          _
        // Predicated region
        $region65: #{_forward_impl.1} parent=11 // pred_check
          %p635 = pneg %p355
        $region66: #{_forward_impl.1} parent=11 // pred_check_branch
          %637 = sbr.rel (%p635) target = $region68
        $region67: #{_forward_impl.1} parent=11 // pred_region
          %s639 = ssub.s32 16, 16
          %640 = vsyncadd [#allocation23], %s639
          %s642 = sshll.u32 [#allocation22], 4
          %s643 = int_to_ptr.vmem [resolvable:$true] %s642
          %645 = dma.hbm_to_vmem [thread:$0]  %s14, 16, %s643, [#allocation23]
        $region68: #{_forward_impl.1} parent=11 // pred_fallthru
          _
        // Predicated region
        $region69: #{_forward_impl.1} parent=11 // pred_check
          %p646 = pneg %p376
        $region70: #{_forward_impl.1} parent=11 // pred_check_branch
          %648 = sbr.rel (%p646) target = $region72
        $region71: #{_forward_impl.1} parent=11 // pred_region
          %s650 = ssub.s32 32, 32
          %651 = vsyncadd [#allocation23], %s650
          %s653 = sshll.u32 [#allocation24], 4
          %s654 = int_to_ptr.vmem [resolvable:$true] %s653
          %656 = dma.hbm_to_vmem [thread:$0]  %s15, 32, %s654, [#allocation23]
        $region72: #{_forward_impl.1} parent=11 // pred_fallthru
          _
        // Predicated region
        $region73: #{_forward_impl.1} parent=11 // pred_check
          %p657 = pneg %p397
        $region74: #{_forward_impl.1} parent=11 // pred_check_branch
          %659 = sbr.rel (%p657) target = $region76
        $region75: #{_forward_impl.1} parent=11 // pred_region
          %s661 = ssub.s32 48, 48
          %662 = vsyncadd [#allocation26], %s661
          %s664 = sshll.u32 [#allocation25], 4
          %s665 = int_to_ptr.vmem [resolvable:$true] %s664
          %667 = dma.hbm_to_vmem [thread:$0]  %s16, 48, %s665, [#allocation26]
        $region76: #{_forward_impl.1} parent=11 // pred_fallthru
          _
        // Predicated region
        $region77: #{_forward_impl.1} parent=11 // pred_check
          %p668 = pneg %p418
        $region78: #{_forward_impl.1} parent=11 // pred_check_branch
          %670 = sbr.rel (%p668) target = $region80
        $region79: #{_forward_impl.1} parent=11 // pred_region
          %s672 = ssub.s32 96, 96
          %673 = vsyncadd [#allocation26], %s672
          %s675 = sshll.u32 [#allocation27], 4
          %s676 = int_to_ptr.vmem [resolvable:$true] %s675
          %678 = dma.hbm_to_vmem [thread:$0]  %s17, 96, %s676, [#allocation26]
        $region80: #{_forward_impl.1} parent=11 // pred_fallthru
          _
        // Predicated region
        $region81: #{_forward_impl.1} parent=11 // pred_check
          %p679 = pneg %p439
        $region82: #{_forward_impl.1} parent=11 // pred_check_branch
          %681 = sbr.rel (%p679) target = $region84
        $region83: #{_forward_impl.1} parent=11 // pred_region
          %s683 = ssub.s32 96, 96
          %684 = vsyncadd [#allocation29], %s683
          %s686 = sshll.u32 [#allocation28], 4
          %s687 = int_to_ptr.vmem [resolvable:$true] %s686
          %689 = dma.hbm_to_vmem [thread:$0]  %s18, 96, %s687, [#allocation29]
        $region84: #{_forward_impl.1} parent=11 // pred_fallthru
          _
      $region12: #{_forward_impl.1} parent=5 // pred_fallthru
        _
      %p690 = scmp.lt.s32.totalorder %s35, 2
      // Predicated region
      $region85: #{_forward_impl.1} parent=5 // pred_check
        %p691 = pneg %p690
      $region86: #{_forward_impl.1} parent=5 // pred_check_branch
        %693 = sbr.rel (%p691) target = $region88
      $region87: #{_forward_impl.1} parent=5 // pred_region
        // Predicated region
        $region89: #{_forward_impl.1} parent=87 // pred_check
          %p694 = pneg %p55
        $region90: #{_forward_impl.1} parent=87 // pred_check_branch
          %696 = sbr.rel (%p694) target = $region92
        $region91: #{_forward_impl.1} parent=87 // pred_region
          %p697 = scmp.lt.s32.totalorder %s35, 1
          %s698 = scalar_select %p697, %s35, 1
          %s699 = smul.addr %s698, 4
          %s700 = smul.addr %s699, 8
          %s701 = scalar_lea.vmem %s0, %s700
        $region92: #{_forward_impl.1} parent=87 // pred_fallthru
          _
      $region88: #{_forward_impl.1} parent=5 // pred_fallthru
        _
      %p702 = scmp.le.s32.totalorder 1, %s35
      %p703 = scmp.lt.s32.totalorder %s35, 3
      %p704 = pnand %p702, %p703
      %p705 = pneg %p704
      // Predicated region
      $region93: #{_forward_impl.1} parent=5 // pred_check
        _
      $region94: #{_forward_impl.1} parent=5 // pred_check_branch
        %707 = sbr.rel (%p704) target = $region96
      $region95: #{_forward_impl.1} parent=5 // pred_region
        %s708 = ssub.s32 %s35, 1
        // Predicated region
        $region97: #{_forward_impl.1} parent=95 // pred_check
          %p709 = pneg %p82
        $region98: #{_forward_impl.1} parent=95 // pred_check_branch
          %711 = sbr.rel (%p709) target = $region100
        $region99: #{_forward_impl.1} parent=95 // pred_region
          %712 = dma.done [#allocation3], 8192
        $region100: #{_forward_impl.1} parent=95 // pred_fallthru
          _
        // Predicated region
        $region101: #{_forward_impl.1} parent=95 // pred_check
          %p713 = pneg %p103
        $region102: #{_forward_impl.1} parent=95 // pred_check_branch
          %715 = sbr.rel (%p713) target = $region104
        $region103: #{_forward_impl.1} parent=95 // pred_region
          %716 = dma.done [#allocation5], 2048
        $region104: #{_forward_impl.1} parent=95 // pred_fallthru
          _
        // Predicated region
        $region105: #{_forward_impl.1} parent=95 // pred_check
          %p717 = pneg %p124
        $region106: #{_forward_impl.1} parent=95 // pred_check_branch
          %719 = sbr.rel (%p717) target = $region108
        $region107: #{_forward_impl.1} parent=95 // pred_region
          %720 = dma.done [#allocation5], 2048
        $region108: #{_forward_impl.1} parent=95 // pred_fallthru
          _
        // Predicated region
        $region109: #{_forward_impl.1} parent=95 // pred_check
          %p721 = pneg %p145
        $region110: #{_forward_impl.1} parent=95 // pred_check_branch
          %723 = sbr.rel (%p721) target = $region112
        $region111: #{_forward_impl.1} parent=95 // pred_region
          %724 = dma.done [#allocation8], 6144
        $region112: #{_forward_impl.1} parent=95 // pred_fallthru
          _
        // Predicated region
        $region113: #{_forward_impl.1} parent=95 // pred_check
          %p725 = pneg %p166
        $region114: #{_forward_impl.1} parent=95 // pred_check_branch
          %727 = sbr.rel (%p725) target = $region116
        $region115: #{_forward_impl.1} parent=95 // pred_region
          %728 = dma.done [#allocation8], 18432
        $region116: #{_forward_impl.1} parent=95 // pred_fallthru
          _
        // Predicated region
        $region117: #{_forward_impl.1} parent=95 // pred_check
          %p729 = pneg %p187
        $region118: #{_forward_impl.1} parent=95 // pred_check_branch
          %731 = sbr.rel (%p729) target = $region120
        $region119: #{_forward_impl.1} parent=95 // pred_region
          %732 = dma.done [#allocation11], 36864
        $region120: #{_forward_impl.1} parent=95 // pred_fallthru
          _
        // Predicated region
        $region121: #{_forward_impl.1} parent=95 // pred_check
          %p733 = pneg %p208
        $region122: #{_forward_impl.1} parent=95 // pred_check_branch
          %735 = sbr.rel (%p733) target = $region124
        $region123: #{_forward_impl.1} parent=95 // pred_region
          %736 = dma.done [#allocation11], 32
        $region124: #{_forward_impl.1} parent=95 // pred_fallthru
          _
        // Predicated region
        $region125: #{_forward_impl.1} parent=95 // pred_check
          %p737 = pneg %p229
        $region126: #{_forward_impl.1} parent=95 // pred_check_branch
          %739 = sbr.rel (%p737) target = $region128
        $region127: #{_forward_impl.1} parent=95 // pred_region
          %740 = dma.done [#allocation14], 16
        $region128: #{_forward_impl.1} parent=95 // pred_fallthru
          _
        // Predicated region
        $region129: #{_forward_impl.1} parent=95 // pred_check
          %p741 = pneg %p250
        $region130: #{_forward_impl.1} parent=95 // pred_check_branch
          %743 = sbr.rel (%p741) target = $region132
        $region131: #{_forward_impl.1} parent=95 // pred_region
          %744 = dma.done [#allocation14], 32
        $region132: #{_forward_impl.1} parent=95 // pred_fallthru
          _
        // Predicated region
        $region133: #{_forward_impl.1} parent=95 // pred_check
          %p745 = pneg %p271
        $region134: #{_forward_impl.1} parent=95 // pred_check_branch
          %747 = sbr.rel (%p745) target = $region136
        $region135: #{_forward_impl.1} parent=95 // pred_region
          %748 = dma.done [#allocation17], 48
        $region136: #{_forward_impl.1} parent=95 // pred_fallthru
          _
        // Predicated region
        $region137: #{_forward_impl.1} parent=95 // pred_check
          %p749 = pneg %p292
        $region138: #{_forward_impl.1} parent=95 // pred_check_branch
          %751 = sbr.rel (%p749) target = $region140
        $region139: #{_forward_impl.1} parent=95 // pred_region
          %752 = dma.done [#allocation17], 96
        $region140: #{_forward_impl.1} parent=95 // pred_fallthru
          _
        // Predicated region
        $region141: #{_forward_impl.1} parent=95 // pred_check
          %p753 = pneg %p313
        $region142: #{_forward_impl.1} parent=95 // pred_check_branch
          %755 = sbr.rel (%p753) target = $region144
        $region143: #{_forward_impl.1} parent=95 // pred_region
          %756 = dma.done [#allocation20], 96
        $region144: #{_forward_impl.1} parent=95 // pred_fallthru
          _
        // Predicated region
        $region145: #{_forward_impl.1} parent=95 // pred_check
          %p757 = pneg %p334
        $region146: #{_forward_impl.1} parent=95 // pred_check_branch
          %759 = sbr.rel (%p757) target = $region148
        $region147: #{_forward_impl.1} parent=95 // pred_region
          %760 = dma.done [#allocation20], 32
        $region148: #{_forward_impl.1} parent=95 // pred_fallthru
          _
        // Predicated region
        $region149: #{_forward_impl.1} parent=95 // pred_check
          %p761 = pneg %p355
        $region150: #{_forward_impl.1} parent=95 // pred_check_branch
          %763 = sbr.rel (%p761) target = $region152
        $region151: #{_forward_impl.1} parent=95 // pred_region
          %764 = dma.done [#allocation23], 16
        $region152: #{_forward_impl.1} parent=95 // pred_fallthru
          _
        // Predicated region
        $region153: #{_forward_impl.1} parent=95 // pred_check
          %p765 = pneg %p376
        $region154: #{_forward_impl.1} parent=95 // pred_check_branch
          %767 = sbr.rel (%p765) target = $region156
        $region155: #{_forward_impl.1} parent=95 // pred_region
          %768 = dma.done [#allocation23], 32
        $region156: #{_forward_impl.1} parent=95 // pred_fallthru
          _
        // Predicated region
        $region157: #{_forward_impl.1} parent=95 // pred_check
          %p769 = pneg %p397
        $region158: #{_forward_impl.1} parent=95 // pred_check_branch
          %771 = sbr.rel (%p769) target = $region160
        $region159: #{_forward_impl.1} parent=95 // pred_region
          %772 = dma.done [#allocation26], 48
        $region160: #{_forward_impl.1} parent=95 // pred_fallthru
          _
        // Predicated region
        $region161: #{_forward_impl.1} parent=95 // pred_check
          %p773 = pneg %p418
        $region162: #{_forward_impl.1} parent=95 // pred_check_branch
          %775 = sbr.rel (%p773) target = $region164
        $region163: #{_forward_impl.1} parent=95 // pred_region
          %776 = dma.done [#allocation26], 96
        $region164: #{_forward_impl.1} parent=95 // pred_fallthru
          _
        // Predicated region
        $region165: #{_forward_impl.1} parent=95 // pred_check
          %p777 = pneg %p439
        $region166: #{_forward_impl.1} parent=95 // pred_check_branch
          %779 = sbr.rel (%p777) target = $region168
        $region167: #{_forward_impl.1} parent=95 // pred_region
          %780 = dma.done [#allocation29], 96
        $region168: #{_forward_impl.1} parent=95 // pred_fallthru
          _
        %p781 = scmp.lt.s32.totalorder %s40, 1
        %s782 = scalar_select %p781, %s40, 1
        %s783 = smul.addr %s782, 4
        %s784 = smul.addr %s783, 8
        %s785 = scalar_lea.vmem %s0, %s784
        %p786 = pneg %p61
        %p787 = pneg %p58
        %p788 = pneg %p82
        %p789 = pneg %p79
        %p790 = pneg %p103
        %p791 = pneg %p100
        %p792 = pneg %p124
        %p793 = pneg %p121
        %p794 = pneg %p145
        %p795 = pneg %p142
        %p796 = pneg %p166
        %p797 = pneg %p163
        %p798 = pneg %p187
        %p799 = pneg %p184
        %p800 = pneg %p208
        %p801 = pneg %p205
        %p802 = pneg %p229
        %p803 = pneg %p226
        %p804 = pneg %p250
        %p805 = pneg %p247
        %p806 = pneg %p271
        %p807 = pneg %p268
        %p808 = pneg %p292
        %p809 = pneg %p289
        %p810 = pneg %p313
        %p811 = pneg %p310
        %p812 = pneg %p334
        %p813 = pneg %p331
        %p814 = pneg %p355
        %p815 = pneg %p352
        %p816 = pneg %p376
        %p817 = pneg %p373
        %p818 = pneg %p397
        %p819 = pneg %p394
        %p820 = pneg %p418
        %p821 = pneg %p415
        %p822 = pneg %p439
        %p823 = pneg %p436
        %p824 = pneg %p465
        %p825 = pneg %p462
        %p826 = scmp.lt.s32.totalorder %s40, 1
        %s827 = scalar_select %p826, %s40, 1
        %s828 = smul.addr %s827, 6
        %s829 = smul.addr %s828, 8
        %s830 = scalar_lea.vmem %s19, %s829
        %p831 = scmp.lt.s32.totalorder %s40, 1
        %s832 = scalar_select %p831, %s40, 1
        %s833 = smul.addr %s832, 4
        %s834 = smul.addr %s833, 8
        %s835 = scalar_lea.vmem %s0, %s834
        %p836 = scmp.lt.s32.totalorder %s40, 1
        %s837 = scalar_select %p836, %s40, 1
        %s838 = smul.addr %s837, 6
        %s839 = smul.addr %s838, 8
        %s840 = scalar_lea.vmem %s19, %s839
        %v842 = vld [vmem:[%s835] sm:$0xff]
        %v843 = vld [vmem:[%s835 + $0x8] sm:$0xff]
        %v844 = vld [vmem:[%s835 + $0x10] sm:$0xff]
        %v845 = vld [vmem:[%s835 + $0x18] sm:$0xff]
        %v846 = vpack.c.bf16 %v842, %v842
        %v847 = vpack.c.bf16 %v843, %v843
        %v848 = vpack.c.bf16 %v844, %v844
        %v849 = vpack.c.bf16 %v845, %v845
        %v850 = vld [vmem:[#allocation2] sm:$0xff]
        %v851 = vld [vmem:[#allocation2 + $0x8] sm:$0xff]
        %v852 = vld [vmem:[#allocation2 + $0x10] sm:$0xff]
        %v853 = vld [vmem:[#allocation2 + $0x18] sm:$0xff]
        %v854 = vld [vmem:[#allocation2 + $0x20] sm:$0xff]
        %v855 = vld [vmem:[#allocation2 + $0x28] sm:$0xff]
        %v856 = vld [vmem:[#allocation2 + $0x30] sm:$0xff]
        %v857 = vld [vmem:[#allocation2 + $0x38] sm:$0xff]
        %v858 = vld [vmem:[#allocation2 + $0x40] sm:$0xff]
        %v859 = vld [vmem:[#allocation2 + $0x48] sm:$0xff]
        %v860 = vld [vmem:[#allocation2 + $0x50] sm:$0xff]
        %v861 = vld [vmem:[#allocation2 + $0x58] sm:$0xff]
        %v862 = vld [vmem:[#allocation2 + $0x60] sm:$0xff]
        %v863 = vld [vmem:[#allocation2 + $0x68] sm:$0xff]
        %v864 = vld [vmem:[#allocation2 + $0x70] sm:$0xff]
        %v865 = vld [vmem:[#allocation2 + $0x78] sm:$0xff]
        %v866 = vld [vmem:[#allocation2 + $0x80] sm:$0xff]
        %v867 = vld [vmem:[#allocation2 + $0x88] sm:$0xff]
        %v868 = vld [vmem:[#allocation2 + $0x90] sm:$0xff]
        %v869 = vld [vmem:[#allocation2 + $0x98] sm:$0xff]
        %v870 = vld [vmem:[#allocation2 + $0xa0] sm:$0xff]
        %v871 = vld [vmem:[#allocation2 + $0xa8] sm:$0xff]
        %v872 = vld [vmem:[#allocation2 + $0xb0] sm:$0xff]
        %v873 = vld [vmem:[#allocation2 + $0xb8] sm:$0xff]
        %v874 = vld [vmem:[#allocation2 + $0xc0] sm:$0xff]
        %v875 = vld [vmem:[#allocation2 + $0xc8] sm:$0xff]
        %v876 = vld [vmem:[#allocation2 + $0xd0] sm:$0xff]
        %v877 = vld [vmem:[#allocation2 + $0xd8] sm:$0xff]
        %v878 = vld [vmem:[#allocation2 + $0xe0] sm:$0xff]
        %v879 = vld [vmem:[#allocation2 + $0xe8] sm:$0xff]
        %v880 = vld [vmem:[#allocation2 + $0xf0] sm:$0xff]
        %v881 = vld [vmem:[#allocation2 + $0xf8] sm:$0xff]
        %v882 = vld [vmem:[#allocation2 + $0x100] sm:$0xff]
        %v883 = vld [vmem:[#allocation2 + $0x108] sm:$0xff]
        %v884 = vld [vmem:[#allocation2 + $0x110] sm:$0xff]
        %v885 = vld [vmem:[#allocation2 + $0x118] sm:$0xff]
        %v886 = vld [vmem:[#allocation2 + $0x120] sm:$0xff]
        %v887 = vld [vmem:[#allocation2 + $0x128] sm:$0xff]
        %v888 = vld [vmem:[#allocation2 + $0x130] sm:$0xff]
        %v889 = vld [vmem:[#allocation2 + $0x138] sm:$0xff]
        %v890 = vld [vmem:[#allocation2 + $0x140] sm:$0xff]
        %v891 = vld [vmem:[#allocation2 + $0x148] sm:$0xff]
        %v892 = vld [vmem:[#allocation2 + $0x150] sm:$0xff]
        %v893 = vld [vmem:[#allocation2 + $0x158] sm:$0xff]
        %v894 = vld [vmem:[#allocation2 + $0x160] sm:$0xff]
        %v895 = vld [vmem:[#allocation2 + $0x168] sm:$0xff]
        %v896 = vld [vmem:[#allocation2 + $0x170] sm:$0xff]
        %v897 = vld [vmem:[#allocation2 + $0x178] sm:$0xff]
        %v898 = vld [vmem:[#allocation2 + $0x180] sm:$0xff]
        %v899 = vld [vmem:[#allocation2 + $0x188] sm:$0xff]
        %v900 = vld [vmem:[#allocation2 + $0x190] sm:$0xff]
        %v901 = vld [vmem:[#allocation2 + $0x198] sm:$0xff]
        %v902 = vld [vmem:[#allocation2 + $0x1a0] sm:$0xff]
        %v903 = vld [vmem:[#allocation2 + $0x1a8] sm:$0xff]
        %v904 = vld [vmem:[#allocation2 + $0x1b0] sm:$0xff]
        %v905 = vld [vmem:[#allocation2 + $0x1b8] sm:$0xff]
        %v906 = vld [vmem:[#allocation2 + $0x1c0] sm:$0xff]
        %v907 = vld [vmem:[#allocation2 + $0x1c8] sm:$0xff]
        %v908 = vld [vmem:[#allocation2 + $0x1d0] sm:$0xff]
        %v909 = vld [vmem:[#allocation2 + $0x1d8] sm:$0xff]
        %v910 = vld [vmem:[#allocation2 + $0x1e0] sm:$0xff]
        %v911 = vld [vmem:[#allocation2 + $0x1e8] sm:$0xff]
        %v912 = vld [vmem:[#allocation2 + $0x1f0] sm:$0xff]
        %v913 = vld [vmem:[#allocation2 + $0x1f8] sm:$0xff]
        %v978 = vunpack.c.l.b16 %v850
        %v979 = vunpack.c.h.b16 %v850
        %v980 = vunpack.c.l.b16 %v851
        %v981 = vunpack.c.h.b16 %v851
        %v982 = vunpack.c.l.b16 %v852
        %v983 = vunpack.c.h.b16 %v852
        %v984 = vunpack.c.l.b16 %v853
        %v985 = vunpack.c.h.b16 %v853
        %v986 = vunpack.c.l.b16 %v854
        %v987 = vunpack.c.h.b16 %v854
        %v988 = vunpack.c.l.b16 %v855
        %v989 = vunpack.c.h.b16 %v855
        %v990 = vunpack.c.l.b16 %v856
        %v991 = vunpack.c.h.b16 %v856
        %v992 = vunpack.c.l.b16 %v857
        %v993 = vunpack.c.h.b16 %v857
        %v994 = vunpack.c.l.b16 %v858
        %v995 = vunpack.c.h.b16 %v858
        %v996 = vunpack.c.l.b16 %v859
        %v997 = vunpack.c.h.b16 %v859
        %v998 = vunpack.c.l.b16 %v860
        %v999 = vunpack.c.h.b16 %v860
        %v1000 = vunpack.c.l.b16 %v861
        %v1001 = vunpack.c.h.b16 %v861
        %v1002 = vunpack.c.l.b16 %v862
        %v1003 = vunpack.c.h.b16 %v862
        %v1004 = vunpack.c.l.b16 %v863
        %v1005 = vunpack.c.h.b16 %v863
        %v1006 = vunpack.c.l.b16 %v864
        %v1007 = vunpack.c.h.b16 %v864
        %v1008 = vunpack.c.l.b16 %v865
        %v1009 = vunpack.c.h.b16 %v865
        %v1010 = vunpack.c.l.b16 %v866
        %v1011 = vunpack.c.h.b16 %v866
        %v1012 = vunpack.c.l.b16 %v867
        %v1013 = vunpack.c.h.b16 %v867
        %v1014 = vunpack.c.l.b16 %v868
        %v1015 = vunpack.c.h.b16 %v868
        %v1016 = vunpack.c.l.b16 %v869
        %v1017 = vunpack.c.h.b16 %v869
        %v1018 = vunpack.c.l.b16 %v870
        %v1019 = vunpack.c.h.b16 %v870
        %v1020 = vunpack.c.l.b16 %v871
        %v1021 = vunpack.c.h.b16 %v871
        %v1022 = vunpack.c.l.b16 %v872
        %v1023 = vunpack.c.h.b16 %v872
        %v1024 = vunpack.c.l.b16 %v873
        %v1025 = vunpack.c.h.b16 %v873
        %v1026 = vunpack.c.l.b16 %v874
        %v1027 = vunpack.c.h.b16 %v874
        %v1028 = vunpack.c.l.b16 %v875
        %v1029 = vunpack.c.h.b16 %v875
        %v1030 = vunpack.c.l.b16 %v876
        %v1031 = vunpack.c.h.b16 %v876
        %v1032 = vunpack.c.l.b16 %v877
        %v1033 = vunpack.c.h.b16 %v877
        %v1034 = vunpack.c.l.b16 %v878
        %v1035 = vunpack.c.h.b16 %v878
        %v1036 = vunpack.c.l.b16 %v879
        %v1037 = vunpack.c.h.b16 %v879
        %v1038 = vunpack.c.l.b16 %v880
        %v1039 = vunpack.c.h.b16 %v880
        %v1040 = vunpack.c.l.b16 %v881
        %v1041 = vunpack.c.h.b16 %v881
        %v1042 = vunpack.c.l.b16 %v882
        %v1043 = vunpack.c.h.b16 %v882
        %v1044 = vunpack.c.l.b16 %v883
        %v1045 = vunpack.c.h.b16 %v883
        %v1046 = vunpack.c.l.b16 %v884
        %v1047 = vunpack.c.h.b16 %v884
        %v1048 = vunpack.c.l.b16 %v885
        %v1049 = vunpack.c.h.b16 %v885
        %v1050 = vunpack.c.l.b16 %v886
        %v1051 = vunpack.c.h.b16 %v886
        %v1052 = vunpack.c.l.b16 %v887
        %v1053 = vunpack.c.h.b16 %v887
        %v1054 = vunpack.c.l.b16 %v888
        %v1055 = vunpack.c.h.b16 %v888
        %v1056 = vunpack.c.l.b16 %v889
        %v1057 = vunpack.c.h.b16 %v889
        %v1058 = vunpack.c.l.b16 %v890
        %v1059 = vunpack.c.h.b16 %v890
        %v1060 = vunpack.c.l.b16 %v891
        %v1061 = vunpack.c.h.b16 %v891
        %v1062 = vunpack.c.l.b16 %v892
        %v1063 = vunpack.c.h.b16 %v892
        %v1064 = vunpack.c.l.b16 %v893
        %v1065 = vunpack.c.h.b16 %v893
        %v1066 = vunpack.c.l.b16 %v894
        %v1067 = vunpack.c.h.b16 %v894
        %v1068 = vunpack.c.l.b16 %v895
        %v1069 = vunpack.c.h.b16 %v895
        %v1070 = vunpack.c.l.b16 %v896
        %v1071 = vunpack.c.h.b16 %v896
        %v1072 = vunpack.c.l.b16 %v897
        %v1073 = vunpack.c.h.b16 %v897
        %v1074 = vunpack.c.l.b16 %v898
        %v1075 = vunpack.c.h.b16 %v898
        %v1076 = vunpack.c.l.b16 %v899
        %v1077 = vunpack.c.h.b16 %v899
        %v1078 = vunpack.c.l.b16 %v900
        %v1079 = vunpack.c.h.b16 %v900
        %v1080 = vunpack.c.l.b16 %v901
        %v1081 = vunpack.c.h.b16 %v901
        %v1082 = vunpack.c.l.b16 %v902
        %v1083 = vunpack.c.h.b16 %v902
        %v1084 = vunpack.c.l.b16 %v903
        %v1085 = vunpack.c.h.b16 %v903
        %v1086 = vunpack.c.l.b16 %v904
        %v1087 = vunpack.c.h.b16 %v904
        %v1088 = vunpack.c.l.b16 %v905
        %v1089 = vunpack.c.h.b16 %v905
        %v1090 = vunpack.c.l.b16 %v906
        %v1091 = vunpack.c.h.b16 %v906
        %v1092 = vunpack.c.l.b16 %v907
        %v1093 = vunpack.c.h.b16 %v907
        %v1094 = vunpack.c.l.b16 %v908
        %v1095 = vunpack.c.h.b16 %v908
        %v1096 = vunpack.c.l.b16 %v909
        %v1097 = vunpack.c.h.b16 %v909
        %v1098 = vunpack.c.l.b16 %v910
        %v1099 = vunpack.c.h.b16 %v910
        %v1100 = vunpack.c.l.b16 %v911
        %v1101 = vunpack.c.h.b16 %v911
        %v1102 = vunpack.c.l.b16 %v912
        %v1103 = vunpack.c.h.b16 %v912
        %v1104 = vunpack.c.l.b16 %v913
        %v1105 = vunpack.c.h.b16 %v913
        %v1106 = vpack.c.b16 %v980, %v978
        %v1107 = vpack.c.b16 %v981, %v979
        %v1108 = vpack.c.b16 %v984, %v982
        %v1109 = vpack.c.b16 %v985, %v983
        %v1110 = vpack.c.b16 %v988, %v986
        %v1111 = vpack.c.b16 %v989, %v987
        %v1112 = vpack.c.b16 %v992, %v990
        %v1113 = vpack.c.b16 %v993, %v991
        %v1114 = vpack.c.b16 %v996, %v994
        %v1115 = vpack.c.b16 %v997, %v995
        %v1116 = vpack.c.b16 %v1000, %v998
        %v1117 = vpack.c.b16 %v1001, %v999
        %v1118 = vpack.c.b16 %v1004, %v1002
        %v1119 = vpack.c.b16 %v1005, %v1003
        %v1120 = vpack.c.b16 %v1008, %v1006
        %v1121 = vpack.c.b16 %v1009, %v1007
        %v1122 = vpack.c.b16 %v1012, %v1010
        %v1123 = vpack.c.b16 %v1013, %v1011
        %v1124 = vpack.c.b16 %v1016, %v1014
        %v1125 = vpack.c.b16 %v1017, %v1015
        %v1126 = vpack.c.b16 %v1020, %v1018
        %v1127 = vpack.c.b16 %v1021, %v1019
        %v1128 = vpack.c.b16 %v1024, %v1022
        %v1129 = vpack.c.b16 %v1025, %v1023
        %v1130 = vpack.c.b16 %v1028, %v1026
        %v1131 = vpack.c.b16 %v1029, %v1027
        %v1132 = vpack.c.b16 %v1032, %v1030
        %v1133 = vpack.c.b16 %v1033, %v1031
        %v1134 = vpack.c.b16 %v1036, %v1034
        %v1135 = vpack.c.b16 %v1037, %v1035
        %v1136 = vpack.c.b16 %v1040, %v1038
        %v1137 = vpack.c.b16 %v1041, %v1039
        %v1138 = vpack.c.b16 %v1044, %v1042
        %v1139 = vpack.c.b16 %v1045, %v1043
        %v1140 = vpack.c.b16 %v1048, %v1046
        %v1141 = vpack.c.b16 %v1049, %v1047
        %v1142 = vpack.c.b16 %v1052, %v1050
        %v1143 = vpack.c.b16 %v1053, %v1051
        %v1144 = vpack.c.b16 %v1056, %v1054
        %v1145 = vpack.c.b16 %v1057, %v1055
        %v1146 = vpack.c.b16 %v1060, %v1058
        %v1147 = vpack.c.b16 %v1061, %v1059
        %v1148 = vpack.c.b16 %v1064, %v1062
        %v1149 = vpack.c.b16 %v1065, %v1063
        %v1150 = vpack.c.b16 %v1068, %v1066
        %v1151 = vpack.c.b16 %v1069, %v1067
        %v1152 = vpack.c.b16 %v1072, %v1070
        %v1153 = vpack.c.b16 %v1073, %v1071
        %v1154 = vpack.c.b16 %v1076, %v1074
        %v1155 = vpack.c.b16 %v1077, %v1075
        %v1156 = vpack.c.b16 %v1080, %v1078
        %v1157 = vpack.c.b16 %v1081, %v1079
        %v1158 = vpack.c.b16 %v1084, %v1082
        %v1159 = vpack.c.b16 %v1085, %v1083
        %v1160 = vpack.c.b16 %v1088, %v1086
        %v1161 = vpack.c.b16 %v1089, %v1087
        %v1162 = vpack.c.b16 %v1092, %v1090
        %v1163 = vpack.c.b16 %v1093, %v1091
        %v1164 = vpack.c.b16 %v1096, %v1094
        %v1165 = vpack.c.b16 %v1097, %v1095
        %v1166 = vpack.c.b16 %v1100, %v1098
        %v1167 = vpack.c.b16 %v1101, %v1099
        %v1168 = vpack.c.b16 %v1104, %v1102
        %v1169 = vpack.c.b16 %v1105, %v1103
        %1234 = vmatprep.subr.bf16.mxu0 %v1121
        %1235 = vmatpush1.bf16.msra.mxu0 %v1120
        %1236 = vmatprep.subr.bf16.mxu0 %v1119
        %1237 = vmatpush1.bf16.msra.mxu0 %v1118
        %1238 = vmatprep.subr.bf16.mxu0 %v1117
        %1239 = vmatpush1.bf16.msra.mxu0 %v1116
        %1240 = vmatprep.subr.bf16.mxu0 %v1115
        %1241 = vmatpush1.bf16.msra.mxu0 %v1114
        %1242 = vmatprep.subr.bf16.mxu0 %v1113
        %1243 = vmatpush1.bf16.msra.mxu0 %v1112
        %1244 = vmatprep.subr.bf16.mxu0 %v1111
        %1245 = vmatpush1.bf16.msra.mxu0 %v1110
        %1246 = vmatprep.subr.bf16.mxu0 %v1109
        %1247 = vmatpush1.bf16.msra.mxu0 %v1108
        %1248 = vmatprep.subr.bf16.mxu0 %v1107
        %1249 = vmatpush1.bf16.msra.mxu0 %v1106
        %1250 = vmatprep.subr.bf16.mxu0 %v1137
        %1251 = vmatpush2.bf16.msra.mxu0 %v1136
        %1252 = vmatprep.subr.bf16.mxu0 %v1135
        %1253 = vmatpush2.bf16.msra.mxu0 %v1134
        %1254 = vmatprep.subr.bf16.mxu0 %v1133
        %1255 = vmatpush2.bf16.msra.mxu0 %v1132
        %1256 = vmatprep.subr.bf16.mxu0 %v1131
        %1257 = vmatpush2.bf16.msra.mxu0 %v1130
        %1258 = vmatprep.subr.bf16.mxu0 %v1129
        %1259 = vmatpush2.bf16.msra.mxu0 %v1128
        %1260 = vmatprep.subr.bf16.mxu0 %v1127
        %1261 = vmatpush2.bf16.msra.mxu0 %v1126
        %1262 = vmatprep.subr.bf16.mxu0 %v1125
        %1263 = vmatpush2.bf16.msra.mxu0 %v1124
        %1264 = vmatprep.subr.bf16.mxu0 %v1123
        %1265 = vmatpush2.bf16.msra.mxu0 %v1122
        %1266 = vmatprep.mubr.bf16.mxu0 %v847
        %1267 = vmatmul.mubr.bf16.gmra.mxu0 %v846
        %v1268 = vpop.f32.mrf.mxu0
        %v1269 = vadd.f32 0.0, %v1268
        %v1270 = vpop.f32.mrf.mxu0
        %v1271 = vadd.f32 0.0, %v1270
        %v1272 = vpop.f32.mrf.mxu0
        %v1273 = vpop.f32.mrf.mxu0
        %1274 = vdwg.mxu0
        %1275 = vmatprep.subr.bf16.mxu0 %v1153
        %1276 = vmatpush1.bf16.msra.mxu0 %v1152
        %1277 = vmatprep.subr.bf16.mxu0 %v1151
        %1278 = vmatpush1.bf16.msra.mxu0 %v1150
        %1279 = vmatprep.subr.bf16.mxu0 %v1149
        %1280 = vmatpush1.bf16.msra.mxu0 %v1148
        %1281 = vmatprep.subr.bf16.mxu0 %v1147
        %1282 = vmatpush1.bf16.msra.mxu0 %v1146
        %1283 = vmatprep.subr.bf16.mxu0 %v1145
        %1284 = vmatpush1.bf16.msra.mxu0 %v1144
        %1285 = vmatprep.subr.bf16.mxu0 %v1143
        %1286 = vmatpush1.bf16.msra.mxu0 %v1142
        %1287 = vmatprep.subr.bf16.mxu0 %v1141
        %1288 = vmatpush1.bf16.msra.mxu0 %v1140
        %1289 = vmatprep.subr.bf16.mxu0 %v1139
        %1290 = vmatpush1.bf16.msra.mxu0 %v1138
        %1291 = vmatprep.subr.bf16.mxu0 %v1169
        %1292 = vmatpush2.bf16.msra.mxu0 %v1168
        %1293 = vmatprep.subr.bf16.mxu0 %v1167
        %1294 = vmatpush2.bf16.msra.mxu0 %v1166
        %1295 = vmatprep.subr.bf16.mxu0 %v1165
        %1296 = vmatpush2.bf16.msra.mxu0 %v1164
        %1297 = vmatprep.subr.bf16.mxu0 %v1163
        %1298 = vmatpush2.bf16.msra.mxu0 %v1162
        %1299 = vmatprep.subr.bf16.mxu0 %v1161
        %1300 = vmatpush2.bf16.msra.mxu0 %v1160
        %1301 = vmatprep.subr.bf16.mxu0 %v1159
        %1302 = vmatpush2.bf16.msra.mxu0 %v1158
        %1303 = vmatprep.subr.bf16.mxu0 %v1157
        %1304 = vmatpush2.bf16.msra.mxu0 %v1156
        %1305 = vmatprep.subr.bf16.mxu0 %v1155
        %1306 = vmatpush2.bf16.msra.mxu0 %v1154
        %1307 = vmatprep.mubr.bf16.mxu0 %v849
        %1308 = vmatmul.mubr.bf16.gmra.mxu0 %v848
        %v1309 = vpop.f32.mrf.mxu0
        %v1310 = vadd.f32 %v1269, %v1309
        %v1311 = vpop.f32.mrf.mxu0
        %v1312 = vadd.f32 %v1271, %v1311
        %v1313 = vpop.f32.mrf.mxu0
        %v1314 = vpop.f32.mrf.mxu0
        %1315 = vdwg.mxu0
        %v1316 = vld [vmem:[#allocation12] sm:$0x3]
        %v1318 = vlaneseq
        %v1319 = vshrl.u32 %v1318, 7
        %v1320 = vsub.s32 0, %v1319
        %v1321 = vrot.slane %v1316, %v1320
        %v1322 = vlaneseq
        %v1323 = vshrl.u32 %v1322, 7
        %v1324 = vsub.s32 1, %v1323
        %v1325 = vrot.slane %v1316, %v1324
        %v1328 = vmul.f32 %v1310, %v1321
        %v1329 = vmul.f32 %v1312, %v1325
        %v1330 = vld [vmem:[#allocation21] sm:$0x3]
        %v1332 = vlaneseq
        %v1333 = vshrl.u32 %v1332, 7
        %v1334 = vsub.s32 0, %v1333
        %v1335 = vrot.slane %v1330, %v1334
        %v1336 = vlaneseq
        %v1337 = vshrl.u32 %v1336, 7
        %v1338 = vsub.s32 1, %v1337
        %v1339 = vrot.slane %v1330, %v1338
        %v1342 = vadd.f32 %v1328, %v1335
        %v1343 = vadd.f32 %v1329, %v1339
        %v1344 = vmul.f32 %v1342, 0.5
        %v1345 = vmul.f32 %v1343, 0.5
        %v1346 = vmul.f32 %v1342, 0.70710677
        %v1347 = vmul.f32 %v1343, 0.70710677
        %v1348 = verf.f32.pop %v1346
        %v1349 = verf.f32.pop %v1347
        %v1350 = vadd.f32 %v1348, 1.0
        %v1351 = vadd.f32 %v1349, 1.0
        %v1352 = vmul.f32 %v1344, %v1350
        %v1353 = vmul.f32 %v1345, %v1351
        %v1354 = vpack.c.bf16 %v1352, %v1352
        %v1355 = vpack.c.bf16 %v1353, %v1353
        %v1356 = vld [vmem:[#allocation4] sm:$0xf]
        %v1357 = vld [vmem:[#allocation4 + $0x4] sm:$0xf]
        %v1358 = vld [vmem:[#allocation4 + $0x8] sm:$0xf]
        %v1359 = vld [vmem:[#allocation4 + $0xc] sm:$0xf]
        %v1360 = vld [vmem:[#allocation4 + $0x10] sm:$0xf]
        %v1361 = vld [vmem:[#allocation4 + $0x14] sm:$0xf]
        %v1362 = vld [vmem:[#allocation4 + $0x18] sm:$0xf]
        %v1363 = vld [vmem:[#allocation4 + $0x1c] sm:$0xf]
        %v1364 = vld [vmem:[#allocation4 + $0x20] sm:$0xf]
        %v1365 = vld [vmem:[#allocation4 + $0x24] sm:$0xf]
        %v1366 = vld [vmem:[#allocation4 + $0x28] sm:$0xf]
        %v1367 = vld [vmem:[#allocation4 + $0x2c] sm:$0xf]
        %v1368 = vld [vmem:[#allocation4 + $0x30] sm:$0xf]
        %v1369 = vld [vmem:[#allocation4 + $0x34] sm:$0xf]
        %v1370 = vld [vmem:[#allocation4 + $0x38] sm:$0xf]
        %v1371 = vld [vmem:[#allocation4 + $0x3c] sm:$0xf]
        %v1372 = vld [vmem:[#allocation4 + $0x40] sm:$0xf]
        %v1373 = vld [vmem:[#allocation4 + $0x44] sm:$0xf]
        %v1374 = vld [vmem:[#allocation4 + $0x48] sm:$0xf]
        %v1375 = vld [vmem:[#allocation4 + $0x4c] sm:$0xf]
        %v1376 = vld [vmem:[#allocation4 + $0x50] sm:$0xf]
        %v1377 = vld [vmem:[#allocation4 + $0x54] sm:$0xf]
        %v1378 = vld [vmem:[#allocation4 + $0x58] sm:$0xf]
        %v1379 = vld [vmem:[#allocation4 + $0x5c] sm:$0xf]
        %v1380 = vld [vmem:[#allocation4 + $0x60] sm:$0xf]
        %v1381 = vld [vmem:[#allocation4 + $0x64] sm:$0xf]
        %v1382 = vld [vmem:[#allocation4 + $0x68] sm:$0xf]
        %v1383 = vld [vmem:[#allocation4 + $0x6c] sm:$0xf]
        %v1384 = vld [vmem:[#allocation4 + $0x70] sm:$0xf]
        %v1385 = vld [vmem:[#allocation4 + $0x74] sm:$0xf]
        %v1386 = vld [vmem:[#allocation4 + $0x78] sm:$0xf]
        %v1387 = vld [vmem:[#allocation4 + $0x7c] sm:$0xf]
        %v1420 = vunpack.c.l.b16 %v1356
        %v1421 = vunpack.c.l.b16 %v1357
        %v1422 = vunpack.c.l.b16 %v1358
        %v1423 = vunpack.c.l.b16 %v1359
        %v1424 = vunpack.c.l.b16 %v1360
        %v1425 = vunpack.c.l.b16 %v1361
        %v1426 = vunpack.c.l.b16 %v1362
        %v1427 = vunpack.c.l.b16 %v1363
        %v1428 = vunpack.c.l.b16 %v1364
        %v1429 = vunpack.c.l.b16 %v1365
        %v1430 = vunpack.c.l.b16 %v1366
        %v1431 = vunpack.c.l.b16 %v1367
        %v1432 = vunpack.c.l.b16 %v1368
        %v1433 = vunpack.c.l.b16 %v1369
        %v1434 = vunpack.c.l.b16 %v1370
        %v1435 = vunpack.c.l.b16 %v1371
        %v1436 = vunpack.c.l.b16 %v1372
        %v1437 = vunpack.c.l.b16 %v1373
        %v1438 = vunpack.c.l.b16 %v1374
        %v1439 = vunpack.c.l.b16 %v1375
        %v1440 = vunpack.c.l.b16 %v1376
        %v1441 = vunpack.c.l.b16 %v1377
        %v1442 = vunpack.c.l.b16 %v1378
        %v1443 = vunpack.c.l.b16 %v1379
        %v1444 = vunpack.c.l.b16 %v1380
        %v1445 = vunpack.c.l.b16 %v1381
        %v1446 = vunpack.c.l.b16 %v1382
        %v1447 = vunpack.c.l.b16 %v1383
        %v1448 = vunpack.c.l.b16 %v1384
        %v1449 = vunpack.c.l.b16 %v1385
        %v1450 = vunpack.c.l.b16 %v1386
        %v1451 = vunpack.c.l.b16 %v1387
        %v1452 = vpack.c.b16 %v1421, %v1420
        %v1453 = vpack.c.b16 %v1423, %v1422
        %v1454 = vpack.c.b16 %v1425, %v1424
        %v1455 = vpack.c.b16 %v1427, %v1426
        %v1456 = vpack.c.b16 %v1429, %v1428
        %v1457 = vpack.c.b16 %v1431, %v1430
        %v1458 = vpack.c.b16 %v1433, %v1432
        %v1459 = vpack.c.b16 %v1435, %v1434
        %v1460 = vpack.c.b16 %v1437, %v1436
        %v1461 = vpack.c.b16 %v1439, %v1438
        %v1462 = vpack.c.b16 %v1441, %v1440
        %v1463 = vpack.c.b16 %v1443, %v1442
        %v1464 = vpack.c.b16 %v1445, %v1444
        %v1465 = vpack.c.b16 %v1447, %v1446
        %v1466 = vpack.c.b16 %v1449, %v1448
        %v1467 = vpack.c.b16 %v1451, %v1450
        %1484 = vmatprep.subr.bf16.mxu0 0
        %1485 = vmatpush1.bf16.msra.mxu0 %v1459
        %1486 = vmatprep.subr.bf16.mxu0 0
        %1487 = vmatpush1.bf16.msra.mxu0 %v1458
        %1488 = vmatprep.subr.bf16.mxu0 0
        %1489 = vmatpush1.bf16.msra.mxu0 %v1457
        %1490 = vmatprep.subr.bf16.mxu0 0
        %1491 = vmatpush1.bf16.msra.mxu0 %v1456
        %1492 = vmatprep.subr.bf16.mxu0 0
        %1493 = vmatpush1.bf16.msra.mxu0 %v1455
        %1494 = vmatprep.subr.bf16.mxu0 0
        %1495 = vmatpush1.bf16.msra.mxu0 %v1454
        %1496 = vmatprep.subr.bf16.mxu0 0
        %1497 = vmatpush1.bf16.msra.mxu0 %v1453
        %1498 = vmatprep.subr.bf16.mxu0 0
        %1499 = vmatpush1.bf16.msra.mxu0 %v1452
        %1500 = vmatprep.subr.bf16.mxu0 0
        %1501 = vmatpush2.bf16.msra.mxu0 %v1467
        %1502 = vmatprep.subr.bf16.mxu0 0
        %1503 = vmatpush2.bf16.msra.mxu0 %v1466
        %1504 = vmatprep.subr.bf16.mxu0 0
        %1505 = vmatpush2.bf16.msra.mxu0 %v1465
        %1506 = vmatprep.subr.bf16.mxu0 0
        %1507 = vmatpush2.bf16.msra.mxu0 %v1464
        %1508 = vmatprep.subr.bf16.mxu0 0
        %1509 = vmatpush2.bf16.msra.mxu0 %v1463
        %1510 = vmatprep.subr.bf16.mxu0 0
        %1511 = vmatpush2.bf16.msra.mxu0 %v1462
        %1512 = vmatprep.subr.bf16.mxu0 0
        %1513 = vmatpush2.bf16.msra.mxu0 %v1461
        %1514 = vmatprep.subr.bf16.mxu0 0
        %1515 = vmatpush2.bf16.msra.mxu0 %v1460
        %1516 = vmatprep.mubr.bf16.mxu0 %v1355
        %1517 = vmatmul.mubr.bf16.gmra.mxu0 %v1354
        %v1518 = vpop.f32.mrf.mxu0
        %v1519 = vadd.f32 0.0, %v1518
        %v1520 = vpop.f32.mrf.mxu0
        %v1521 = vpop.f32.mrf.mxu0
        %v1522 = vpop.f32.mrf.mxu0
        %1523 = vdwg.mxu0
        %v1524 = vld [vmem:[#allocation13] sm:$0x1]
        %v1526 = vlaneseq
        %v1527 = vshrl.u32 %v1526, 7
        %v1528 = vsub.s32 0, %v1527
        %v1529 = vrot.slane %v1524, %v1528
        %v1531 = vmul.f32 %v1519, %v1529
        %v1532 = vld [vmem:[#allocation22] sm:$0x1]
        %v1534 = vlaneseq
        %v1535 = vshrl.u32 %v1534, 7
        %v1536 = vsub.s32 0, %v1535
        %v1537 = vrot.slane %v1532, %v1536
        %v1539 = vadd.f32 %v1531, %v1537
        %v1540 = vmul.f32 %v1539, 0.5
        %v1541 = vmul.f32 %v1539, 0.70710677
        %v1542 = verf.f32.pop %v1541
        %v1543 = vadd.f32 %v1542, 1.0
        %v1544 = vmul.f32 %v1540, %v1543
        %v1545 = vpack.c.bf16 %v1544, %v1544
        %v1546 = vld [vmem:[#allocation6] sm:$0xff]
        %v1547 = vld [vmem:[#allocation6 + $0x8] sm:$0xff]
        %v1548 = vld [vmem:[#allocation6 + $0x10] sm:$0xff]
        %v1549 = vld [vmem:[#allocation6 + $0x18] sm:$0xff]
        %v1550 = vld [vmem:[#allocation6 + $0x20] sm:$0xff]
        %v1551 = vld [vmem:[#allocation6 + $0x28] sm:$0xff]
        %v1552 = vld [vmem:[#allocation6 + $0x30] sm:$0xff]
        %v1553 = vld [vmem:[#allocation6 + $0x38] sm:$0xff]
        %v1554 = vld [vmem:[#allocation6 + $0x40] sm:$0xff]
        %v1555 = vld [vmem:[#allocation6 + $0x48] sm:$0xff]
        %v1556 = vld [vmem:[#allocation6 + $0x50] sm:$0xff]
        %v1557 = vld [vmem:[#allocation6 + $0x58] sm:$0xff]
        %v1558 = vld [vmem:[#allocation6 + $0x60] sm:$0xff]
        %v1559 = vld [vmem:[#allocation6 + $0x68] sm:$0xff]
        %v1560 = vld [vmem:[#allocation6 + $0x70] sm:$0xff]
        %v1561 = vld [vmem:[#allocation6 + $0x78] sm:$0xff]
        %v1578 = vunpack.c.l.b16 %v1546
        %v1579 = vunpack.c.h.b16 %v1546
        %v1580 = vunpack.c.l.b16 %v1547
        %v1581 = vunpack.c.h.b16 %v1547
        %v1582 = vunpack.c.l.b16 %v1548
        %v1583 = vunpack.c.h.b16 %v1548
        %v1584 = vunpack.c.l.b16 %v1549
        %v1585 = vunpack.c.h.b16 %v1549
        %v1586 = vunpack.c.l.b16 %v1550
        %v1587 = vunpack.c.h.b16 %v1550
        %v1588 = vunpack.c.l.b16 %v1551
        %v1589 = vunpack.c.h.b16 %v1551
        %v1590 = vunpack.c.l.b16 %v1552
        %v1591 = vunpack.c.h.b16 %v1552
        %v1592 = vunpack.c.l.b16 %v1553
        %v1593 = vunpack.c.h.b16 %v1553
        %v1594 = vunpack.c.l.b16 %v1554
        %v1595 = vunpack.c.h.b16 %v1554
        %v1596 = vunpack.c.l.b16 %v1555
        %v1597 = vunpack.c.h.b16 %v1555
        %v1598 = vunpack.c.l.b16 %v1556
        %v1599 = vunpack.c.h.b16 %v1556
        %v1600 = vunpack.c.l.b16 %v1557
        %v1601 = vunpack.c.h.b16 %v1557
        %v1602 = vunpack.c.l.b16 %v1558
        %v1603 = vunpack.c.h.b16 %v1558
        %v1604 = vunpack.c.l.b16 %v1559
        %v1605 = vunpack.c.h.b16 %v1559
        %v1606 = vunpack.c.l.b16 %v1560
        %v1607 = vunpack.c.h.b16 %v1560
        %v1608 = vunpack.c.l.b16 %v1561
        %v1609 = vunpack.c.h.b16 %v1561
        %v1610 = vpack.c.b16 %v1580, %v1578
        %v1611 = vpack.c.b16 %v1581, %v1579
        %v1612 = vpack.c.b16 %v1584, %v1582
        %v1613 = vpack.c.b16 %v1585, %v1583
        %v1614 = vpack.c.b16 %v1588, %v1586
        %v1615 = vpack.c.b16 %v1589, %v1587
        %v1616 = vpack.c.b16 %v1592, %v1590
        %v1617 = vpack.c.b16 %v1593, %v1591
        %v1618 = vpack.c.b16 %v1596, %v1594
        %v1619 = vpack.c.b16 %v1597, %v1595
        %v1620 = vpack.c.b16 %v1600, %v1598
        %v1621 = vpack.c.b16 %v1601, %v1599
        %v1622 = vpack.c.b16 %v1604, %v1602
        %v1623 = vpack.c.b16 %v1605, %v1603
        %v1624 = vpack.c.b16 %v1608, %v1606
        %v1625 = vpack.c.b16 %v1609, %v1607
        %1642 = vmatprep.subr.bf16.mxu0 %v1625
        %1643 = vmatpush1.bf16.msra.mxu0 %v1624
        %1644 = vmatprep.subr.bf16.mxu0 %v1623
        %1645 = vmatpush1.bf16.msra.mxu0 %v1622
        %1646 = vmatprep.subr.bf16.mxu0 %v1621
        %1647 = vmatpush1.bf16.msra.mxu0 %v1620
        %1648 = vmatprep.subr.bf16.mxu0 %v1619
        %1649 = vmatpush1.bf16.msra.mxu0 %v1618
        %1650 = vmatprep.subr.bf16.mxu0 %v1617
        %1651 = vmatpush1.bf16.msra.mxu0 %v1616
        %1652 = vmatprep.subr.bf16.mxu0 %v1615
        %1653 = vmatpush1.bf16.msra.mxu0 %v1614
        %1654 = vmatprep.subr.bf16.mxu0 %v1613
        %1655 = vmatpush1.bf16.msra.mxu0 %v1612
        %1656 = vmatprep.subr.bf16.mxu0 %v1611
        %1657 = vmatpush1.bf16.msra.mxu0 %v1610
        %1658 = vmatprep.subr.bf16.mxu0 0
        %1659 = vmatpush2.bf16.msra.mxu0 0
        %1660 = vmatprep.subr.bf16.mxu0 0
        %1661 = vmatpush2.bf16.msra.mxu0 0
        %1662 = vmatprep.subr.bf16.mxu0 0
        %1663 = vmatpush2.bf16.msra.mxu0 0
        %1664 = vmatprep.subr.bf16.mxu0 0
        %1665 = vmatpush2.bf16.msra.mxu0 0
        %1666 = vmatprep.subr.bf16.mxu0 0
        %1667 = vmatpush2.bf16.msra.mxu0 0
        %1668 = vmatprep.subr.bf16.mxu0 0
        %1669 = vmatpush2.bf16.msra.mxu0 0
        %1670 = vmatprep.subr.bf16.mxu0 0
        %1671 = vmatpush2.bf16.msra.mxu0 0
        %1672 = vmatprep.subr.bf16.mxu0 0
        %1673 = vmatpush2.bf16.msra.mxu0 0
        %1674 = vmatprep.mubr.bf16.mxu0 0
        %1675 = vmatmul.mubr.bf16.gmra.mxu0 %v1545
        %v1676 = vpop.f32.mrf.mxu0
        %v1677 = vadd.f32 0.0, %v1676
        %v1678 = vpop.f32.mrf.mxu0
        %v1679 = vadd.f32 0.0, %v1678
        %v1680 = vpop.f32.mrf.mxu0
        %v1681 = vpop.f32.mrf.mxu0
        %1682 = vdwg.mxu0
        %v1683 = vld [vmem:[#allocation15] sm:$0x3]
        %v1685 = vlaneseq
        %v1686 = vshrl.u32 %v1685, 7
        %v1687 = vsub.s32 0, %v1686
        %v1688 = vrot.slane %v1683, %v1687
        %v1689 = vlaneseq
        %v1690 = vshrl.u32 %v1689, 7
        %v1691 = vsub.s32 1, %v1690
        %v1692 = vrot.slane %v1683, %v1691
        %v1695 = vmul.f32 %v1677, %v1688
        %v1696 = vmul.f32 %v1679, %v1692
        %v1697 = vld [vmem:[#allocation24] sm:$0x3]
        %v1699 = vlaneseq
        %v1700 = vshrl.u32 %v1699, 7
        %v1701 = vsub.s32 0, %v1700
        %v1702 = vrot.slane %v1697, %v1701
        %v1703 = vlaneseq
        %v1704 = vshrl.u32 %v1703, 7
        %v1705 = vsub.s32 1, %v1704
        %v1706 = vrot.slane %v1697, %v1705
        %v1709 = vadd.f32 %v1695, %v1702
        %v1710 = vadd.f32 %v1696, %v1706
        %v1711 = vmul.f32 %v1709, 0.5
        %v1712 = vmul.f32 %v1710, 0.5
        %v1713 = vmul.f32 %v1709, 0.70710677
        %v1714 = vmul.f32 %v1710, 0.70710677
        %v1715 = verf.f32.pop %v1713
        %v1716 = verf.f32.pop %v1714
        %v1717 = vadd.f32 %v1715, 1.0
        %v1718 = vadd.f32 %v1716, 1.0
        %v1719 = vmul.f32 %v1711, %v1717
        %v1720 = vmul.f32 %v1712, %v1718
        %v1721 = vpack.c.bf16 %v1719, %v1719
        %v1722 = vpack.c.bf16 %v1720, %v1720
        %v1723 = vld [vmem:[#allocation7] sm:$0xff]
        %v1724 = vld [vmem:[#allocation7 + $0x8] sm:$0xf]
        %v1725 = vld [vmem:[#allocation7 + $0xc] sm:$0xff]
        %v1726 = vld [vmem:[#allocation7 + $0x14] sm:$0xf]
        %v1727 = vld [vmem:[#allocation7 + $0x18] sm:$0xff]
        %v1728 = vld [vmem:[#allocation7 + $0x20] sm:$0xf]
        %v1729 = vld [vmem:[#allocation7 + $0x24] sm:$0xff]
        %v1730 = vld [vmem:[#allocation7 + $0x2c] sm:$0xf]
        %v1731 = vld [vmem:[#allocation7 + $0x30] sm:$0xff]
        %v1732 = vld [vmem:[#allocation7 + $0x38] sm:$0xf]
        %v1733 = vld [vmem:[#allocation7 + $0x3c] sm:$0xff]
        %v1734 = vld [vmem:[#allocation7 + $0x44] sm:$0xf]
        %v1735 = vld [vmem:[#allocation7 + $0x48] sm:$0xff]
        %v1736 = vld [vmem:[#allocation7 + $0x50] sm:$0xf]
        %v1737 = vld [vmem:[#allocation7 + $0x54] sm:$0xff]
        %v1738 = vld [vmem:[#allocation7 + $0x5c] sm:$0xf]
        %v1739 = vld [vmem:[#allocation7 + $0x60] sm:$0xff]
        %v1740 = vld [vmem:[#allocation7 + $0x68] sm:$0xf]
        %v1741 = vld [vmem:[#allocation7 + $0x6c] sm:$0xff]
        %v1742 = vld [vmem:[#allocation7 + $0x74] sm:$0xf]
        %v1743 = vld [vmem:[#allocation7 + $0x78] sm:$0xff]
        %v1744 = vld [vmem:[#allocation7 + $0x80] sm:$0xf]
        %v1745 = vld [vmem:[#allocation7 + $0x84] sm:$0xff]
        %v1746 = vld [vmem:[#allocation7 + $0x8c] sm:$0xf]
        %v1747 = vld [vmem:[#allocation7 + $0x90] sm:$0xff]
        %v1748 = vld [vmem:[#allocation7 + $0x98] sm:$0xf]
        %v1749 = vld [vmem:[#allocation7 + $0x9c] sm:$0xff]
        %v1750 = vld [vmem:[#allocation7 + $0xa4] sm:$0xf]
        %v1751 = vld [vmem:[#allocation7 + $0xa8] sm:$0xff]
        %v1752 = vld [vmem:[#allocation7 + $0xb0] sm:$0xf]
        %v1753 = vld [vmem:[#allocation7 + $0xb4] sm:$0xff]
        %v1754 = vld [vmem:[#allocation7 + $0xbc] sm:$0xf]
        %v1755 = vld [vmem:[#allocation7 + $0xc0] sm:$0xff]
        %v1756 = vld [vmem:[#allocation7 + $0xc8] sm:$0xf]
        %v1757 = vld [vmem:[#allocation7 + $0xcc] sm:$0xff]
        %v1758 = vld [vmem:[#allocation7 + $0xd4] sm:$0xf]
        %v1759 = vld [vmem:[#allocation7 + $0xd8] sm:$0xff]
        %v1760 = vld [vmem:[#allocation7 + $0xe0] sm:$0xf]
        %v1761 = vld [vmem:[#allocation7 + $0xe4] sm:$0xff]
        %v1762 = vld [vmem:[#allocation7 + $0xec] sm:$0xf]
        %v1763 = vld [vmem:[#allocation7 + $0xf0] sm:$0xff]
        %v1764 = vld [vmem:[#allocation7 + $0xf8] sm:$0xf]
        %v1765 = vld [vmem:[#allocation7 + $0xfc] sm:$0xff]
        %v1766 = vld [vmem:[#allocation7 + $0x104] sm:$0xf]
        %v1767 = vld [vmem:[#allocation7 + $0x108] sm:$0xff]
        %v1768 = vld [vmem:[#allocation7 + $0x110] sm:$0xf]
        %v1769 = vld [vmem:[#allocation7 + $0x114] sm:$0xff]
        %v1770 = vld [vmem:[#allocation7 + $0x11c] sm:$0xf]
        %v1771 = vld [vmem:[#allocation7 + $0x120] sm:$0xff]
        %v1772 = vld [vmem:[#allocation7 + $0x128] sm:$0xf]
        %v1773 = vld [vmem:[#allocation7 + $0x12c] sm:$0xff]
        %v1774 = vld [vmem:[#allocation7 + $0x134] sm:$0xf]
        %v1775 = vld [vmem:[#allocation7 + $0x138] sm:$0xff]
        %v1776 = vld [vmem:[#allocation7 + $0x140] sm:$0xf]
        %v1777 = vld [vmem:[#allocation7 + $0x144] sm:$0xff]
        %v1778 = vld [vmem:[#allocation7 + $0x14c] sm:$0xf]
        %v1779 = vld [vmem:[#allocation7 + $0x150] sm:$0xff]
        %v1780 = vld [vmem:[#allocation7 + $0x158] sm:$0xf]
        %v1781 = vld [vmem:[#allocation7 + $0x15c] sm:$0xff]
        %v1782 = vld [vmem:[#allocation7 + $0x164] sm:$0xf]
        %v1783 = vld [vmem:[#allocation7 + $0x168] sm:$0xff]
        %v1784 = vld [vmem:[#allocation7 + $0x170] sm:$0xf]
        %v1785 = vld [vmem:[#allocation7 + $0x174] sm:$0xff]
        %v1786 = vld [vmem:[#allocation7 + $0x17c] sm:$0xf]
        %v1851 = vunpack.c.l.b16 %v1723
        %v1852 = vunpack.c.h.b16 %v1723
        %v1853 = vunpack.c.l.b16 %v1724
        %v1854 = vunpack.c.l.b16 %v1725
        %v1855 = vunpack.c.h.b16 %v1725
        %v1856 = vunpack.c.l.b16 %v1726
        %v1857 = vunpack.c.l.b16 %v1727
        %v1858 = vunpack.c.h.b16 %v1727
        %v1859 = vunpack.c.l.b16 %v1728
        %v1860 = vunpack.c.l.b16 %v1729
        %v1861 = vunpack.c.h.b16 %v1729
        %v1862 = vunpack.c.l.b16 %v1730
        %v1863 = vunpack.c.l.b16 %v1731
        %v1864 = vunpack.c.h.b16 %v1731
        %v1865 = vunpack.c.l.b16 %v1732
        %v1866 = vunpack.c.l.b16 %v1733
        %v1867 = vunpack.c.h.b16 %v1733
        %v1868 = vunpack.c.l.b16 %v1734
        %v1869 = vunpack.c.l.b16 %v1735
        %v1870 = vunpack.c.h.b16 %v1735
        %v1871 = vunpack.c.l.b16 %v1736
        %v1872 = vunpack.c.l.b16 %v1737
        %v1873 = vunpack.c.h.b16 %v1737
        %v1874 = vunpack.c.l.b16 %v1738
        %v1875 = vunpack.c.l.b16 %v1739
        %v1876 = vunpack.c.h.b16 %v1739
        %v1877 = vunpack.c.l.b16 %v1740
        %v1878 = vunpack.c.l.b16 %v1741
        %v1879 = vunpack.c.h.b16 %v1741
        %v1880 = vunpack.c.l.b16 %v1742
        %v1881 = vunpack.c.l.b16 %v1743
        %v1882 = vunpack.c.h.b16 %v1743
        %v1883 = vunpack.c.l.b16 %v1744
        %v1884 = vunpack.c.l.b16 %v1745
        %v1885 = vunpack.c.h.b16 %v1745
        %v1886 = vunpack.c.l.b16 %v1746
        %v1887 = vunpack.c.l.b16 %v1747
        %v1888 = vunpack.c.h.b16 %v1747
        %v1889 = vunpack.c.l.b16 %v1748
        %v1890 = vunpack.c.l.b16 %v1749
        %v1891 = vunpack.c.h.b16 %v1749
        %v1892 = vunpack.c.l.b16 %v1750
        %v1893 = vunpack.c.l.b16 %v1751
        %v1894 = vunpack.c.h.b16 %v1751
        %v1895 = vunpack.c.l.b16 %v1752
        %v1896 = vunpack.c.l.b16 %v1753
        %v1897 = vunpack.c.h.b16 %v1753
        %v1898 = vunpack.c.l.b16 %v1754
        %v1899 = vunpack.c.l.b16 %v1755
        %v1900 = vunpack.c.h.b16 %v1755
        %v1901 = vunpack.c.l.b16 %v1756
        %v1902 = vunpack.c.l.b16 %v1757
        %v1903 = vunpack.c.h.b16 %v1757
        %v1904 = vunpack.c.l.b16 %v1758
        %v1905 = vunpack.c.l.b16 %v1759
        %v1906 = vunpack.c.h.b16 %v1759
        %v1907 = vunpack.c.l.b16 %v1760
        %v1908 = vunpack.c.l.b16 %v1761
        %v1909 = vunpack.c.h.b16 %v1761
        %v1910 = vunpack.c.l.b16 %v1762
        %v1911 = vunpack.c.l.b16 %v1763
        %v1912 = vunpack.c.h.b16 %v1763
        %v1913 = vunpack.c.l.b16 %v1764
        %v1914 = vunpack.c.l.b16 %v1765
        %v1915 = vunpack.c.h.b16 %v1765
        %v1916 = vunpack.c.l.b16 %v1766
        %v1917 = vunpack.c.l.b16 %v1767
        %v1918 = vunpack.c.h.b16 %v1767
        %v1919 = vunpack.c.l.b16 %v1768
        %v1920 = vunpack.c.l.b16 %v1769
        %v1921 = vunpack.c.h.b16 %v1769
        %v1922 = vunpack.c.l.b16 %v1770
        %v1923 = vunpack.c.l.b16 %v1771
        %v1924 = vunpack.c.h.b16 %v1771
        %v1925 = vunpack.c.l.b16 %v1772
        %v1926 = vunpack.c.l.b16 %v1773
        %v1927 = vunpack.c.h.b16 %v1773
        %v1928 = vunpack.c.l.b16 %v1774
        %v1929 = vunpack.c.l.b16 %v1775
        %v1930 = vunpack.c.h.b16 %v1775
        %v1931 = vunpack.c.l.b16 %v1776
        %v1932 = vunpack.c.l.b16 %v1777
        %v1933 = vunpack.c.h.b16 %v1777
        %v1934 = vunpack.c.l.b16 %v1778
        %v1935 = vunpack.c.l.b16 %v1779
        %v1936 = vunpack.c.h.b16 %v1779
        %v1937 = vunpack.c.l.b16 %v1780
        %v1938 = vunpack.c.l.b16 %v1781
        %v1939 = vunpack.c.h.b16 %v1781
        %v1940 = vunpack.c.l.b16 %v1782
        %v1941 = vunpack.c.l.b16 %v1783
        %v1942 = vunpack.c.h.b16 %v1783
        %v1943 = vunpack.c.l.b16 %v1784
        %v1944 = vunpack.c.l.b16 %v1785
        %v1945 = vunpack.c.h.b16 %v1785
        %v1946 = vunpack.c.l.b16 %v1786
        %v1947 = vpack.c.b16 %v1854, %v1851
        %v1948 = vpack.c.b16 %v1855, %v1852
        %v1949 = vpack.c.b16 %v1856, %v1853
        %v1950 = vpack.c.b16 %v1860, %v1857
        %v1951 = vpack.c.b16 %v1861, %v1858
        %v1952 = vpack.c.b16 %v1862, %v1859
        %v1953 = vpack.c.b16 %v1866, %v1863
        %v1954 = vpack.c.b16 %v1867, %v1864
        %v1955 = vpack.c.b16 %v1868, %v1865
        %v1956 = vpack.c.b16 %v1872, %v1869
        %v1957 = vpack.c.b16 %v1873, %v1870
        %v1958 = vpack.c.b16 %v1874, %v1871
        %v1959 = vpack.c.b16 %v1878, %v1875
        %v1960 = vpack.c.b16 %v1879, %v1876
        %v1961 = vpack.c.b16 %v1880, %v1877
        %v1962 = vpack.c.b16 %v1884, %v1881
        %v1963 = vpack.c.b16 %v1885, %v1882
        %v1964 = vpack.c.b16 %v1886, %v1883
        %v1965 = vpack.c.b16 %v1890, %v1887
        %v1966 = vpack.c.b16 %v1891, %v1888
        %v1967 = vpack.c.b16 %v1892, %v1889
        %v1968 = vpack.c.b16 %v1896, %v1893
        %v1969 = vpack.c.b16 %v1897, %v1894
        %v1970 = vpack.c.b16 %v1898, %v1895
        %v1971 = vpack.c.b16 %v1902, %v1899
        %v1972 = vpack.c.b16 %v1903, %v1900
        %v1973 = vpack.c.b16 %v1904, %v1901
        %v1974 = vpack.c.b16 %v1908, %v1905
        %v1975 = vpack.c.b16 %v1909, %v1906
        %v1976 = vpack.c.b16 %v1910, %v1907
        %v1977 = vpack.c.b16 %v1914, %v1911
        %v1978 = vpack.c.b16 %v1915, %v1912
        %v1979 = vpack.c.b16 %v1916, %v1913
        %v1980 = vpack.c.b16 %v1920, %v1917
        %v1981 = vpack.c.b16 %v1921, %v1918
        %v1982 = vpack.c.b16 %v1922, %v1919
        %v1983 = vpack.c.b16 %v1926, %v1923
        %v1984 = vpack.c.b16 %v1927, %v1924
        %v1985 = vpack.c.b16 %v1928, %v1925
        %v1986 = vpack.c.b16 %v1932, %v1929
        %v1987 = vpack.c.b16 %v1933, %v1930
        %v1988 = vpack.c.b16 %v1934, %v1931
        %v1989 = vpack.c.b16 %v1938, %v1935
        %v1990 = vpack.c.b16 %v1939, %v1936
        %v1991 = vpack.c.b16 %v1940, %v1937
        %v1992 = vpack.c.b16 %v1944, %v1941
        %v1993 = vpack.c.b16 %v1945, %v1942
        %v1994 = vpack.c.b16 %v1946, %v1943
        %2043 = vmatprep.subr.bf16.mxu0 %v1969
        %2044 = vmatpush1.bf16.msra.mxu0 %v1968
        %2045 = vmatprep.subr.bf16.mxu0 %v1966
        %2046 = vmatpush1.bf16.msra.mxu0 %v1965
        %2047 = vmatprep.subr.bf16.mxu0 %v1963
        %2048 = vmatpush1.bf16.msra.mxu0 %v1962
        %2049 = vmatprep.subr.bf16.mxu0 %v1960
        %2050 = vmatpush1.bf16.msra.mxu0 %v1959
        %2051 = vmatprep.subr.bf16.mxu0 %v1957
        %2052 = vmatpush1.bf16.msra.mxu0 %v1956
        %2053 = vmatprep.subr.bf16.mxu0 %v1954
        %2054 = vmatpush1.bf16.msra.mxu0 %v1953
        %2055 = vmatprep.subr.bf16.mxu0 %v1951
        %2056 = vmatpush1.bf16.msra.mxu0 %v1950
        %2057 = vmatprep.subr.bf16.mxu0 %v1948
        %2058 = vmatpush1.bf16.msra.mxu0 %v1947
        %2059 = vmatprep.subr.bf16.mxu0 %v1993
        %2060 = vmatpush2.bf16.msra.mxu0 %v1992
        %2061 = vmatprep.subr.bf16.mxu0 %v1990
        %2062 = vmatpush2.bf16.msra.mxu0 %v1989
        %2063 = vmatprep.subr.bf16.mxu0 %v1987
        %2064 = vmatpush2.bf16.msra.mxu0 %v1986
        %2065 = vmatprep.subr.bf16.mxu0 %v1984
        %2066 = vmatpush2.bf16.msra.mxu0 %v1983
        %2067 = vmatprep.subr.bf16.mxu0 %v1981
        %2068 = vmatpush2.bf16.msra.mxu0 %v1980
        %2069 = vmatprep.subr.bf16.mxu0 %v1978
        %2070 = vmatpush2.bf16.msra.mxu0 %v1977
        %2071 = vmatprep.subr.bf16.mxu0 %v1975
        %2072 = vmatpush2.bf16.msra.mxu0 %v1974
        %2073 = vmatprep.subr.bf16.mxu0 %v1972
        %2074 = vmatpush2.bf16.msra.mxu0 %v1971
        %2075 = vmatprep.mubr.bf16.mxu0 %v1722
        %2076 = vmatmul.mubr.bf16.gmra.mxu0 %v1721
        %v2077 = vpop.f32.mrf.mxu0
        %v2078 = vadd.f32 0.0, %v2077
        %v2079 = vpop.f32.mrf.mxu0
        %v2080 = vadd.f32 0.0, %v2079
        %v2081 = vpop.f32.mrf.mxu0
        %v2082 = vpop.f32.mrf.mxu0
        %2083 = vdwg.mxu0
        %2084 = vmatprep.subr.bf16.mxu0 0
        %2085 = vmatpush1.bf16.msra.mxu0 %v1970
        %2086 = vmatprep.subr.bf16.mxu0 0
        %2087 = vmatpush1.bf16.msra.mxu0 %v1967
        %2088 = vmatprep.subr.bf16.mxu0 0
        %2089 = vmatpush1.bf16.msra.mxu0 %v1964
        %2090 = vmatprep.subr.bf16.mxu0 0
        %2091 = vmatpush1.bf16.msra.mxu0 %v1961
        %2092 = vmatprep.subr.bf16.mxu0 0
        %2093 = vmatpush1.bf16.msra.mxu0 %v1958
        %2094 = vmatprep.subr.bf16.mxu0 0
        %2095 = vmatpush1.bf16.msra.mxu0 %v1955
        %2096 = vmatprep.subr.bf16.mxu0 0
        %2097 = vmatpush1.bf16.msra.mxu0 %v1952
        %2098 = vmatprep.subr.bf16.mxu0 0
        %2099 = vmatpush1.bf16.msra.mxu0 %v1949
        %2100 = vmatprep.subr.bf16.mxu0 0
        %2101 = vmatpush2.bf16.msra.mxu0 %v1994
        %2102 = vmatprep.subr.bf16.mxu0 0
        %2103 = vmatpush2.bf16.msra.mxu0 %v1991
        %2104 = vmatprep.subr.bf16.mxu0 0
        %2105 = vmatpush2.bf16.msra.mxu0 %v1988
        %2106 = vmatprep.subr.bf16.mxu0 0
        %2107 = vmatpush2.bf16.msra.mxu0 %v1985
        %2108 = vmatprep.subr.bf16.mxu0 0
        %2109 = vmatpush2.bf16.msra.mxu0 %v1982
        %2110 = vmatprep.subr.bf16.mxu0 0
        %2111 = vmatpush2.bf16.msra.mxu0 %v1979
        %2112 = vmatprep.subr.bf16.mxu0 0
        %2113 = vmatpush2.bf16.msra.mxu0 %v1976
        %2114 = vmatprep.subr.bf16.mxu0 0
        %2115 = vmatpush2.bf16.msra.mxu0 %v1973
        %2116 = vmatprep.mubr.bf16.mxu0 %v1722
        %2117 = vmatmul.mubr.bf16.gmra.mxu0 %v1721
        %v2118 = vpop.f32.mrf.mxu0
        %v2119 = vadd.f32 0.0, %v2118
        %v2120 = vpop.f32.mrf.mxu0
        %v2121 = vpop.f32.mrf.mxu0
        %v2122 = vpop.f32.mrf.mxu0
        %2123 = vdwg.mxu0
        %v2124 = vld [vmem:[#allocation16] sm:$0x7]
        %v2126 = vlaneseq
        %v2127 = vshrl.u32 %v2126, 7
        %v2128 = vsub.s32 0, %v2127
        %v2129 = vrot.slane %v2124, %v2128
        %v2130 = vlaneseq
        %v2131 = vshrl.u32 %v2130, 7
        %v2132 = vsub.s32 1, %v2131
        %v2133 = vrot.slane %v2124, %v2132
        %v2134 = vlaneseq
        %v2135 = vshrl.u32 %v2134, 7
        %v2136 = vsub.s32 2, %v2135
        %v2137 = vrot.slane %v2124, %v2136
        %v2141 = vmul.f32 %v2078, %v2129
        %v2142 = vmul.f32 %v2080, %v2133
        %v2143 = vmul.f32 %v2119, %v2137
        %v2144 = vld [vmem:[#allocation25] sm:$0x7]
        %v2146 = vlaneseq
        %v2147 = vshrl.u32 %v2146, 7
        %v2148 = vsub.s32 0, %v2147
        %v2149 = vrot.slane %v2144, %v2148
        %v2150 = vlaneseq
        %v2151 = vshrl.u32 %v2150, 7
        %v2152 = vsub.s32 1, %v2151
        %v2153 = vrot.slane %v2144, %v2152
        %v2154 = vlaneseq
        %v2155 = vshrl.u32 %v2154, 7
        %v2156 = vsub.s32 2, %v2155
        %v2157 = vrot.slane %v2144, %v2156
        %v2161 = vadd.f32 %v2141, %v2149
        %v2162 = vadd.f32 %v2142, %v2153
        %v2163 = vadd.f32 %v2143, %v2157
        %v2164 = vmul.f32 %v2161, 0.5
        %v2165 = vmul.f32 %v2162, 0.5
        %v2166 = vmul.f32 %v2163, 0.5
        %v2167 = vmul.f32 %v2161, 0.70710677
        %v2168 = vmul.f32 %v2162, 0.70710677
        %v2169 = vmul.f32 %v2163, 0.70710677
        %v2170 = verf.f32.pop %v2167
        %v2171 = verf.f32.pop %v2168
        %v2172 = verf.f32.pop %v2169
        %v2173 = vadd.f32 %v2170, 1.0
        %v2174 = vadd.f32 %v2171, 1.0
        %v2175 = vadd.f32 %v2172, 1.0
        %v2176 = vmul.f32 %v2164, %v2173
        %v2177 = vmul.f32 %v2165, %v2174
        %v2178 = vmul.f32 %v2166, %v2175
        %v2179 = vpack.c.bf16 %v2176, %v2176
        %v2180 = vpack.c.bf16 %v2177, %v2177
        %v2181 = vpack.c.bf16 %v2178, %v2178
        %v2182 = vld [vmem:[#allocation9] sm:$0xff]
        %v2183 = vld [vmem:[#allocation9 + $0x8] sm:$0xff]
        %v2184 = vld [vmem:[#allocation9 + $0x10] sm:$0xff]
        %v2185 = vld [vmem:[#allocation9 + $0x18] sm:$0xff]
        %v2186 = vld [vmem:[#allocation9 + $0x20] sm:$0xff]
        %v2187 = vld [vmem:[#allocation9 + $0x28] sm:$0xff]
        %v2188 = vld [vmem:[#allocation9 + $0x30] sm:$0xff]
        %v2189 = vld [vmem:[#allocation9 + $0x38] sm:$0xff]
        %v2190 = vld [vmem:[#allocation9 + $0x40] sm:$0xff]
        %v2191 = vld [vmem:[#allocation9 + $0x48] sm:$0xff]
        %v2192 = vld [vmem:[#allocation9 + $0x50] sm:$0xff]
        %v2193 = vld [vmem:[#allocation9 + $0x58] sm:$0xff]
        %v2194 = vld [vmem:[#allocation9 + $0x60] sm:$0xff]
        %v2195 = vld [vmem:[#allocation9 + $0x68] sm:$0xff]
        %v2196 = vld [vmem:[#allocation9 + $0x70] sm:$0xff]
        %v2197 = vld [vmem:[#allocation9 + $0x78] sm:$0xff]
        %v2198 = vld [vmem:[#allocation9 + $0x80] sm:$0xff]
        %v2199 = vld [vmem:[#allocation9 + $0x88] sm:$0xff]
        %v2200 = vld [vmem:[#allocation9 + $0x90] sm:$0xff]
        %v2201 = vld [vmem:[#allocation9 + $0x98] sm:$0xff]
        %v2202 = vld [vmem:[#allocation9 + $0xa0] sm:$0xff]
        %v2203 = vld [vmem:[#allocation9 + $0xa8] sm:$0xff]
        %v2204 = vld [vmem:[#allocation9 + $0xb0] sm:$0xff]
        %v2205 = vld [vmem:[#allocation9 + $0xb8] sm:$0xff]
        %v2206 = vld [vmem:[#allocation9 + $0xc0] sm:$0xff]
        %v2207 = vld [vmem:[#allocation9 + $0xc8] sm:$0xff]
        %v2208 = vld [vmem:[#allocation9 + $0xd0] sm:$0xff]
        %v2209 = vld [vmem:[#allocation9 + $0xd8] sm:$0xff]
        %v2210 = vld [vmem:[#allocation9 + $0xe0] sm:$0xff]
        %v2211 = vld [vmem:[#allocation9 + $0xe8] sm:$0xff]
        %v2212 = vld [vmem:[#allocation9 + $0xf0] sm:$0xff]
        %v2213 = vld [vmem:[#allocation9 + $0xf8] sm:$0xff]
        %v2214 = vld [vmem:[#allocation9 + $0x100] sm:$0xff]
        %v2215 = vld [vmem:[#allocation9 + $0x108] sm:$0xff]
        %v2216 = vld [vmem:[#allocation9 + $0x110] sm:$0xff]
        %v2217 = vld [vmem:[#allocation9 + $0x118] sm:$0xff]
        %v2218 = vld [vmem:[#allocation9 + $0x120] sm:$0xff]
        %v2219 = vld [vmem:[#allocation9 + $0x128] sm:$0xff]
        %v2220 = vld [vmem:[#allocation9 + $0x130] sm:$0xff]
        %v2221 = vld [vmem:[#allocation9 + $0x138] sm:$0xff]
        %v2222 = vld [vmem:[#allocation9 + $0x140] sm:$0xff]
        %v2223 = vld [vmem:[#allocation9 + $0x148] sm:$0xff]
        %v2224 = vld [vmem:[#allocation9 + $0x150] sm:$0xff]
        %v2225 = vld [vmem:[#allocation9 + $0x158] sm:$0xff]
        %v2226 = vld [vmem:[#allocation9 + $0x160] sm:$0xff]
        %v2227 = vld [vmem:[#allocation9 + $0x168] sm:$0xff]
        %v2228 = vld [vmem:[#allocation9 + $0x170] sm:$0xff]
        %v2229 = vld [vmem:[#allocation9 + $0x178] sm:$0xff]
        %v2230 = vld [vmem:[#allocation9 + $0x180] sm:$0xff]
        %v2231 = vld [vmem:[#allocation9 + $0x188] sm:$0xff]
        %v2232 = vld [vmem:[#allocation9 + $0x190] sm:$0xff]
        %v2233 = vld [vmem:[#allocation9 + $0x198] sm:$0xff]
        %v2234 = vld [vmem:[#allocation9 + $0x1a0] sm:$0xff]
        %v2235 = vld [vmem:[#allocation9 + $0x1a8] sm:$0xff]
        %v2236 = vld [vmem:[#allocation9 + $0x1b0] sm:$0xff]
        %v2237 = vld [vmem:[#allocation9 + $0x1b8] sm:$0xff]
        %v2238 = vld [vmem:[#allocation9 + $0x1c0] sm:$0xff]
        %v2239 = vld [vmem:[#allocation9 + $0x1c8] sm:$0xff]
        %v2240 = vld [vmem:[#allocation9 + $0x1d0] sm:$0xff]
        %v2241 = vld [vmem:[#allocation9 + $0x1d8] sm:$0xff]
        %v2242 = vld [vmem:[#allocation9 + $0x1e0] sm:$0xff]
        %v2243 = vld [vmem:[#allocation9 + $0x1e8] sm:$0xff]
        %v2244 = vld [vmem:[#allocation9 + $0x1f0] sm:$0xff]
        %v2245 = vld [vmem:[#allocation9 + $0x1f8] sm:$0xff]
        %v2246 = vld [vmem:[#allocation9 + $0x200] sm:$0xff]
        %v2247 = vld [vmem:[#allocation9 + $0x208] sm:$0xff]
        %v2248 = vld [vmem:[#allocation9 + $0x210] sm:$0xff]
        %v2249 = vld [vmem:[#allocation9 + $0x218] sm:$0xff]
        %v2250 = vld [vmem:[#allocation9 + $0x220] sm:$0xff]
        %v2251 = vld [vmem:[#allocation9 + $0x228] sm:$0xff]
        %v2252 = vld [vmem:[#allocation9 + $0x230] sm:$0xff]
        %v2253 = vld [vmem:[#allocation9 + $0x238] sm:$0xff]
        %v2254 = vld [vmem:[#allocation9 + $0x240] sm:$0xff]
        %v2255 = vld [vmem:[#allocation9 + $0x248] sm:$0xff]
        %v2256 = vld [vmem:[#allocation9 + $0x250] sm:$0xff]
        %v2257 = vld [vmem:[#allocation9 + $0x258] sm:$0xff]
        %v2258 = vld [vmem:[#allocation9 + $0x260] sm:$0xff]
        %v2259 = vld [vmem:[#allocation9 + $0x268] sm:$0xff]
        %v2260 = vld [vmem:[#allocation9 + $0x270] sm:$0xff]
        %v2261 = vld [vmem:[#allocation9 + $0x278] sm:$0xff]
        %v2262 = vld [vmem:[#allocation9 + $0x280] sm:$0xff]
        %v2263 = vld [vmem:[#allocation9 + $0x288] sm:$0xff]
        %v2264 = vld [vmem:[#allocation9 + $0x290] sm:$0xff]
        %v2265 = vld [vmem:[#allocation9 + $0x298] sm:$0xff]
        %v2266 = vld [vmem:[#allocation9 + $0x2a0] sm:$0xff]
        %v2267 = vld [vmem:[#allocation9 + $0x2a8] sm:$0xff]
        %v2268 = vld [vmem:[#allocation9 + $0x2b0] sm:$0xff]
        %v2269 = vld [vmem:[#allocation9 + $0x2b8] sm:$0xff]
        %v2270 = vld [vmem:[#allocation9 + $0x2c0] sm:$0xff]
        %v2271 = vld [vmem:[#allocation9 + $0x2c8] sm:$0xff]
        %v2272 = vld [vmem:[#allocation9 + $0x2d0] sm:$0xff]
        %v2273 = vld [vmem:[#allocation9 + $0x2d8] sm:$0xff]
        %v2274 = vld [vmem:[#allocation9 + $0x2e0] sm:$0xff]
        %v2275 = vld [vmem:[#allocation9 + $0x2e8] sm:$0xff]
        %v2276 = vld [vmem:[#allocation9 + $0x2f0] sm:$0xff]
        %v2277 = vld [vmem:[#allocation9 + $0x2f8] sm:$0xff]
        %v2278 = vld [vmem:[#allocation9 + $0x300] sm:$0xff]
        %v2279 = vld [vmem:[#allocation9 + $0x308] sm:$0xff]
        %v2280 = vld [vmem:[#allocation9 + $0x310] sm:$0xff]
        %v2281 = vld [vmem:[#allocation9 + $0x318] sm:$0xff]
        %v2282 = vld [vmem:[#allocation9 + $0x320] sm:$0xff]
        %v2283 = vld [vmem:[#allocation9 + $0x328] sm:$0xff]
        %v2284 = vld [vmem:[#allocation9 + $0x330] sm:$0xff]
        %v2285 = vld [vmem:[#allocation9 + $0x338] sm:$0xff]
        %v2286 = vld [vmem:[#allocation9 + $0x340] sm:$0xff]
        %v2287 = vld [vmem:[#allocation9 + $0x348] sm:$0xff]
        %v2288 = vld [vmem:[#allocation9 + $0x350] sm:$0xff]
        %v2289 = vld [vmem:[#allocation9 + $0x358] sm:$0xff]
        %v2290 = vld [vmem:[#allocation9 + $0x360] sm:$0xff]
        %v2291 = vld [vmem:[#allocation9 + $0x368] sm:$0xff]
        %v2292 = vld [vmem:[#allocation9 + $0x370] sm:$0xff]
        %v2293 = vld [vmem:[#allocation9 + $0x378] sm:$0xff]
        %v2294 = vld [vmem:[#allocation9 + $0x380] sm:$0xff]
        %v2295 = vld [vmem:[#allocation9 + $0x388] sm:$0xff]
        %v2296 = vld [vmem:[#allocation9 + $0x390] sm:$0xff]
        %v2297 = vld [vmem:[#allocation9 + $0x398] sm:$0xff]
        %v2298 = vld [vmem:[#allocation9 + $0x3a0] sm:$0xff]
        %v2299 = vld [vmem:[#allocation9 + $0x3a8] sm:$0xff]
        %v2300 = vld [vmem:[#allocation9 + $0x3b0] sm:$0xff]
        %v2301 = vld [vmem:[#allocation9 + $0x3b8] sm:$0xff]
        %v2302 = vld [vmem:[#allocation9 + $0x3c0] sm:$0xff]
        %v2303 = vld [vmem:[#allocation9 + $0x3c8] sm:$0xff]
        %v2304 = vld [vmem:[#allocation9 + $0x3d0] sm:$0xff]
        %v2305 = vld [vmem:[#allocation9 + $0x3d8] sm:$0xff]
        %v2306 = vld [vmem:[#allocation9 + $0x3e0] sm:$0xff]
        %v2307 = vld [vmem:[#allocation9 + $0x3e8] sm:$0xff]
        %v2308 = vld [vmem:[#allocation9 + $0x3f0] sm:$0xff]
        %v2309 = vld [vmem:[#allocation9 + $0x3f8] sm:$0xff]
        %v2310 = vld [vmem:[#allocation9 + $0x400] sm:$0xff]
        %v2311 = vld [vmem:[#allocation9 + $0x408] sm:$0xff]
        %v2312 = vld [vmem:[#allocation9 + $0x410] sm:$0xff]
        %v2313 = vld [vmem:[#allocation9 + $0x418] sm:$0xff]
        %v2314 = vld [vmem:[#allocation9 + $0x420] sm:$0xff]
        %v2315 = vld [vmem:[#allocation9 + $0x428] sm:$0xff]
        %v2316 = vld [vmem:[#allocation9 + $0x430] sm:$0xff]
        %v2317 = vld [vmem:[#allocation9 + $0x438] sm:$0xff]
        %v2318 = vld [vmem:[#allocation9 + $0x440] sm:$0xff]
        %v2319 = vld [vmem:[#allocation9 + $0x448] sm:$0xff]
        %v2320 = vld [vmem:[#allocation9 + $0x450] sm:$0xff]
        %v2321 = vld [vmem:[#allocation9 + $0x458] sm:$0xff]
        %v2322 = vld [vmem:[#allocation9 + $0x460] sm:$0xff]
        %v2323 = vld [vmem:[#allocation9 + $0x468] sm:$0xff]
        %v2324 = vld [vmem:[#allocation9 + $0x470] sm:$0xff]
        %v2325 = vld [vmem:[#allocation9 + $0x478] sm:$0xff]
        %v2470 = vunpack.c.l.b16 %v2182
        %v2471 = vunpack.c.h.b16 %v2182
        %v2472 = vunpack.c.l.b16 %v2183
        %v2473 = vunpack.c.h.b16 %v2183
        %v2474 = vunpack.c.l.b16 %v2184
        %v2475 = vunpack.c.h.b16 %v2184
        %v2476 = vunpack.c.l.b16 %v2185
        %v2477 = vunpack.c.h.b16 %v2185
        %v2478 = vunpack.c.l.b16 %v2186
        %v2479 = vunpack.c.h.b16 %v2186
        %v2480 = vunpack.c.l.b16 %v2187
        %v2481 = vunpack.c.h.b16 %v2187
        %v2482 = vunpack.c.l.b16 %v2188
        %v2483 = vunpack.c.h.b16 %v2188
        %v2484 = vunpack.c.l.b16 %v2189
        %v2485 = vunpack.c.h.b16 %v2189
        %v2486 = vunpack.c.l.b16 %v2190
        %v2487 = vunpack.c.h.b16 %v2190
        %v2488 = vunpack.c.l.b16 %v2191
        %v2489 = vunpack.c.h.b16 %v2191
        %v2490 = vunpack.c.l.b16 %v2192
        %v2491 = vunpack.c.h.b16 %v2192
        %v2492 = vunpack.c.l.b16 %v2193
        %v2493 = vunpack.c.h.b16 %v2193
        %v2494 = vunpack.c.l.b16 %v2194
        %v2495 = vunpack.c.h.b16 %v2194
        %v2496 = vunpack.c.l.b16 %v2195
        %v2497 = vunpack.c.h.b16 %v2195
        %v2498 = vunpack.c.l.b16 %v2196
        %v2499 = vunpack.c.h.b16 %v2196
        %v2500 = vunpack.c.l.b16 %v2197
        %v2501 = vunpack.c.h.b16 %v2197
        %v2502 = vunpack.c.l.b16 %v2198
        %v2503 = vunpack.c.h.b16 %v2198
        %v2504 = vunpack.c.l.b16 %v2199
        %v2505 = vunpack.c.h.b16 %v2199
        %v2506 = vunpack.c.l.b16 %v2200
        %v2507 = vunpack.c.h.b16 %v2200
        %v2508 = vunpack.c.l.b16 %v2201
        %v2509 = vunpack.c.h.b16 %v2201
        %v2510 = vunpack.c.l.b16 %v2202
        %v2511 = vunpack.c.h.b16 %v2202
        %v2512 = vunpack.c.l.b16 %v2203
        %v2513 = vunpack.c.h.b16 %v2203
        %v2514 = vunpack.c.l.b16 %v2204
        %v2515 = vunpack.c.h.b16 %v2204
        %v2516 = vunpack.c.l.b16 %v2205
        %v2517 = vunpack.c.h.b16 %v2205
        %v2518 = vunpack.c.l.b16 %v2206
        %v2519 = vunpack.c.h.b16 %v2206
        %v2520 = vunpack.c.l.b16 %v2207
        %v2521 = vunpack.c.h.b16 %v2207
        %v2522 = vunpack.c.l.b16 %v2208
        %v2523 = vunpack.c.h.b16 %v2208
        %v2524 = vunpack.c.l.b16 %v2209
        %v2525 = vunpack.c.h.b16 %v2209
        %v2526 = vunpack.c.l.b16 %v2210
        %v2527 = vunpack.c.h.b16 %v2210
        %v2528 = vunpack.c.l.b16 %v2211
        %v2529 = vunpack.c.h.b16 %v2211
        %v2530 = vunpack.c.l.b16 %v2212
        %v2531 = vunpack.c.h.b16 %v2212
        %v2532 = vunpack.c.l.b16 %v2213
        %v2533 = vunpack.c.h.b16 %v2213
        %v2534 = vunpack.c.l.b16 %v2214
        %v2535 = vunpack.c.h.b16 %v2214
        %v2536 = vunpack.c.l.b16 %v2215
        %v2537 = vunpack.c.h.b16 %v2215
        %v2538 = vunpack.c.l.b16 %v2216
        %v2539 = vunpack.c.h.b16 %v2216
        %v2540 = vunpack.c.l.b16 %v2217
        %v2541 = vunpack.c.h.b16 %v2217
        %v2542 = vunpack.c.l.b16 %v2218
        %v2543 = vunpack.c.h.b16 %v2218
        %v2544 = vunpack.c.l.b16 %v2219
        %v2545 = vunpack.c.h.b16 %v2219
        %v2546 = vunpack.c.l.b16 %v2220
        %v2547 = vunpack.c.h.b16 %v2220
        %v2548 = vunpack.c.l.b16 %v2221
        %v2549 = vunpack.c.h.b16 %v2221
        %v2550 = vunpack.c.l.b16 %v2222
        %v2551 = vunpack.c.h.b16 %v2222
        %v2552 = vunpack.c.l.b16 %v2223
        %v2553 = vunpack.c.h.b16 %v2223
        %v2554 = vunpack.c.l.b16 %v2224
        %v2555 = vunpack.c.h.b16 %v2224
        %v2556 = vunpack.c.l.b16 %v2225
        %v2557 = vunpack.c.h.b16 %v2225
        %v2558 = vunpack.c.l.b16 %v2226
        %v2559 = vunpack.c.h.b16 %v2226
        %v2560 = vunpack.c.l.b16 %v2227
        %v2561 = vunpack.c.h.b16 %v2227
        %v2562 = vunpack.c.l.b16 %v2228
        %v2563 = vunpack.c.h.b16 %v2228
        %v2564 = vunpack.c.l.b16 %v2229
        %v2565 = vunpack.c.h.b16 %v2229
        %v2566 = vunpack.c.l.b16 %v2230
        %v2567 = vunpack.c.h.b16 %v2230
        %v2568 = vunpack.c.l.b16 %v2231
        %v2569 = vunpack.c.h.b16 %v2231
        %v2570 = vunpack.c.l.b16 %v2232
        %v2571 = vunpack.c.h.b16 %v2232
        %v2572 = vunpack.c.l.b16 %v2233
        %v2573 = vunpack.c.h.b16 %v2233
        %v2574 = vunpack.c.l.b16 %v2234
        %v2575 = vunpack.c.h.b16 %v2234
        %v2576 = vunpack.c.l.b16 %v2235
        %v2577 = vunpack.c.h.b16 %v2235
        %v2578 = vunpack.c.l.b16 %v2236
        %v2579 = vunpack.c.h.b16 %v2236
        %v2580 = vunpack.c.l.b16 %v2237
        %v2581 = vunpack.c.h.b16 %v2237
        %v2582 = vunpack.c.l.b16 %v2238
        %v2583 = vunpack.c.h.b16 %v2238
        %v2584 = vunpack.c.l.b16 %v2239
        %v2585 = vunpack.c.h.b16 %v2239
        %v2586 = vunpack.c.l.b16 %v2240
        %v2587 = vunpack.c.h.b16 %v2240
        %v2588 = vunpack.c.l.b16 %v2241
        %v2589 = vunpack.c.h.b16 %v2241
        %v2590 = vunpack.c.l.b16 %v2242
        %v2591 = vunpack.c.h.b16 %v2242
        %v2592 = vunpack.c.l.b16 %v2243
        %v2593 = vunpack.c.h.b16 %v2243
        %v2594 = vunpack.c.l.b16 %v2244
        %v2595 = vunpack.c.h.b16 %v2244
        %v2596 = vunpack.c.l.b16 %v2245
        %v2597 = vunpack.c.h.b16 %v2245
        %v2598 = vunpack.c.l.b16 %v2246
        %v2599 = vunpack.c.h.b16 %v2246
        %v2600 = vunpack.c.l.b16 %v2247
        %v2601 = vunpack.c.h.b16 %v2247
        %v2602 = vunpack.c.l.b16 %v2248
        %v2603 = vunpack.c.h.b16 %v2248
        %v2604 = vunpack.c.l.b16 %v2249
        %v2605 = vunpack.c.h.b16 %v2249
        %v2606 = vunpack.c.l.b16 %v2250
        %v2607 = vunpack.c.h.b16 %v2250
        %v2608 = vunpack.c.l.b16 %v2251
        %v2609 = vunpack.c.h.b16 %v2251
        %v2610 = vunpack.c.l.b16 %v2252
        %v2611 = vunpack.c.h.b16 %v2252
        %v2612 = vunpack.c.l.b16 %v2253
        %v2613 = vunpack.c.h.b16 %v2253
        %v2614 = vunpack.c.l.b16 %v2254
        %v2615 = vunpack.c.h.b16 %v2254
        %v2616 = vunpack.c.l.b16 %v2255
        %v2617 = vunpack.c.h.b16 %v2255
        %v2618 = vunpack.c.l.b16 %v2256
        %v2619 = vunpack.c.h.b16 %v2256
        %v2620 = vunpack.c.l.b16 %v2257
        %v2621 = vunpack.c.h.b16 %v2257
        %v2622 = vunpack.c.l.b16 %v2258
        %v2623 = vunpack.c.h.b16 %v2258
        %v2624 = vunpack.c.l.b16 %v2259
        %v2625 = vunpack.c.h.b16 %v2259
        %v2626 = vunpack.c.l.b16 %v2260
        %v2627 = vunpack.c.h.b16 %v2260
        %v2628 = vunpack.c.l.b16 %v2261
        %v2629 = vunpack.c.h.b16 %v2261
        %v2630 = vunpack.c.l.b16 %v2262
        %v2631 = vunpack.c.h.b16 %v2262
        %v2632 = vunpack.c.l.b16 %v2263
        %v2633 = vunpack.c.h.b16 %v2263
        %v2634 = vunpack.c.l.b16 %v2264
        %v2635 = vunpack.c.h.b16 %v2264
        %v2636 = vunpack.c.l.b16 %v2265
        %v2637 = vunpack.c.h.b16 %v2265
        %v2638 = vunpack.c.l.b16 %v2266
        %v2639 = vunpack.c.h.b16 %v2266
        %v2640 = vunpack.c.l.b16 %v2267
        %v2641 = vunpack.c.h.b16 %v2267
        %v2642 = vunpack.c.l.b16 %v2268
        %v2643 = vunpack.c.h.b16 %v2268
        %v2644 = vunpack.c.l.b16 %v2269
        %v2645 = vunpack.c.h.b16 %v2269
        %v2646 = vunpack.c.l.b16 %v2270
        %v2647 = vunpack.c.h.b16 %v2270
        %v2648 = vunpack.c.l.b16 %v2271
        %v2649 = vunpack.c.h.b16 %v2271
        %v2650 = vunpack.c.l.b16 %v2272
        %v2651 = vunpack.c.h.b16 %v2272
        %v2652 = vunpack.c.l.b16 %v2273
        %v2653 = vunpack.c.h.b16 %v2273
        %v2654 = vunpack.c.l.b16 %v2274
        %v2655 = vunpack.c.h.b16 %v2274
        %v2656 = vunpack.c.l.b16 %v2275
        %v2657 = vunpack.c.h.b16 %v2275
        %v2658 = vunpack.c.l.b16 %v2276
        %v2659 = vunpack.c.h.b16 %v2276
        %v2660 = vunpack.c.l.b16 %v2277
        %v2661 = vunpack.c.h.b16 %v2277
        %v2662 = vunpack.c.l.b16 %v2278
        %v2663 = vunpack.c.h.b16 %v2278
        %v2664 = vunpack.c.l.b16 %v2279
        %v2665 = vunpack.c.h.b16 %v2279
        %v2666 = vunpack.c.l.b16 %v2280
        %v2667 = vunpack.c.h.b16 %v2280
        %v2668 = vunpack.c.l.b16 %v2281
        %v2669 = vunpack.c.h.b16 %v2281
        %v2670 = vunpack.c.l.b16 %v2282
        %v2671 = vunpack.c.h.b16 %v2282
        %v2672 = vunpack.c.l.b16 %v2283
        %v2673 = vunpack.c.h.b16 %v2283
        %v2674 = vunpack.c.l.b16 %v2284
        %v2675 = vunpack.c.h.b16 %v2284
        %v2676 = vunpack.c.l.b16 %v2285
        %v2677 = vunpack.c.h.b16 %v2285
        %v2678 = vunpack.c.l.b16 %v2286
        %v2679 = vunpack.c.h.b16 %v2286
        %v2680 = vunpack.c.l.b16 %v2287
        %v2681 = vunpack.c.h.b16 %v2287
        %v2682 = vunpack.c.l.b16 %v2288
        %v2683 = vunpack.c.h.b16 %v2288
        %v2684 = vunpack.c.l.b16 %v2289
        %v2685 = vunpack.c.h.b16 %v2289
        %v2686 = vunpack.c.l.b16 %v2290
        %v2687 = vunpack.c.h.b16 %v2290
        %v2688 = vunpack.c.l.b16 %v2291
        %v2689 = vunpack.c.h.b16 %v2291
        %v2690 = vunpack.c.l.b16 %v2292
        %v2691 = vunpack.c.h.b16 %v2292
        %v2692 = vunpack.c.l.b16 %v2293
        %v2693 = vunpack.c.h.b16 %v2293
        %v2694 = vunpack.c.l.b16 %v2294
        %v2695 = vunpack.c.h.b16 %v2294
        %v2696 = vunpack.c.l.b16 %v2295
        %v2697 = vunpack.c.h.b16 %v2295
        %v2698 = vunpack.c.l.b16 %v2296
        %v2699 = vunpack.c.h.b16 %v2296
        %v2700 = vunpack.c.l.b16 %v2297
        %v2701 = vunpack.c.h.b16 %v2297
        %v2702 = vunpack.c.l.b16 %v2298
        %v2703 = vunpack.c.h.b16 %v2298
        %v2704 = vunpack.c.l.b16 %v2299
        %v2705 = vunpack.c.h.b16 %v2299
        %v2706 = vunpack.c.l.b16 %v2300
        %v2707 = vunpack.c.h.b16 %v2300
        %v2708 = vunpack.c.l.b16 %v2301
        %v2709 = vunpack.c.h.b16 %v2301
        %v2710 = vunpack.c.l.b16 %v2302
        %v2711 = vunpack.c.h.b16 %v2302
        %v2712 = vunpack.c.l.b16 %v2303
        %v2713 = vunpack.c.h.b16 %v2303
        %v2714 = vunpack.c.l.b16 %v2304
        %v2715 = vunpack.c.h.b16 %v2304
        %v2716 = vunpack.c.l.b16 %v2305
        %v2717 = vunpack.c.h.b16 %v2305
        %v2718 = vunpack.c.l.b16 %v2306
        %v2719 = vunpack.c.h.b16 %v2306
        %v2720 = vunpack.c.l.b16 %v2307
        %v2721 = vunpack.c.h.b16 %v2307
        %v2722 = vunpack.c.l.b16 %v2308
        %v2723 = vunpack.c.h.b16 %v2308
        %v2724 = vunpack.c.l.b16 %v2309
        %v2725 = vunpack.c.h.b16 %v2309
        %v2726 = vunpack.c.l.b16 %v2310
        %v2727 = vunpack.c.h.b16 %v2310
        %v2728 = vunpack.c.l.b16 %v2311
        %v2729 = vunpack.c.h.b16 %v2311
        %v2730 = vunpack.c.l.b16 %v2312
        %v2731 = vunpack.c.h.b16 %v2312
        %v2732 = vunpack.c.l.b16 %v2313
        %v2733 = vunpack.c.h.b16 %v2313
        %v2734 = vunpack.c.l.b16 %v2314
        %v2735 = vunpack.c.h.b16 %v2314
        %v2736 = vunpack.c.l.b16 %v2315
        %v2737 = vunpack.c.h.b16 %v2315
        %v2738 = vunpack.c.l.b16 %v2316
        %v2739 = vunpack.c.h.b16 %v2316
        %v2740 = vunpack.c.l.b16 %v2317
        %v2741 = vunpack.c.h.b16 %v2317
        %v2742 = vunpack.c.l.b16 %v2318
        %v2743 = vunpack.c.h.b16 %v2318
        %v2744 = vunpack.c.l.b16 %v2319
        %v2745 = vunpack.c.h.b16 %v2319
        %v2746 = vunpack.c.l.b16 %v2320
        %v2747 = vunpack.c.h.b16 %v2320
        %v2748 = vunpack.c.l.b16 %v2321
        %v2749 = vunpack.c.h.b16 %v2321
        %v2750 = vunpack.c.l.b16 %v2322
        %v2751 = vunpack.c.h.b16 %v2322
        %v2752 = vunpack.c.l.b16 %v2323
        %v2753 = vunpack.c.h.b16 %v2323
        %v2754 = vunpack.c.l.b16 %v2324
        %v2755 = vunpack.c.h.b16 %v2324
        %v2756 = vunpack.c.l.b16 %v2325
        %v2757 = vunpack.c.h.b16 %v2325
        %v2758 = vpack.c.b16 %v2476, %v2470
        %v2759 = vpack.c.b16 %v2477, %v2471
        %v2760 = vpack.c.b16 %v2478, %v2472
        %v2761 = vpack.c.b16 %v2479, %v2473
        %v2762 = vpack.c.b16 %v2480, %v2474
        %v2763 = vpack.c.b16 %v2481, %v2475
        %v2764 = vpack.c.b16 %v2488, %v2482
        %v2765 = vpack.c.b16 %v2489, %v2483
        %v2766 = vpack.c.b16 %v2490, %v2484
        %v2767 = vpack.c.b16 %v2491, %v2485
        %v2768 = vpack.c.b16 %v2492, %v2486
        %v2769 = vpack.c.b16 %v2493, %v2487
        %v2770 = vpack.c.b16 %v2500, %v2494
        %v2771 = vpack.c.b16 %v2501, %v2495
        %v2772 = vpack.c.b16 %v2502, %v2496
        %v2773 = vpack.c.b16 %v2503, %v2497
        %v2774 = vpack.c.b16 %v2504, %v2498
        %v2775 = vpack.c.b16 %v2505, %v2499
        %v2776 = vpack.c.b16 %v2512, %v2506
        %v2777 = vpack.c.b16 %v2513, %v2507
        %v2778 = vpack.c.b16 %v2514, %v2508
        %v2779 = vpack.c.b16 %v2515, %v2509
        %v2780 = vpack.c.b16 %v2516, %v2510
        %v2781 = vpack.c.b16 %v2517, %v2511
        %v2782 = vpack.c.b16 %v2524, %v2518
        %v2783 = vpack.c.b16 %v2525, %v2519
        %v2784 = vpack.c.b16 %v2526, %v2520
        %v2785 = vpack.c.b16 %v2527, %v2521
        %v2786 = vpack.c.b16 %v2528, %v2522
        %v2787 = vpack.c.b16 %v2529, %v2523
        %v2788 = vpack.c.b16 %v2536, %v2530
        %v2789 = vpack.c.b16 %v2537, %v2531
        %v2790 = vpack.c.b16 %v2538, %v2532
        %v2791 = vpack.c.b16 %v2539, %v2533
        %v2792 = vpack.c.b16 %v2540, %v2534
        %v2793 = vpack.c.b16 %v2541, %v2535
        %v2794 = vpack.c.b16 %v2548, %v2542
        %v2795 = vpack.c.b16 %v2549, %v2543
        %v2796 = vpack.c.b16 %v2550, %v2544
        %v2797 = vpack.c.b16 %v2551, %v2545
        %v2798 = vpack.c.b16 %v2552, %v2546
        %v2799 = vpack.c.b16 %v2553, %v2547
        %v2800 = vpack.c.b16 %v2560, %v2554
        %v2801 = vpack.c.b16 %v2561, %v2555
        %v2802 = vpack.c.b16 %v2562, %v2556
        %v2803 = vpack.c.b16 %v2563, %v2557
        %v2804 = vpack.c.b16 %v2564, %v2558
        %v2805 = vpack.c.b16 %v2565, %v2559
        %v2806 = vpack.c.b16 %v2572, %v2566
        %v2807 = vpack.c.b16 %v2573, %v2567
        %v2808 = vpack.c.b16 %v2574, %v2568
        %v2809 = vpack.c.b16 %v2575, %v2569
        %v2810 = vpack.c.b16 %v2576, %v2570
        %v2811 = vpack.c.b16 %v2577, %v2571
        %v2812 = vpack.c.b16 %v2584, %v2578
        %v2813 = vpack.c.b16 %v2585, %v2579
        %v2814 = vpack.c.b16 %v2586, %v2580
        %v2815 = vpack.c.b16 %v2587, %v2581
        %v2816 = vpack.c.b16 %v2588, %v2582
        %v2817 = vpack.c.b16 %v2589, %v2583
        %v2818 = vpack.c.b16 %v2596, %v2590
        %v2819 = vpack.c.b16 %v2597, %v2591
        %v2820 = vpack.c.b16 %v2598, %v2592
        %v2821 = vpack.c.b16 %v2599, %v2593
        %v2822 = vpack.c.b16 %v2600, %v2594
        %v2823 = vpack.c.b16 %v2601, %v2595
        %v2824 = vpack.c.b16 %v2608, %v2602
        %v2825 = vpack.c.b16 %v2609, %v2603
        %v2826 = vpack.c.b16 %v2610, %v2604
        %v2827 = vpack.c.b16 %v2611, %v2605
        %v2828 = vpack.c.b16 %v2612, %v2606
        %v2829 = vpack.c.b16 %v2613, %v2607
        %v2830 = vpack.c.b16 %v2620, %v2614
        %v2831 = vpack.c.b16 %v2621, %v2615
        %v2832 = vpack.c.b16 %v2622, %v2616
        %v2833 = vpack.c.b16 %v2623, %v2617
        %v2834 = vpack.c.b16 %v2624, %v2618
        %v2835 = vpack.c.b16 %v2625, %v2619
        %v2836 = vpack.c.b16 %v2632, %v2626
        %v2837 = vpack.c.b16 %v2633, %v2627
        %v2838 = vpack.c.b16 %v2634, %v2628
        %v2839 = vpack.c.b16 %v2635, %v2629
        %v2840 = vpack.c.b16 %v2636, %v2630
        %v2841 = vpack.c.b16 %v2637, %v2631
        %v2842 = vpack.c.b16 %v2644, %v2638
        %v2843 = vpack.c.b16 %v2645, %v2639
        %v2844 = vpack.c.b16 %v2646, %v2640
        %v2845 = vpack.c.b16 %v2647, %v2641
        %v2846 = vpack.c.b16 %v2648, %v2642
        %v2847 = vpack.c.b16 %v2649, %v2643
        %v2848 = vpack.c.b16 %v2656, %v2650
        %v2849 = vpack.c.b16 %v2657, %v2651
        %v2850 = vpack.c.b16 %v2658, %v2652
        %v2851 = vpack.c.b16 %v2659, %v2653
        %v2852 = vpack.c.b16 %v2660, %v2654
        %v2853 = vpack.c.b16 %v2661, %v2655
        %v2854 = vpack.c.b16 %v2668, %v2662
        %v2855 = vpack.c.b16 %v2669, %v2663
        %v2856 = vpack.c.b16 %v2670, %v2664
        %v2857 = vpack.c.b16 %v2671, %v2665
        %v2858 = vpack.c.b16 %v2672, %v2666
        %v2859 = vpack.c.b16 %v2673, %v2667
        %v2860 = vpack.c.b16 %v2680, %v2674
        %v2861 = vpack.c.b16 %v2681, %v2675
        %v2862 = vpack.c.b16 %v2682, %v2676
        %v2863 = vpack.c.b16 %v2683, %v2677
        %v2864 = vpack.c.b16 %v2684, %v2678
        %v2865 = vpack.c.b16 %v2685, %v2679
        %v2866 = vpack.c.b16 %v2692, %v2686
        %v2867 = vpack.c.b16 %v2693, %v2687
        %v2868 = vpack.c.b16 %v2694, %v2688
        %v2869 = vpack.c.b16 %v2695, %v2689
        %v2870 = vpack.c.b16 %v2696, %v2690
        %v2871 = vpack.c.b16 %v2697, %v2691
        %v2872 = vpack.c.b16 %v2704, %v2698
        %v2873 = vpack.c.b16 %v2705, %v2699
        %v2874 = vpack.c.b16 %v2706, %v2700
        %v2875 = vpack.c.b16 %v2707, %v2701
        %v2876 = vpack.c.b16 %v2708, %v2702
        %v2877 = vpack.c.b16 %v2709, %v2703
        %v2878 = vpack.c.b16 %v2716, %v2710
        %v2879 = vpack.c.b16 %v2717, %v2711
        %v2880 = vpack.c.b16 %v2718, %v2712
        %v2881 = vpack.c.b16 %v2719, %v2713
        %v2882 = vpack.c.b16 %v2720, %v2714
        %v2883 = vpack.c.b16 %v2721, %v2715
        %v2884 = vpack.c.b16 %v2728, %v2722
        %v2885 = vpack.c.b16 %v2729, %v2723
        %v2886 = vpack.c.b16 %v2730, %v2724
        %v2887 = vpack.c.b16 %v2731, %v2725
        %v2888 = vpack.c.b16 %v2732, %v2726
        %v2889 = vpack.c.b16 %v2733, %v2727
        %v2890 = vpack.c.b16 %v2740, %v2734
        %v2891 = vpack.c.b16 %v2741, %v2735
        %v2892 = vpack.c.b16 %v2742, %v2736
        %v2893 = vpack.c.b16 %v2743, %v2737
        %v2894 = vpack.c.b16 %v2744, %v2738
        %v2895 = vpack.c.b16 %v2745, %v2739
        %v2896 = vpack.c.b16 %v2752, %v2746
        %v2897 = vpack.c.b16 %v2753, %v2747
        %v2898 = vpack.c.b16 %v2754, %v2748
        %v2899 = vpack.c.b16 %v2755, %v2749
        %v2900 = vpack.c.b16 %v2756, %v2750
        %v2901 = vpack.c.b16 %v2757, %v2751
        %3046 = vmatprep.subr.bf16.mxu0 %v2801
        %3047 = vmatpush1.bf16.msra.mxu0 %v2800
        %3048 = vmatprep.subr.bf16.mxu0 %v2795
        %3049 = vmatpush1.bf16.msra.mxu0 %v2794
        %3050 = vmatprep.subr.bf16.mxu0 %v2789
        %3051 = vmatpush1.bf16.msra.mxu0 %v2788
        %3052 = vmatprep.subr.bf16.mxu0 %v2783
        %3053 = vmatpush1.bf16.msra.mxu0 %v2782
        %3054 = vmatprep.subr.bf16.mxu0 %v2777
        %3055 = vmatpush1.bf16.msra.mxu0 %v2776
        %3056 = vmatprep.subr.bf16.mxu0 %v2771
        %3057 = vmatpush1.bf16.msra.mxu0 %v2770
        %3058 = vmatprep.subr.bf16.mxu0 %v2765
        %3059 = vmatpush1.bf16.msra.mxu0 %v2764
        %3060 = vmatprep.subr.bf16.mxu0 %v2759
        %3061 = vmatpush1.bf16.msra.mxu0 %v2758
        %3062 = vmatprep.subr.bf16.mxu0 %v2849
        %3063 = vmatpush2.bf16.msra.mxu0 %v2848
        %3064 = vmatprep.subr.bf16.mxu0 %v2843
        %3065 = vmatpush2.bf16.msra.mxu0 %v2842
        %3066 = vmatprep.subr.bf16.mxu0 %v2837
        %3067 = vmatpush2.bf16.msra.mxu0 %v2836
        %3068 = vmatprep.subr.bf16.mxu0 %v2831
        %3069 = vmatpush2.bf16.msra.mxu0 %v2830
        %3070 = vmatprep.subr.bf16.mxu0 %v2825
        %3071 = vmatpush2.bf16.msra.mxu0 %v2824
        %3072 = vmatprep.subr.bf16.mxu0 %v2819
        %3073 = vmatpush2.bf16.msra.mxu0 %v2818
        %3074 = vmatprep.subr.bf16.mxu0 %v2813
        %3075 = vmatpush2.bf16.msra.mxu0 %v2812
        %3076 = vmatprep.subr.bf16.mxu0 %v2807
        %3077 = vmatpush2.bf16.msra.mxu0 %v2806
        %3078 = vmatprep.mubr.bf16.mxu0 %v2180
        %3079 = vmatmul.mubr.bf16.gmra.mxu0 %v2179
        %v3080 = vpop.f32.mrf.mxu0
        %v3081 = vadd.f32 0.0, %v3080
        %v3082 = vpop.f32.mrf.mxu0
        %v3083 = vadd.f32 0.0, %v3082
        %v3084 = vpop.f32.mrf.mxu0
        %v3085 = vpop.f32.mrf.mxu0
        %3086 = vdwg.mxu0
        %3087 = vmatprep.subr.bf16.mxu0 %v2897
        %3088 = vmatpush1.bf16.msra.mxu0 %v2896
        %3089 = vmatprep.subr.bf16.mxu0 %v2891
        %3090 = vmatpush1.bf16.msra.mxu0 %v2890
        %3091 = vmatprep.subr.bf16.mxu0 %v2885
        %3092 = vmatpush1.bf16.msra.mxu0 %v2884
        %3093 = vmatprep.subr.bf16.mxu0 %v2879
        %3094 = vmatpush1.bf16.msra.mxu0 %v2878
        %3095 = vmatprep.subr.bf16.mxu0 %v2873
        %3096 = vmatpush1.bf16.msra.mxu0 %v2872
        %3097 = vmatprep.subr.bf16.mxu0 %v2867
        %3098 = vmatpush1.bf16.msra.mxu0 %v2866
        %3099 = vmatprep.subr.bf16.mxu0 %v2861
        %3100 = vmatpush1.bf16.msra.mxu0 %v2860
        %3101 = vmatprep.subr.bf16.mxu0 %v2855
        %3102 = vmatpush1.bf16.msra.mxu0 %v2854
        %3103 = vmatprep.subr.bf16.mxu0 0
        %3104 = vmatpush2.bf16.msra.mxu0 0
        %3105 = vmatprep.subr.bf16.mxu0 0
        %3106 = vmatpush2.bf16.msra.mxu0 0
        %3107 = vmatprep.subr.bf16.mxu0 0
        %3108 = vmatpush2.bf16.msra.mxu0 0
        %3109 = vmatprep.subr.bf16.mxu0 0
        %3110 = vmatpush2.bf16.msra.mxu0 0
        %3111 = vmatprep.subr.bf16.mxu0 0
        %3112 = vmatpush2.bf16.msra.mxu0 0
        %3113 = vmatprep.subr.bf16.mxu0 0
        %3114 = vmatpush2.bf16.msra.mxu0 0
        %3115 = vmatprep.subr.bf16.mxu0 0
        %3116 = vmatpush2.bf16.msra.mxu0 0
        %3117 = vmatprep.subr.bf16.mxu0 0
        %3118 = vmatpush2.bf16.msra.mxu0 0
        %3119 = vmatprep.mubr.bf16.mxu0 0
        %3120 = vmatmul.mubr.bf16.gmra.mxu0 %v2181
        %v3121 = vpop.f32.mrf.mxu0
        %v3122 = vadd.f32 %v3081, %v3121
        %v3123 = vpop.f32.mrf.mxu0
        %v3124 = vadd.f32 %v3083, %v3123
        %v3125 = vpop.f32.mrf.mxu0
        %v3126 = vpop.f32.mrf.mxu0
        %3127 = vdwg.mxu0
        %3128 = vmatprep.subr.bf16.mxu0 %v2803
        %3129 = vmatpush1.bf16.msra.mxu0 %v2802
        %3130 = vmatprep.subr.bf16.mxu0 %v2797
        %3131 = vmatpush1.bf16.msra.mxu0 %v2796
        %3132 = vmatprep.subr.bf16.mxu0 %v2791
        %3133 = vmatpush1.bf16.msra.mxu0 %v2790
        %3134 = vmatprep.subr.bf16.mxu0 %v2785
        %3135 = vmatpush1.bf16.msra.mxu0 %v2784
        %3136 = vmatprep.subr.bf16.mxu0 %v2779
        %3137 = vmatpush1.bf16.msra.mxu0 %v2778
        %3138 = vmatprep.subr.bf16.mxu0 %v2773
        %3139 = vmatpush1.bf16.msra.mxu0 %v2772
        %3140 = vmatprep.subr.bf16.mxu0 %v2767
        %3141 = vmatpush1.bf16.msra.mxu0 %v2766
        %3142 = vmatprep.subr.bf16.mxu0 %v2761
        %3143 = vmatpush1.bf16.msra.mxu0 %v2760
        %3144 = vmatprep.subr.bf16.mxu0 %v2851
        %3145 = vmatpush2.bf16.msra.mxu0 %v2850
        %3146 = vmatprep.subr.bf16.mxu0 %v2845
        %3147 = vmatpush2.bf16.msra.mxu0 %v2844
        %3148 = vmatprep.subr.bf16.mxu0 %v2839
        %3149 = vmatpush2.bf16.msra.mxu0 %v2838
        %3150 = vmatprep.subr.bf16.mxu0 %v2833
        %3151 = vmatpush2.bf16.msra.mxu0 %v2832
        %3152 = vmatprep.subr.bf16.mxu0 %v2827
        %3153 = vmatpush2.bf16.msra.mxu0 %v2826
        %3154 = vmatprep.subr.bf16.mxu0 %v2821
        %3155 = vmatpush2.bf16.msra.mxu0 %v2820
        %3156 = vmatprep.subr.bf16.mxu0 %v2815
        %3157 = vmatpush2.bf16.msra.mxu0 %v2814
        %3158 = vmatprep.subr.bf16.mxu0 %v2809
        %3159 = vmatpush2.bf16.msra.mxu0 %v2808
        %3160 = vmatprep.mubr.bf16.mxu0 %v2180
        %3161 = vmatmul.mubr.bf16.gmra.mxu0 %v2179
        %v3162 = vpop.f32.mrf.mxu0
        %v3163 = vadd.f32 0.0, %v3162
        %v3164 = vpop.f32.mrf.mxu0
        %v3165 = vadd.f32 0.0, %v3164
        %v3166 = vpop.f32.mrf.mxu0
        %v3167 = vpop.f32.mrf.mxu0
        %3168 = vdwg.mxu0
        %3169 = vmatprep.subr.bf16.mxu0 %v2899
        %3170 = vmatpush1.bf16.msra.mxu0 %v2898
        %3171 = vmatprep.subr.bf16.mxu0 %v2893
        %3172 = vmatpush1.bf16.msra.mxu0 %v2892
        %3173 = vmatprep.subr.bf16.mxu0 %v2887
        %3174 = vmatpush1.bf16.msra.mxu0 %v2886
        %3175 = vmatprep.subr.bf16.mxu0 %v2881
        %3176 = vmatpush1.bf16.msra.mxu0 %v2880
        %3177 = vmatprep.subr.bf16.mxu0 %v2875
        %3178 = vmatpush1.bf16.msra.mxu0 %v2874
        %3179 = vmatprep.subr.bf16.mxu0 %v2869
        %3180 = vmatpush1.bf16.msra.mxu0 %v2868
        %3181 = vmatprep.subr.bf16.mxu0 %v2863
        %3182 = vmatpush1.bf16.msra.mxu0 %v2862
        %3183 = vmatprep.subr.bf16.mxu0 %v2857
        %3184 = vmatpush1.bf16.msra.mxu0 %v2856
        %3185 = vmatprep.subr.bf16.mxu0 0
        %3186 = vmatpush2.bf16.msra.mxu0 0
        %3187 = vmatprep.subr.bf16.mxu0 0
        %3188 = vmatpush2.bf16.msra.mxu0 0
        %3189 = vmatprep.subr.bf16.mxu0 0
        %3190 = vmatpush2.bf16.msra.mxu0 0
        %3191 = vmatprep.subr.bf16.mxu0 0
        %3192 = vmatpush2.bf16.msra.mxu0 0
        %3193 = vmatprep.subr.bf16.mxu0 0
        %3194 = vmatpush2.bf16.msra.mxu0 0
        %3195 = vmatprep.subr.bf16.mxu0 0
        %3196 = vmatpush2.bf16.msra.mxu0 0
        %3197 = vmatprep.subr.bf16.mxu0 0
        %3198 = vmatpush2.bf16.msra.mxu0 0
        %3199 = vmatprep.subr.bf16.mxu0 0
        %3200 = vmatpush2.bf16.msra.mxu0 0
        %3201 = vmatprep.mubr.bf16.mxu0 0
        %3202 = vmatmul.mubr.bf16.gmra.mxu0 %v2181
        %v3203 = vpop.f32.mrf.mxu0
        %v3204 = vadd.f32 %v3163, %v3203
        %v3205 = vpop.f32.mrf.mxu0
        %v3206 = vadd.f32 %v3165, %v3205
        %v3207 = vpop.f32.mrf.mxu0
        %v3208 = vpop.f32.mrf.mxu0
        %3209 = vdwg.mxu0
        %3210 = vmatprep.subr.bf16.mxu0 %v2805
        %3211 = vmatpush1.bf16.msra.mxu0 %v2804
        %3212 = vmatprep.subr.bf16.mxu0 %v2799
        %3213 = vmatpush1.bf16.msra.mxu0 %v2798
        %3214 = vmatprep.subr.bf16.mxu0 %v2793
        %3215 = vmatpush1.bf16.msra.mxu0 %v2792
        %3216 = vmatprep.subr.bf16.mxu0 %v2787
        %3217 = vmatpush1.bf16.msra.mxu0 %v2786
        %3218 = vmatprep.subr.bf16.mxu0 %v2781
        %3219 = vmatpush1.bf16.msra.mxu0 %v2780
        %3220 = vmatprep.subr.bf16.mxu0 %v2775
        %3221 = vmatpush1.bf16.msra.mxu0 %v2774
        %3222 = vmatprep.subr.bf16.mxu0 %v2769
        %3223 = vmatpush1.bf16.msra.mxu0 %v2768
        %3224 = vmatprep.subr.bf16.mxu0 %v2763
        %3225 = vmatpush1.bf16.msra.mxu0 %v2762
        %3226 = vmatprep.subr.bf16.mxu0 %v2853
        %3227 = vmatpush2.bf16.msra.mxu0 %v2852
        %3228 = vmatprep.subr.bf16.mxu0 %v2847
        %3229 = vmatpush2.bf16.msra.mxu0 %v2846
        %3230 = vmatprep.subr.bf16.mxu0 %v2841
        %3231 = vmatpush2.bf16.msra.mxu0 %v2840
        %3232 = vmatprep.subr.bf16.mxu0 %v2835
        %3233 = vmatpush2.bf16.msra.mxu0 %v2834
        %3234 = vmatprep.subr.bf16.mxu0 %v2829
        %3235 = vmatpush2.bf16.msra.mxu0 %v2828
        %3236 = vmatprep.subr.bf16.mxu0 %v2823
        %3237 = vmatpush2.bf16.msra.mxu0 %v2822
        %3238 = vmatprep.subr.bf16.mxu0 %v2817
        %3239 = vmatpush2.bf16.msra.mxu0 %v2816
        %3240 = vmatprep.subr.bf16.mxu0 %v2811
        %3241 = vmatpush2.bf16.msra.mxu0 %v2810
        %3242 = vmatprep.mubr.bf16.mxu0 %v2180
        %3243 = vmatmul.mubr.bf16.gmra.mxu0 %v2179
        %v3244 = vpop.f32.mrf.mxu0
        %v3245 = vadd.f32 0.0, %v3244
        %v3246 = vpop.f32.mrf.mxu0
        %v3247 = vadd.f32 0.0, %v3246
        %v3248 = vpop.f32.mrf.mxu0
        %v3249 = vpop.f32.mrf.mxu0
        %3250 = vdwg.mxu0
        %3251 = vmatprep.subr.bf16.mxu0 %v2901
        %3252 = vmatpush1.bf16.msra.mxu0 %v2900
        %3253 = vmatprep.subr.bf16.mxu0 %v2895
        %3254 = vmatpush1.bf16.msra.mxu0 %v2894
        %3255 = vmatprep.subr.bf16.mxu0 %v2889
        %3256 = vmatpush1.bf16.msra.mxu0 %v2888
        %3257 = vmatprep.subr.bf16.mxu0 %v2883
        %3258 = vmatpush1.bf16.msra.mxu0 %v2882
        %3259 = vmatprep.subr.bf16.mxu0 %v2877
        %3260 = vmatpush1.bf16.msra.mxu0 %v2876
        %3261 = vmatprep.subr.bf16.mxu0 %v2871
        %3262 = vmatpush1.bf16.msra.mxu0 %v2870
        %3263 = vmatprep.subr.bf16.mxu0 %v2865
        %3264 = vmatpush1.bf16.msra.mxu0 %v2864
        %3265 = vmatprep.subr.bf16.mxu0 %v2859
        %3266 = vmatpush1.bf16.msra.mxu0 %v2858
        %3267 = vmatprep.subr.bf16.mxu0 0
        %3268 = vmatpush2.bf16.msra.mxu0 0
        %3269 = vmatprep.subr.bf16.mxu0 0
        %3270 = vmatpush2.bf16.msra.mxu0 0
        %3271 = vmatprep.subr.bf16.mxu0 0
        %3272 = vmatpush2.bf16.msra.mxu0 0
        %3273 = vmatprep.subr.bf16.mxu0 0
        %3274 = vmatpush2.bf16.msra.mxu0 0
        %3275 = vmatprep.subr.bf16.mxu0 0
        %3276 = vmatpush2.bf16.msra.mxu0 0
        %3277 = vmatprep.subr.bf16.mxu0 0
        %3278 = vmatpush2.bf16.msra.mxu0 0
        %3279 = vmatprep.subr.bf16.mxu0 0
        %3280 = vmatpush2.bf16.msra.mxu0 0
        %3281 = vmatprep.subr.bf16.mxu0 0
        %3282 = vmatpush2.bf16.msra.mxu0 0
        %3283 = vmatprep.mubr.bf16.mxu0 0
        %3284 = vmatmul.mubr.bf16.gmra.mxu0 %v2181
        %v3285 = vpop.f32.mrf.mxu0
        %v3286 = vadd.f32 %v3245, %v3285
        %v3287 = vpop.f32.mrf.mxu0
        %v3288 = vadd.f32 %v3247, %v3287
        %v3289 = vpop.f32.mrf.mxu0
        %v3290 = vpop.f32.mrf.mxu0
        %3291 = vdwg.mxu0
        %v3292 = vld [vmem:[#allocation18] sm:$0x3f]
        %v3294 = vlaneseq
        %v3295 = vshrl.u32 %v3294, 7
        %v3296 = vsub.s32 0, %v3295
        %v3297 = vrot.slane %v3292, %v3296
        %v3298 = vlaneseq
        %v3299 = vshrl.u32 %v3298, 7
        %v3300 = vsub.s32 1, %v3299
        %v3301 = vrot.slane %v3292, %v3300
        %v3302 = vlaneseq
        %v3303 = vshrl.u32 %v3302, 7
        %v3304 = vsub.s32 2, %v3303
        %v3305 = vrot.slane %v3292, %v3304
        %v3306 = vlaneseq
        %v3307 = vshrl.u32 %v3306, 7
        %v3308 = vsub.s32 3, %v3307
        %v3309 = vrot.slane %v3292, %v3308
        %v3310 = vlaneseq
        %v3311 = vshrl.u32 %v3310, 7
        %v3312 = vsub.s32 4, %v3311
        %v3313 = vrot.slane %v3292, %v3312
        %v3314 = vlaneseq
        %v3315 = vshrl.u32 %v3314, 7
        %v3316 = vsub.s32 5, %v3315
        %v3317 = vrot.slane %v3292, %v3316
        %v3324 = vmul.f32 %v3122, %v3297
        %v3325 = vmul.f32 %v3124, %v3301
        %v3326 = vmul.f32 %v3204, %v3305
        %v3327 = vmul.f32 %v3206, %v3309
        %v3328 = vmul.f32 %v3286, %v3313
        %v3329 = vmul.f32 %v3288, %v3317
        %v3330 = vld [vmem:[#allocation27] sm:$0x3f]
        %v3332 = vlaneseq
        %v3333 = vshrl.u32 %v3332, 7
        %v3334 = vsub.s32 0, %v3333
        %v3335 = vrot.slane %v3330, %v3334
        %v3336 = vlaneseq
        %v3337 = vshrl.u32 %v3336, 7
        %v3338 = vsub.s32 1, %v3337
        %v3339 = vrot.slane %v3330, %v3338
        %v3340 = vlaneseq
        %v3341 = vshrl.u32 %v3340, 7
        %v3342 = vsub.s32 2, %v3341
        %v3343 = vrot.slane %v3330, %v3342
        %v3344 = vlaneseq
        %v3345 = vshrl.u32 %v3344, 7
        %v3346 = vsub.s32 3, %v3345
        %v3347 = vrot.slane %v3330, %v3346
        %v3348 = vlaneseq
        %v3349 = vshrl.u32 %v3348, 7
        %v3350 = vsub.s32 4, %v3349
        %v3351 = vrot.slane %v3330, %v3350
        %v3352 = vlaneseq
        %v3353 = vshrl.u32 %v3352, 7
        %v3354 = vsub.s32 5, %v3353
        %v3355 = vrot.slane %v3330, %v3354
        %v3362 = vadd.f32 %v3324, %v3335
        %v3363 = vadd.f32 %v3325, %v3339
        %v3364 = vadd.f32 %v3326, %v3343
        %v3365 = vadd.f32 %v3327, %v3347
        %v3366 = vadd.f32 %v3328, %v3351
        %v3367 = vadd.f32 %v3329, %v3355
        %v3368 = vmul.f32 %v3362, 0.5
        %v3369 = vmul.f32 %v3363, 0.5
        %v3370 = vmul.f32 %v3364, 0.5
        %v3371 = vmul.f32 %v3365, 0.5
        %v3372 = vmul.f32 %v3366, 0.5
        %v3373 = vmul.f32 %v3367, 0.5
        %v3374 = vmul.f32 %v3362, 0.70710677
        %v3375 = vmul.f32 %v3363, 0.70710677
        %v3376 = vmul.f32 %v3364, 0.70710677
        %v3377 = vmul.f32 %v3365, 0.70710677
        %v3378 = vmul.f32 %v3366, 0.70710677
        %v3379 = vmul.f32 %v3367, 0.70710677
        %v3380 = verf.f32.pop %v3374
        %v3381 = verf.f32.pop %v3375
        %v3382 = verf.f32.pop %v3376
        %v3383 = verf.f32.pop %v3377
        %v3384 = verf.f32.pop %v3378
        %v3385 = verf.f32.pop %v3379
        %v3386 = vadd.f32 %v3380, 1.0
        %v3387 = vadd.f32 %v3381, 1.0
        %v3388 = vadd.f32 %v3382, 1.0
        %v3389 = vadd.f32 %v3383, 1.0
        %v3390 = vadd.f32 %v3384, 1.0
        %v3391 = vadd.f32 %v3385, 1.0
        %v3392 = vmul.f32 %v3368, %v3386
        %v3393 = vmul.f32 %v3369, %v3387
        %v3394 = vmul.f32 %v3370, %v3388
        %v3395 = vmul.f32 %v3371, %v3389
        %v3396 = vmul.f32 %v3372, %v3390
        %v3397 = vmul.f32 %v3373, %v3391
        %v3398 = vpack.c.bf16 %v3392, %v3392
        %v3399 = vpack.c.bf16 %v3393, %v3393
        %v3400 = vpack.c.bf16 %v3394, %v3394
        %v3401 = vpack.c.bf16 %v3395, %v3395
        %v3402 = vpack.c.bf16 %v3396, %v3396
        %v3403 = vpack.c.bf16 %v3397, %v3397
        %v3404 = vld [vmem:[#allocation10] sm:$0xff]
        %v3405 = vld [vmem:[#allocation10 + $0x8] sm:$0xff]
        %v3406 = vld [vmem:[#allocation10 + $0x10] sm:$0xff]
        %v3407 = vld [vmem:[#allocation10 + $0x18] sm:$0xff]
        %v3408 = vld [vmem:[#allocation10 + $0x20] sm:$0xff]
        %v3409 = vld [vmem:[#allocation10 + $0x28] sm:$0xff]
        %v3410 = vld [vmem:[#allocation10 + $0x30] sm:$0xff]
        %v3411 = vld [vmem:[#allocation10 + $0x38] sm:$0xff]
        %v3412 = vld [vmem:[#allocation10 + $0x40] sm:$0xff]
        %v3413 = vld [vmem:[#allocation10 + $0x48] sm:$0xff]
        %v3414 = vld [vmem:[#allocation10 + $0x50] sm:$0xff]
        %v3415 = vld [vmem:[#allocation10 + $0x58] sm:$0xff]
        %v3416 = vld [vmem:[#allocation10 + $0x60] sm:$0xff]
        %v3417 = vld [vmem:[#allocation10 + $0x68] sm:$0xff]
        %v3418 = vld [vmem:[#allocation10 + $0x70] sm:$0xff]
        %v3419 = vld [vmem:[#allocation10 + $0x78] sm:$0xff]
        %v3420 = vld [vmem:[#allocation10 + $0x80] sm:$0xff]
        %v3421 = vld [vmem:[#allocation10 + $0x88] sm:$0xff]
        %v3422 = vld [vmem:[#allocation10 + $0x90] sm:$0xff]
        %v3423 = vld [vmem:[#allocation10 + $0x98] sm:$0xff]
        %v3424 = vld [vmem:[#allocation10 + $0xa0] sm:$0xff]
        %v3425 = vld [vmem:[#allocation10 + $0xa8] sm:$0xff]
        %v3426 = vld [vmem:[#allocation10 + $0xb0] sm:$0xff]
        %v3427 = vld [vmem:[#allocation10 + $0xb8] sm:$0xff]
        %v3428 = vld [vmem:[#allocation10 + $0xc0] sm:$0xff]
        %v3429 = vld [vmem:[#allocation10 + $0xc8] sm:$0xff]
        %v3430 = vld [vmem:[#allocation10 + $0xd0] sm:$0xff]
        %v3431 = vld [vmem:[#allocation10 + $0xd8] sm:$0xff]
        %v3432 = vld [vmem:[#allocation10 + $0xe0] sm:$0xff]
        %v3433 = vld [vmem:[#allocation10 + $0xe8] sm:$0xff]
        %v3434 = vld [vmem:[#allocation10 + $0xf0] sm:$0xff]
        %v3435 = vld [vmem:[#allocation10 + $0xf8] sm:$0xff]
        %v3436 = vld [vmem:[#allocation10 + $0x100] sm:$0xff]
        %v3437 = vld [vmem:[#allocation10 + $0x108] sm:$0xff]
        %v3438 = vld [vmem:[#allocation10 + $0x110] sm:$0xff]
        %v3439 = vld [vmem:[#allocation10 + $0x118] sm:$0xff]
        %v3440 = vld [vmem:[#allocation10 + $0x120] sm:$0xff]
        %v3441 = vld [vmem:[#allocation10 + $0x128] sm:$0xff]
        %v3442 = vld [vmem:[#allocation10 + $0x130] sm:$0xff]
        %v3443 = vld [vmem:[#allocation10 + $0x138] sm:$0xff]
        %v3444 = vld [vmem:[#allocation10 + $0x140] sm:$0xff]
        %v3445 = vld [vmem:[#allocation10 + $0x148] sm:$0xff]
        %v3446 = vld [vmem:[#allocation10 + $0x150] sm:$0xff]
        %v3447 = vld [vmem:[#allocation10 + $0x158] sm:$0xff]
        %v3448 = vld [vmem:[#allocation10 + $0x160] sm:$0xff]
        %v3449 = vld [vmem:[#allocation10 + $0x168] sm:$0xff]
        %v3450 = vld [vmem:[#allocation10 + $0x170] sm:$0xff]
        %v3451 = vld [vmem:[#allocation10 + $0x178] sm:$0xff]
        %v3452 = vld [vmem:[#allocation10 + $0x180] sm:$0xff]
        %v3453 = vld [vmem:[#allocation10 + $0x188] sm:$0xff]
        %v3454 = vld [vmem:[#allocation10 + $0x190] sm:$0xff]
        %v3455 = vld [vmem:[#allocation10 + $0x198] sm:$0xff]
        %v3456 = vld [vmem:[#allocation10 + $0x1a0] sm:$0xff]
        %v3457 = vld [vmem:[#allocation10 + $0x1a8] sm:$0xff]
        %v3458 = vld [vmem:[#allocation10 + $0x1b0] sm:$0xff]
        %v3459 = vld [vmem:[#allocation10 + $0x1b8] sm:$0xff]
        %v3460 = vld [vmem:[#allocation10 + $0x1c0] sm:$0xff]
        %v3461 = vld [vmem:[#allocation10 + $0x1c8] sm:$0xff]
        %v3462 = vld [vmem:[#allocation10 + $0x1d0] sm:$0xff]
        %v3463 = vld [vmem:[#allocation10 + $0x1d8] sm:$0xff]
        %v3464 = vld [vmem:[#allocation10 + $0x1e0] sm:$0xff]
        %v3465 = vld [vmem:[#allocation10 + $0x1e8] sm:$0xff]
        %v3466 = vld [vmem:[#allocation10 + $0x1f0] sm:$0xff]
        %v3467 = vld [vmem:[#allocation10 + $0x1f8] sm:$0xff]
        %v3468 = vld [vmem:[#allocation10 + $0x200] sm:$0xff]
        %v3469 = vld [vmem:[#allocation10 + $0x208] sm:$0xff]
        %v3470 = vld [vmem:[#allocation10 + $0x210] sm:$0xff]
        %v3471 = vld [vmem:[#allocation10 + $0x218] sm:$0xff]
        %v3472 = vld [vmem:[#allocation10 + $0x220] sm:$0xff]
        %v3473 = vld [vmem:[#allocation10 + $0x228] sm:$0xff]
        %v3474 = vld [vmem:[#allocation10 + $0x230] sm:$0xff]
        %v3475 = vld [vmem:[#allocation10 + $0x238] sm:$0xff]
        %v3476 = vld [vmem:[#allocation10 + $0x240] sm:$0xff]
        %v3477 = vld [vmem:[#allocation10 + $0x248] sm:$0xff]
        %v3478 = vld [vmem:[#allocation10 + $0x250] sm:$0xff]
        %v3479 = vld [vmem:[#allocation10 + $0x258] sm:$0xff]
        %v3480 = vld [vmem:[#allocation10 + $0x260] sm:$0xff]
        %v3481 = vld [vmem:[#allocation10 + $0x268] sm:$0xff]
        %v3482 = vld [vmem:[#allocation10 + $0x270] sm:$0xff]
        %v3483 = vld [vmem:[#allocation10 + $0x278] sm:$0xff]
        %v3484 = vld [vmem:[#allocation10 + $0x280] sm:$0xff]
        %v3485 = vld [vmem:[#allocation10 + $0x288] sm:$0xff]
        %v3486 = vld [vmem:[#allocation10 + $0x290] sm:$0xff]
        %v3487 = vld [vmem:[#allocation10 + $0x298] sm:$0xff]
        %v3488 = vld [vmem:[#allocation10 + $0x2a0] sm:$0xff]
        %v3489 = vld [vmem:[#allocation10 + $0x2a8] sm:$0xff]
        %v3490 = vld [vmem:[#allocation10 + $0x2b0] sm:$0xff]
        %v3491 = vld [vmem:[#allocation10 + $0x2b8] sm:$0xff]
        %v3492 = vld [vmem:[#allocation10 + $0x2c0] sm:$0xff]
        %v3493 = vld [vmem:[#allocation10 + $0x2c8] sm:$0xff]
        %v3494 = vld [vmem:[#allocation10 + $0x2d0] sm:$0xff]
        %v3495 = vld [vmem:[#allocation10 + $0x2d8] sm:$0xff]
        %v3496 = vld [vmem:[#allocation10 + $0x2e0] sm:$0xff]
        %v3497 = vld [vmem:[#allocation10 + $0x2e8] sm:$0xff]
        %v3498 = vld [vmem:[#allocation10 + $0x2f0] sm:$0xff]
        %v3499 = vld [vmem:[#allocation10 + $0x2f8] sm:$0xff]
        %v3500 = vld [vmem:[#allocation10 + $0x300] sm:$0xff]
        %v3501 = vld [vmem:[#allocation10 + $0x308] sm:$0xff]
        %v3502 = vld [vmem:[#allocation10 + $0x310] sm:$0xff]
        %v3503 = vld [vmem:[#allocation10 + $0x318] sm:$0xff]
        %v3504 = vld [vmem:[#allocation10 + $0x320] sm:$0xff]
        %v3505 = vld [vmem:[#allocation10 + $0x328] sm:$0xff]
        %v3506 = vld [vmem:[#allocation10 + $0x330] sm:$0xff]
        %v3507 = vld [vmem:[#allocation10 + $0x338] sm:$0xff]
        %v3508 = vld [vmem:[#allocation10 + $0x340] sm:$0xff]
        %v3509 = vld [vmem:[#allocation10 + $0x348] sm:$0xff]
        %v3510 = vld [vmem:[#allocation10 + $0x350] sm:$0xff]
        %v3511 = vld [vmem:[#allocation10 + $0x358] sm:$0xff]
        %v3512 = vld [vmem:[#allocation10 + $0x360] sm:$0xff]
        %v3513 = vld [vmem:[#allocation10 + $0x368] sm:$0xff]
        %v3514 = vld [vmem:[#allocation10 + $0x370] sm:$0xff]
        %v3515 = vld [vmem:[#allocation10 + $0x378] sm:$0xff]
        %v3516 = vld [vmem:[#allocation10 + $0x380] sm:$0xff]
        %v3517 = vld [vmem:[#allocation10 + $0x388] sm:$0xff]
        %v3518 = vld [vmem:[#allocation10 + $0x390] sm:$0xff]
        %v3519 = vld [vmem:[#allocation10 + $0x398] sm:$0xff]
        %v3520 = vld [vmem:[#allocation10 + $0x3a0] sm:$0xff]
        %v3521 = vld [vmem:[#allocation10 + $0x3a8] sm:$0xff]
        %v3522 = vld [vmem:[#allocation10 + $0x3b0] sm:$0xff]
        %v3523 = vld [vmem:[#allocation10 + $0x3b8] sm:$0xff]
        %v3524 = vld [vmem:[#allocation10 + $0x3c0] sm:$0xff]
        %v3525 = vld [vmem:[#allocation10 + $0x3c8] sm:$0xff]
        %v3526 = vld [vmem:[#allocation10 + $0x3d0] sm:$0xff]
        %v3527 = vld [vmem:[#allocation10 + $0x3d8] sm:$0xff]
        %v3528 = vld [vmem:[#allocation10 + $0x3e0] sm:$0xff]
        %v3529 = vld [vmem:[#allocation10 + $0x3e8] sm:$0xff]
        %v3530 = vld [vmem:[#allocation10 + $0x3f0] sm:$0xff]
        %v3531 = vld [vmem:[#allocation10 + $0x3f8] sm:$0xff]
        %v3532 = vld [vmem:[#allocation10 + $0x400] sm:$0xff]
        %v3533 = vld [vmem:[#allocation10 + $0x408] sm:$0xff]
        %v3534 = vld [vmem:[#allocation10 + $0x410] sm:$0xff]
        %v3535 = vld [vmem:[#allocation10 + $0x418] sm:$0xff]
        %v3536 = vld [vmem:[#allocation10 + $0x420] sm:$0xff]
        %v3537 = vld [vmem:[#allocation10 + $0x428] sm:$0xff]
        %v3538 = vld [vmem:[#allocation10 + $0x430] sm:$0xff]
        %v3539 = vld [vmem:[#allocation10 + $0x438] sm:$0xff]
        %v3540 = vld [vmem:[#allocation10 + $0x440] sm:$0xff]
        %v3541 = vld [vmem:[#allocation10 + $0x448] sm:$0xff]
        %v3542 = vld [vmem:[#allocation10 + $0x450] sm:$0xff]
        %v3543 = vld [vmem:[#allocation10 + $0x458] sm:$0xff]
        %v3544 = vld [vmem:[#allocation10 + $0x460] sm:$0xff]
        %v3545 = vld [vmem:[#allocation10 + $0x468] sm:$0xff]
        %v3546 = vld [vmem:[#allocation10 + $0x470] sm:$0xff]
        %v3547 = vld [vmem:[#allocation10 + $0x478] sm:$0xff]
        %v3548 = vld [vmem:[#allocation10 + $0x480] sm:$0xff]
        %v3549 = vld [vmem:[#allocation10 + $0x488] sm:$0xff]
        %v3550 = vld [vmem:[#allocation10 + $0x490] sm:$0xff]
        %v3551 = vld [vmem:[#allocation10 + $0x498] sm:$0xff]
        %v3552 = vld [vmem:[#allocation10 + $0x4a0] sm:$0xff]
        %v3553 = vld [vmem:[#allocation10 + $0x4a8] sm:$0xff]
        %v3554 = vld [vmem:[#allocation10 + $0x4b0] sm:$0xff]
        %v3555 = vld [vmem:[#allocation10 + $0x4b8] sm:$0xff]
        %v3556 = vld [vmem:[#allocation10 + $0x4c0] sm:$0xff]
        %v3557 = vld [vmem:[#allocation10 + $0x4c8] sm:$0xff]
        %v3558 = vld [vmem:[#allocation10 + $0x4d0] sm:$0xff]
        %v3559 = vld [vmem:[#allocation10 + $0x4d8] sm:$0xff]
        %v3560 = vld [vmem:[#allocation10 + $0x4e0] sm:$0xff]
        %v3561 = vld [vmem:[#allocation10 + $0x4e8] sm:$0xff]
        %v3562 = vld [vmem:[#allocation10 + $0x4f0] sm:$0xff]
        %v3563 = vld [vmem:[#allocation10 + $0x4f8] sm:$0xff]
        %v3564 = vld [vmem:[#allocation10 + $0x500] sm:$0xff]
        %v3565 = vld [vmem:[#allocation10 + $0x508] sm:$0xff]
        %v3566 = vld [vmem:[#allocation10 + $0x510] sm:$0xff]
        %v3567 = vld [vmem:[#allocation10 + $0x518] sm:$0xff]
        %v3568 = vld [vmem:[#allocation10 + $0x520] sm:$0xff]
        %v3569 = vld [vmem:[#allocation10 + $0x528] sm:$0xff]
        %v3570 = vld [vmem:[#allocation10 + $0x530] sm:$0xff]
        %v3571 = vld [vmem:[#allocation10 + $0x538] sm:$0xff]
        %v3572 = vld [vmem:[#allocation10 + $0x540] sm:$0xff]
        %v3573 = vld [vmem:[#allocation10 + $0x548] sm:$0xff]
        %v3574 = vld [vmem:[#allocation10 + $0x550] sm:$0xff]
        %v3575 = vld [vmem:[#allocation10 + $0x558] sm:$0xff]
        %v3576 = vld [vmem:[#allocation10 + $0x560] sm:$0xff]
        %v3577 = vld [vmem:[#allocation10 + $0x568] sm:$0xff]
        %v3578 = vld [vmem:[#allocation10 + $0x570] sm:$0xff]
        %v3579 = vld [vmem:[#allocation10 + $0x578] sm:$0xff]
        %v3580 = vld [vmem:[#allocation10 + $0x580] sm:$0xff]
        %v3581 = vld [vmem:[#allocation10 + $0x588] sm:$0xff]
        %v3582 = vld [vmem:[#allocation10 + $0x590] sm:$0xff]
        %v3583 = vld [vmem:[#allocation10 + $0x598] sm:$0xff]
        %v3584 = vld [vmem:[#allocation10 + $0x5a0] sm:$0xff]
        %v3585 = vld [vmem:[#allocation10 + $0x5a8] sm:$0xff]
        %v3586 = vld [vmem:[#allocation10 + $0x5b0] sm:$0xff]
        %v3587 = vld [vmem:[#allocation10 + $0x5b8] sm:$0xff]
        %v3588 = vld [vmem:[#allocation10 + $0x5c0] sm:$0xff]
        %v3589 = vld [vmem:[#allocation10 + $0x5c8] sm:$0xff]
        %v3590 = vld [vmem:[#allocation10 + $0x5d0] sm:$0xff]
        %v3591 = vld [vmem:[#allocation10 + $0x5d8] sm:$0xff]
        %v3592 = vld [vmem:[#allocation10 + $0x5e0] sm:$0xff]
        %v3593 = vld [vmem:[#allocation10 + $0x5e8] sm:$0xff]
        %v3594 = vld [vmem:[#allocation10 + $0x5f0] sm:$0xff]
        %v3595 = vld [vmem:[#allocation10 + $0x5f8] sm:$0xff]
        %v3596 = vld [vmem:[#allocation10 + $0x600] sm:$0xff]
        %v3597 = vld [vmem:[#allocation10 + $0x608] sm:$0xff]
        %v3598 = vld [vmem:[#allocation10 + $0x610] sm:$0xff]
        %v3599 = vld [vmem:[#allocation10 + $0x618] sm:$0xff]
        %v3600 = vld [vmem:[#allocation10 + $0x620] sm:$0xff]
        %v3601 = vld [vmem:[#allocation10 + $0x628] sm:$0xff]
        %v3602 = vld [vmem:[#allocation10 + $0x630] sm:$0xff]
        %v3603 = vld [vmem:[#allocation10 + $0x638] sm:$0xff]
        %v3604 = vld [vmem:[#allocation10 + $0x640] sm:$0xff]
        %v3605 = vld [vmem:[#allocation10 + $0x648] sm:$0xff]
        %v3606 = vld [vmem:[#allocation10 + $0x650] sm:$0xff]
        %v3607 = vld [vmem:[#allocation10 + $0x658] sm:$0xff]
        %v3608 = vld [vmem:[#allocation10 + $0x660] sm:$0xff]
        %v3609 = vld [vmem:[#allocation10 + $0x668] sm:$0xff]
        %v3610 = vld [vmem:[#allocation10 + $0x670] sm:$0xff]
        %v3611 = vld [vmem:[#allocation10 + $0x678] sm:$0xff]
        %v3612 = vld [vmem:[#allocation10 + $0x680] sm:$0xff]
        %v3613 = vld [vmem:[#allocation10 + $0x688] sm:$0xff]
        %v3614 = vld [vmem:[#allocation10 + $0x690] sm:$0xff]
        %v3615 = vld [vmem:[#allocation10 + $0x698] sm:$0xff]
        %v3616 = vld [vmem:[#allocation10 + $0x6a0] sm:$0xff]
        %v3617 = vld [vmem:[#allocation10 + $0x6a8] sm:$0xff]
        %v3618 = vld [vmem:[#allocation10 + $0x6b0] sm:$0xff]
        %v3619 = vld [vmem:[#allocation10 + $0x6b8] sm:$0xff]
        %v3620 = vld [vmem:[#allocation10 + $0x6c0] sm:$0xff]
        %v3621 = vld [vmem:[#allocation10 + $0x6c8] sm:$0xff]
        %v3622 = vld [vmem:[#allocation10 + $0x6d0] sm:$0xff]
        %v3623 = vld [vmem:[#allocation10 + $0x6d8] sm:$0xff]
        %v3624 = vld [vmem:[#allocation10 + $0x6e0] sm:$0xff]
        %v3625 = vld [vmem:[#allocation10 + $0x6e8] sm:$0xff]
        %v3626 = vld [vmem:[#allocation10 + $0x6f0] sm:$0xff]
        %v3627 = vld [vmem:[#allocation10 + $0x6f8] sm:$0xff]
        %v3628 = vld [vmem:[#allocation10 + $0x700] sm:$0xff]
        %v3629 = vld [vmem:[#allocation10 + $0x708] sm:$0xff]
        %v3630 = vld [vmem:[#allocation10 + $0x710] sm:$0xff]
        %v3631 = vld [vmem:[#allocation10 + $0x718] sm:$0xff]
        %v3632 = vld [vmem:[#allocation10 + $0x720] sm:$0xff]
        %v3633 = vld [vmem:[#allocation10 + $0x728] sm:$0xff]
        %v3634 = vld [vmem:[#allocation10 + $0x730] sm:$0xff]
        %v3635 = vld [vmem:[#allocation10 + $0x738] sm:$0xff]
        %v3636 = vld [vmem:[#allocation10 + $0x740] sm:$0xff]
        %v3637 = vld [vmem:[#allocation10 + $0x748] sm:$0xff]
        %v3638 = vld [vmem:[#allocation10 + $0x750] sm:$0xff]
        %v3639 = vld [vmem:[#allocation10 + $0x758] sm:$0xff]
        %v3640 = vld [vmem:[#allocation10 + $0x760] sm:$0xff]
        %v3641 = vld [vmem:[#allocation10 + $0x768] sm:$0xff]
        %v3642 = vld [vmem:[#allocation10 + $0x770] sm:$0xff]
        %v3643 = vld [vmem:[#allocation10 + $0x778] sm:$0xff]
        %v3644 = vld [vmem:[#allocation10 + $0x780] sm:$0xff]
        %v3645 = vld [vmem:[#allocation10 + $0x788] sm:$0xff]
        %v3646 = vld [vmem:[#allocation10 + $0x790] sm:$0xff]
        %v3647 = vld [vmem:[#allocation10 + $0x798] sm:$0xff]
        %v3648 = vld [vmem:[#allocation10 + $0x7a0] sm:$0xff]
        %v3649 = vld [vmem:[#allocation10 + $0x7a8] sm:$0xff]
        %v3650 = vld [vmem:[#allocation10 + $0x7b0] sm:$0xff]
        %v3651 = vld [vmem:[#allocation10 + $0x7b8] sm:$0xff]
        %v3652 = vld [vmem:[#allocation10 + $0x7c0] sm:$0xff]
        %v3653 = vld [vmem:[#allocation10 + $0x7c8] sm:$0xff]
        %v3654 = vld [vmem:[#allocation10 + $0x7d0] sm:$0xff]
        %v3655 = vld [vmem:[#allocation10 + $0x7d8] sm:$0xff]
        %v3656 = vld [vmem:[#allocation10 + $0x7e0] sm:$0xff]
        %v3657 = vld [vmem:[#allocation10 + $0x7e8] sm:$0xff]
        %v3658 = vld [vmem:[#allocation10 + $0x7f0] sm:$0xff]
        %v3659 = vld [vmem:[#allocation10 + $0x7f8] sm:$0xff]
        %v3660 = vld [vmem:[#allocation10 + $0x800] sm:$0xff]
        %v3661 = vld [vmem:[#allocation10 + $0x808] sm:$0xff]
        %v3662 = vld [vmem:[#allocation10 + $0x810] sm:$0xff]
        %v3663 = vld [vmem:[#allocation10 + $0x818] sm:$0xff]
        %v3664 = vld [vmem:[#allocation10 + $0x820] sm:$0xff]
        %v3665 = vld [vmem:[#allocation10 + $0x828] sm:$0xff]
        %v3666 = vld [vmem:[#allocation10 + $0x830] sm:$0xff]
        %v3667 = vld [vmem:[#allocation10 + $0x838] sm:$0xff]
        %v3668 = vld [vmem:[#allocation10 + $0x840] sm:$0xff]
        %v3669 = vld [vmem:[#allocation10 + $0x848] sm:$0xff]
        %v3670 = vld [vmem:[#allocation10 + $0x850] sm:$0xff]
        %v3671 = vld [vmem:[#allocation10 + $0x858] sm:$0xff]
        %v3672 = vld [vmem:[#allocation10 + $0x860] sm:$0xff]
        %v3673 = vld [vmem:[#allocation10 + $0x868] sm:$0xff]
        %v3674 = vld [vmem:[#allocation10 + $0x870] sm:$0xff]
        %v3675 = vld [vmem:[#allocation10 + $0x878] sm:$0xff]
        %v3676 = vld [vmem:[#allocation10 + $0x880] sm:$0xff]
        %v3677 = vld [vmem:[#allocation10 + $0x888] sm:$0xff]
        %v3678 = vld [vmem:[#allocation10 + $0x890] sm:$0xff]
        %v3679 = vld [vmem:[#allocation10 + $0x898] sm:$0xff]
        %v3680 = vld [vmem:[#allocation10 + $0x8a0] sm:$0xff]
        %v3681 = vld [vmem:[#allocation10 + $0x8a8] sm:$0xff]
        %v3682 = vld [vmem:[#allocation10 + $0x8b0] sm:$0xff]
        %v3683 = vld [vmem:[#allocation10 + $0x8b8] sm:$0xff]
        %v3684 = vld [vmem:[#allocation10 + $0x8c0] sm:$0xff]
        %v3685 = vld [vmem:[#allocation10 + $0x8c8] sm:$0xff]
        %v3686 = vld [vmem:[#allocation10 + $0x8d0] sm:$0xff]
        %v3687 = vld [vmem:[#allocation10 + $0x8d8] sm:$0xff]
        %v3688 = vld [vmem:[#allocation10 + $0x8e0] sm:$0xff]
        %v3689 = vld [vmem:[#allocation10 + $0x8e8] sm:$0xff]
        %v3690 = vld [vmem:[#allocation10 + $0x8f0] sm:$0xff]
        %v3691 = vld [vmem:[#allocation10 + $0x8f8] sm:$0xff]
        %v3980 = vunpack.c.l.b16 %v3404
        %v3981 = vunpack.c.h.b16 %v3404
        %v3982 = vunpack.c.l.b16 %v3405
        %v3983 = vunpack.c.h.b16 %v3405
        %v3984 = vunpack.c.l.b16 %v3406
        %v3985 = vunpack.c.h.b16 %v3406
        %v3986 = vunpack.c.l.b16 %v3407
        %v3987 = vunpack.c.h.b16 %v3407
        %v3988 = vunpack.c.l.b16 %v3408
        %v3989 = vunpack.c.h.b16 %v3408
        %v3990 = vunpack.c.l.b16 %v3409
        %v3991 = vunpack.c.h.b16 %v3409
        %v3992 = vunpack.c.l.b16 %v3410
        %v3993 = vunpack.c.h.b16 %v3410
        %v3994 = vunpack.c.l.b16 %v3411
        %v3995 = vunpack.c.h.b16 %v3411
        %v3996 = vunpack.c.l.b16 %v3412
        %v3997 = vunpack.c.h.b16 %v3412
        %v3998 = vunpack.c.l.b16 %v3413
        %v3999 = vunpack.c.h.b16 %v3413
        %v4000 = vunpack.c.l.b16 %v3414
        %v4001 = vunpack.c.h.b16 %v3414
        %v4002 = vunpack.c.l.b16 %v3415
        %v4003 = vunpack.c.h.b16 %v3415
        %v4004 = vunpack.c.l.b16 %v3416
        %v4005 = vunpack.c.h.b16 %v3416
        %v4006 = vunpack.c.l.b16 %v3417
        %v4007 = vunpack.c.h.b16 %v3417
        %v4008 = vunpack.c.l.b16 %v3418
        %v4009 = vunpack.c.h.b16 %v3418
        %v4010 = vunpack.c.l.b16 %v3419
        %v4011 = vunpack.c.h.b16 %v3419
        %v4012 = vunpack.c.l.b16 %v3420
        %v4013 = vunpack.c.h.b16 %v3420
        %v4014 = vunpack.c.l.b16 %v3421
        %v4015 = vunpack.c.h.b16 %v3421
        %v4016 = vunpack.c.l.b16 %v3422
        %v4017 = vunpack.c.h.b16 %v3422
        %v4018 = vunpack.c.l.b16 %v3423
        %v4019 = vunpack.c.h.b16 %v3423
        %v4020 = vunpack.c.l.b16 %v3424
        %v4021 = vunpack.c.h.b16 %v3424
        %v4022 = vunpack.c.l.b16 %v3425
        %v4023 = vunpack.c.h.b16 %v3425
        %v4024 = vunpack.c.l.b16 %v3426
        %v4025 = vunpack.c.h.b16 %v3426
        %v4026 = vunpack.c.l.b16 %v3427
        %v4027 = vunpack.c.h.b16 %v3427
        %v4028 = vunpack.c.l.b16 %v3428
        %v4029 = vunpack.c.h.b16 %v3428
        %v4030 = vunpack.c.l.b16 %v3429
        %v4031 = vunpack.c.h.b16 %v3429
        %v4032 = vunpack.c.l.b16 %v3430
        %v4033 = vunpack.c.h.b16 %v3430
        %v4034 = vunpack.c.l.b16 %v3431
        %v4035 = vunpack.c.h.b16 %v3431
        %v4036 = vunpack.c.l.b16 %v3432
        %v4037 = vunpack.c.h.b16 %v3432
        %v4038 = vunpack.c.l.b16 %v3433
        %v4039 = vunpack.c.h.b16 %v3433
        %v4040 = vunpack.c.l.b16 %v3434
        %v4041 = vunpack.c.h.b16 %v3434
        %v4042 = vunpack.c.l.b16 %v3435
        %v4043 = vunpack.c.h.b16 %v3435
        %v4044 = vunpack.c.l.b16 %v3436
        %v4045 = vunpack.c.h.b16 %v3436
        %v4046 = vunpack.c.l.b16 %v3437
        %v4047 = vunpack.c.h.b16 %v3437
        %v4048 = vunpack.c.l.b16 %v3438
        %v4049 = vunpack.c.h.b16 %v3438
        %v4050 = vunpack.c.l.b16 %v3439
        %v4051 = vunpack.c.h.b16 %v3439
        %v4052 = vunpack.c.l.b16 %v3440
        %v4053 = vunpack.c.h.b16 %v3440
        %v4054 = vunpack.c.l.b16 %v3441
        %v4055 = vunpack.c.h.b16 %v3441
        %v4056 = vunpack.c.l.b16 %v3442
        %v4057 = vunpack.c.h.b16 %v3442
        %v4058 = vunpack.c.l.b16 %v3443
        %v4059 = vunpack.c.h.b16 %v3443
        %v4060 = vunpack.c.l.b16 %v3444
        %v4061 = vunpack.c.h.b16 %v3444
        %v4062 = vunpack.c.l.b16 %v3445
        %v4063 = vunpack.c.h.b16 %v3445
        %v4064 = vunpack.c.l.b16 %v3446
        %v4065 = vunpack.c.h.b16 %v3446
        %v4066 = vunpack.c.l.b16 %v3447
        %v4067 = vunpack.c.h.b16 %v3447
        %v4068 = vunpack.c.l.b16 %v3448
        %v4069 = vunpack.c.h.b16 %v3448
        %v4070 = vunpack.c.l.b16 %v3449
        %v4071 = vunpack.c.h.b16 %v3449
        %v4072 = vunpack.c.l.b16 %v3450
        %v4073 = vunpack.c.h.b16 %v3450
        %v4074 = vunpack.c.l.b16 %v3451
        %v4075 = vunpack.c.h.b16 %v3451
        %v4076 = vunpack.c.l.b16 %v3452
        %v4077 = vunpack.c.h.b16 %v3452
        %v4078 = vunpack.c.l.b16 %v3453
        %v4079 = vunpack.c.h.b16 %v3453
        %v4080 = vunpack.c.l.b16 %v3454
        %v4081 = vunpack.c.h.b16 %v3454
        %v4082 = vunpack.c.l.b16 %v3455
        %v4083 = vunpack.c.h.b16 %v3455
        %v4084 = vunpack.c.l.b16 %v3456
        %v4085 = vunpack.c.h.b16 %v3456
        %v4086 = vunpack.c.l.b16 %v3457
        %v4087 = vunpack.c.h.b16 %v3457
        %v4088 = vunpack.c.l.b16 %v3458
        %v4089 = vunpack.c.h.b16 %v3458
        %v4090 = vunpack.c.l.b16 %v3459
        %v4091 = vunpack.c.h.b16 %v3459
        %v4092 = vunpack.c.l.b16 %v3460
        %v4093 = vunpack.c.h.b16 %v3460
        %v4094 = vunpack.c.l.b16 %v3461
        %v4095 = vunpack.c.h.b16 %v3461
        %v4096 = vunpack.c.l.b16 %v3462
        %v4097 = vunpack.c.h.b16 %v3462
        %v4098 = vunpack.c.l.b16 %v3463
        %v4099 = vunpack.c.h.b16 %v3463
        %v4100 = vunpack.c.l.b16 %v3464
        %v4101 = vunpack.c.h.b16 %v3464
        %v4102 = vunpack.c.l.b16 %v3465
        %v4103 = vunpack.c.h.b16 %v3465
        %v4104 = vunpack.c.l.b16 %v3466
        %v4105 = vunpack.c.h.b16 %v3466
        %v4106 = vunpack.c.l.b16 %v3467
        %v4107 = vunpack.c.h.b16 %v3467
        %v4108 = vunpack.c.l.b16 %v3468
        %v4109 = vunpack.c.h.b16 %v3468
        %v4110 = vunpack.c.l.b16 %v3469
        %v4111 = vunpack.c.h.b16 %v3469
        %v4112 = vunpack.c.l.b16 %v3470
        %v4113 = vunpack.c.h.b16 %v3470
        %v4114 = vunpack.c.l.b16 %v3471
        %v4115 = vunpack.c.h.b16 %v3471
        %v4116 = vunpack.c.l.b16 %v3472
        %v4117 = vunpack.c.h.b16 %v3472
        %v4118 = vunpack.c.l.b16 %v3473
        %v4119 = vunpack.c.h.b16 %v3473
        %v4120 = vunpack.c.l.b16 %v3474
        %v4121 = vunpack.c.h.b16 %v3474
        %v4122 = vunpack.c.l.b16 %v3475
        %v4123 = vunpack.c.h.b16 %v3475
        %v4124 = vunpack.c.l.b16 %v3476
        %v4125 = vunpack.c.h.b16 %v3476
        %v4126 = vunpack.c.l.b16 %v3477
        %v4127 = vunpack.c.h.b16 %v3477
        %v4128 = vunpack.c.l.b16 %v3478
        %v4129 = vunpack.c.h.b16 %v3478
        %v4130 = vunpack.c.l.b16 %v3479
        %v4131 = vunpack.c.h.b16 %v3479
        %v4132 = vunpack.c.l.b16 %v3480
        %v4133 = vunpack.c.h.b16 %v3480
        %v4134 = vunpack.c.l.b16 %v3481
        %v4135 = vunpack.c.h.b16 %v3481
        %v4136 = vunpack.c.l.b16 %v3482
        %v4137 = vunpack.c.h.b16 %v3482
        %v4138 = vunpack.c.l.b16 %v3483
        %v4139 = vunpack.c.h.b16 %v3483
        %v4140 = vunpack.c.l.b16 %v3484
        %v4141 = vunpack.c.h.b16 %v3484
        %v4142 = vunpack.c.l.b16 %v3485
        %v4143 = vunpack.c.h.b16 %v3485
        %v4144 = vunpack.c.l.b16 %v3486
        %v4145 = vunpack.c.h.b16 %v3486
        %v4146 = vunpack.c.l.b16 %v3487
        %v4147 = vunpack.c.h.b16 %v3487
        %v4148 = vunpack.c.l.b16 %v3488
        %v4149 = vunpack.c.h.b16 %v3488
        %v4150 = vunpack.c.l.b16 %v3489
        %v4151 = vunpack.c.h.b16 %v3489
        %v4152 = vunpack.c.l.b16 %v3490
        %v4153 = vunpack.c.h.b16 %v3490
        %v4154 = vunpack.c.l.b16 %v3491
        %v4155 = vunpack.c.h.b16 %v3491
        %v4156 = vunpack.c.l.b16 %v3492
        %v4157 = vunpack.c.h.b16 %v3492
        %v4158 = vunpack.c.l.b16 %v3493
        %v4159 = vunpack.c.h.b16 %v3493
        %v4160 = vunpack.c.l.b16 %v3494
        %v4161 = vunpack.c.h.b16 %v3494
        %v4162 = vunpack.c.l.b16 %v3495
        %v4163 = vunpack.c.h.b16 %v3495
        %v4164 = vunpack.c.l.b16 %v3496
        %v4165 = vunpack.c.h.b16 %v3496
        %v4166 = vunpack.c.l.b16 %v3497
        %v4167 = vunpack.c.h.b16 %v3497
        %v4168 = vunpack.c.l.b16 %v3498
        %v4169 = vunpack.c.h.b16 %v3498
        %v4170 = vunpack.c.l.b16 %v3499
        %v4171 = vunpack.c.h.b16 %v3499
        %v4172 = vunpack.c.l.b16 %v3500
        %v4173 = vunpack.c.h.b16 %v3500
        %v4174 = vunpack.c.l.b16 %v3501
        %v4175 = vunpack.c.h.b16 %v3501
        %v4176 = vunpack.c.l.b16 %v3502
        %v4177 = vunpack.c.h.b16 %v3502
        %v4178 = vunpack.c.l.b16 %v3503
        %v4179 = vunpack.c.h.b16 %v3503
        %v4180 = vunpack.c.l.b16 %v3504
        %v4181 = vunpack.c.h.b16 %v3504
        %v4182 = vunpack.c.l.b16 %v3505
        %v4183 = vunpack.c.h.b16 %v3505
        %v4184 = vunpack.c.l.b16 %v3506
        %v4185 = vunpack.c.h.b16 %v3506
        %v4186 = vunpack.c.l.b16 %v3507
        %v4187 = vunpack.c.h.b16 %v3507
        %v4188 = vunpack.c.l.b16 %v3508
        %v4189 = vunpack.c.h.b16 %v3508
        %v4190 = vunpack.c.l.b16 %v3509
        %v4191 = vunpack.c.h.b16 %v3509
        %v4192 = vunpack.c.l.b16 %v3510
        %v4193 = vunpack.c.h.b16 %v3510
        %v4194 = vunpack.c.l.b16 %v3511
        %v4195 = vunpack.c.h.b16 %v3511
        %v4196 = vunpack.c.l.b16 %v3512
        %v4197 = vunpack.c.h.b16 %v3512
        %v4198 = vunpack.c.l.b16 %v3513
        %v4199 = vunpack.c.h.b16 %v3513
        %v4200 = vunpack.c.l.b16 %v3514
        %v4201 = vunpack.c.h.b16 %v3514
        %v4202 = vunpack.c.l.b16 %v3515
        %v4203 = vunpack.c.h.b16 %v3515
        %v4204 = vunpack.c.l.b16 %v3516
        %v4205 = vunpack.c.h.b16 %v3516
        %v4206 = vunpack.c.l.b16 %v3517
        %v4207 = vunpack.c.h.b16 %v3517
        %v4208 = vunpack.c.l.b16 %v3518
        %v4209 = vunpack.c.h.b16 %v3518
        %v4210 = vunpack.c.l.b16 %v3519
        %v4211 = vunpack.c.h.b16 %v3519
        %v4212 = vunpack.c.l.b16 %v3520
        %v4213 = vunpack.c.h.b16 %v3520
        %v4214 = vunpack.c.l.b16 %v3521
        %v4215 = vunpack.c.h.b16 %v3521
        %v4216 = vunpack.c.l.b16 %v3522
        %v4217 = vunpack.c.h.b16 %v3522
        %v4218 = vunpack.c.l.b16 %v3523
        %v4219 = vunpack.c.h.b16 %v3523
        %v4220 = vunpack.c.l.b16 %v3524
        %v4221 = vunpack.c.h.b16 %v3524
        %v4222 = vunpack.c.l.b16 %v3525
        %v4223 = vunpack.c.h.b16 %v3525
        %v4224 = vunpack.c.l.b16 %v3526
        %v4225 = vunpack.c.h.b16 %v3526
        %v4226 = vunpack.c.l.b16 %v3527
        %v4227 = vunpack.c.h.b16 %v3527
        %v4228 = vunpack.c.l.b16 %v3528
        %v4229 = vunpack.c.h.b16 %v3528
        %v4230 = vunpack.c.l.b16 %v3529
        %v4231 = vunpack.c.h.b16 %v3529
        %v4232 = vunpack.c.l.b16 %v3530
        %v4233 = vunpack.c.h.b16 %v3530
        %v4234 = vunpack.c.l.b16 %v3531
        %v4235 = vunpack.c.h.b16 %v3531
        %v4236 = vunpack.c.l.b16 %v3532
        %v4237 = vunpack.c.h.b16 %v3532
        %v4238 = vunpack.c.l.b16 %v3533
        %v4239 = vunpack.c.h.b16 %v3533
        %v4240 = vunpack.c.l.b16 %v3534
        %v4241 = vunpack.c.h.b16 %v3534
        %v4242 = vunpack.c.l.b16 %v3535
        %v4243 = vunpack.c.h.b16 %v3535
        %v4244 = vunpack.c.l.b16 %v3536
        %v4245 = vunpack.c.h.b16 %v3536
        %v4246 = vunpack.c.l.b16 %v3537
        %v4247 = vunpack.c.h.b16 %v3537
        %v4248 = vunpack.c.l.b16 %v3538
        %v4249 = vunpack.c.h.b16 %v3538
        %v4250 = vunpack.c.l.b16 %v3539
        %v4251 = vunpack.c.h.b16 %v3539
        %v4252 = vunpack.c.l.b16 %v3540
        %v4253 = vunpack.c.h.b16 %v3540
        %v4254 = vunpack.c.l.b16 %v3541
        %v4255 = vunpack.c.h.b16 %v3541
        %v4256 = vunpack.c.l.b16 %v3542
        %v4257 = vunpack.c.h.b16 %v3542
        %v4258 = vunpack.c.l.b16 %v3543
        %v4259 = vunpack.c.h.b16 %v3543
        %v4260 = vunpack.c.l.b16 %v3544
        %v4261 = vunpack.c.h.b16 %v3544
        %v4262 = vunpack.c.l.b16 %v3545
        %v4263 = vunpack.c.h.b16 %v3545
        %v4264 = vunpack.c.l.b16 %v3546
        %v4265 = vunpack.c.h.b16 %v3546
        %v4266 = vunpack.c.l.b16 %v3547
        %v4267 = vunpack.c.h.b16 %v3547
        %v4268 = vunpack.c.l.b16 %v3548
        %v4269 = vunpack.c.h.b16 %v3548
        %v4270 = vunpack.c.l.b16 %v3549
        %v4271 = vunpack.c.h.b16 %v3549
        %v4272 = vunpack.c.l.b16 %v3550
        %v4273 = vunpack.c.h.b16 %v3550
        %v4274 = vunpack.c.l.b16 %v3551
        %v4275 = vunpack.c.h.b16 %v3551
        %v4276 = vunpack.c.l.b16 %v3552
        %v4277 = vunpack.c.h.b16 %v3552
        %v4278 = vunpack.c.l.b16 %v3553
        %v4279 = vunpack.c.h.b16 %v3553
        %v4280 = vunpack.c.l.b16 %v3554
        %v4281 = vunpack.c.h.b16 %v3554
        %v4282 = vunpack.c.l.b16 %v3555
        %v4283 = vunpack.c.h.b16 %v3555
        %v4284 = vunpack.c.l.b16 %v3556
        %v4285 = vunpack.c.h.b16 %v3556
        %v4286 = vunpack.c.l.b16 %v3557
        %v4287 = vunpack.c.h.b16 %v3557
        %v4288 = vunpack.c.l.b16 %v3558
        %v4289 = vunpack.c.h.b16 %v3558
        %v4290 = vunpack.c.l.b16 %v3559
        %v4291 = vunpack.c.h.b16 %v3559
        %v4292 = vunpack.c.l.b16 %v3560
        %v4293 = vunpack.c.h.b16 %v3560
        %v4294 = vunpack.c.l.b16 %v3561
        %v4295 = vunpack.c.h.b16 %v3561
        %v4296 = vunpack.c.l.b16 %v3562
        %v4297 = vunpack.c.h.b16 %v3562
        %v4298 = vunpack.c.l.b16 %v3563
        %v4299 = vunpack.c.h.b16 %v3563
        %v4300 = vunpack.c.l.b16 %v3564
        %v4301 = vunpack.c.h.b16 %v3564
        %v4302 = vunpack.c.l.b16 %v3565
        %v4303 = vunpack.c.h.b16 %v3565
        %v4304 = vunpack.c.l.b16 %v3566
        %v4305 = vunpack.c.h.b16 %v3566
        %v4306 = vunpack.c.l.b16 %v3567
        %v4307 = vunpack.c.h.b16 %v3567
        %v4308 = vunpack.c.l.b16 %v3568
        %v4309 = vunpack.c.h.b16 %v3568
        %v4310 = vunpack.c.l.b16 %v3569
        %v4311 = vunpack.c.h.b16 %v3569
        %v4312 = vunpack.c.l.b16 %v3570
        %v4313 = vunpack.c.h.b16 %v3570
        %v4314 = vunpack.c.l.b16 %v3571
        %v4315 = vunpack.c.h.b16 %v3571
        %v4316 = vunpack.c.l.b16 %v3572
        %v4317 = vunpack.c.h.b16 %v3572
        %v4318 = vunpack.c.l.b16 %v3573
        %v4319 = vunpack.c.h.b16 %v3573
        %v4320 = vunpack.c.l.b16 %v3574
        %v4321 = vunpack.c.h.b16 %v3574
        %v4322 = vunpack.c.l.b16 %v3575
        %v4323 = vunpack.c.h.b16 %v3575
        %v4324 = vunpack.c.l.b16 %v3576
        %v4325 = vunpack.c.h.b16 %v3576
        %v4326 = vunpack.c.l.b16 %v3577
        %v4327 = vunpack.c.h.b16 %v3577
        %v4328 = vunpack.c.l.b16 %v3578
        %v4329 = vunpack.c.h.b16 %v3578
        %v4330 = vunpack.c.l.b16 %v3579
        %v4331 = vunpack.c.h.b16 %v3579
        %v4332 = vunpack.c.l.b16 %v3580
        %v4333 = vunpack.c.h.b16 %v3580
        %v4334 = vunpack.c.l.b16 %v3581
        %v4335 = vunpack.c.h.b16 %v3581
        %v4336 = vunpack.c.l.b16 %v3582
        %v4337 = vunpack.c.h.b16 %v3582
        %v4338 = vunpack.c.l.b16 %v3583
        %v4339 = vunpack.c.h.b16 %v3583
        %v4340 = vunpack.c.l.b16 %v3584
        %v4341 = vunpack.c.h.b16 %v3584
        %v4342 = vunpack.c.l.b16 %v3585
        %v4343 = vunpack.c.h.b16 %v3585
        %v4344 = vunpack.c.l.b16 %v3586
        %v4345 = vunpack.c.h.b16 %v3586
        %v4346 = vunpack.c.l.b16 %v3587
        %v4347 = vunpack.c.h.b16 %v3587
        %v4348 = vunpack.c.l.b16 %v3588
        %v4349 = vunpack.c.h.b16 %v3588
        %v4350 = vunpack.c.l.b16 %v3589
        %v4351 = vunpack.c.h.b16 %v3589
        %v4352 = vunpack.c.l.b16 %v3590
        %v4353 = vunpack.c.h.b16 %v3590
        %v4354 = vunpack.c.l.b16 %v3591
        %v4355 = vunpack.c.h.b16 %v3591
        %v4356 = vunpack.c.l.b16 %v3592
        %v4357 = vunpack.c.h.b16 %v3592
        %v4358 = vunpack.c.l.b16 %v3593
        %v4359 = vunpack.c.h.b16 %v3593
        %v4360 = vunpack.c.l.b16 %v3594
        %v4361 = vunpack.c.h.b16 %v3594
        %v4362 = vunpack.c.l.b16 %v3595
        %v4363 = vunpack.c.h.b16 %v3595
        %v4364 = vunpack.c.l.b16 %v3596
        %v4365 = vunpack.c.h.b16 %v3596
        %v4366 = vunpack.c.l.b16 %v3597
        %v4367 = vunpack.c.h.b16 %v3597
        %v4368 = vunpack.c.l.b16 %v3598
        %v4369 = vunpack.c.h.b16 %v3598
        %v4370 = vunpack.c.l.b16 %v3599
        %v4371 = vunpack.c.h.b16 %v3599
        %v4372 = vunpack.c.l.b16 %v3600
        %v4373 = vunpack.c.h.b16 %v3600
        %v4374 = vunpack.c.l.b16 %v3601
        %v4375 = vunpack.c.h.b16 %v3601
        %v4376 = vunpack.c.l.b16 %v3602
        %v4377 = vunpack.c.h.b16 %v3602
        %v4378 = vunpack.c.l.b16 %v3603
        %v4379 = vunpack.c.h.b16 %v3603
        %v4380 = vunpack.c.l.b16 %v3604
        %v4381 = vunpack.c.h.b16 %v3604
        %v4382 = vunpack.c.l.b16 %v3605
        %v4383 = vunpack.c.h.b16 %v3605
        %v4384 = vunpack.c.l.b16 %v3606
        %v4385 = vunpack.c.h.b16 %v3606
        %v4386 = vunpack.c.l.b16 %v3607
        %v4387 = vunpack.c.h.b16 %v3607
        %v4388 = vunpack.c.l.b16 %v3608
        %v4389 = vunpack.c.h.b16 %v3608
        %v4390 = vunpack.c.l.b16 %v3609
        %v4391 = vunpack.c.h.b16 %v3609
        %v4392 = vunpack.c.l.b16 %v3610
        %v4393 = vunpack.c.h.b16 %v3610
        %v4394 = vunpack.c.l.b16 %v3611
        %v4395 = vunpack.c.h.b16 %v3611
        %v4396 = vunpack.c.l.b16 %v3612
        %v4397 = vunpack.c.h.b16 %v3612
        %v4398 = vunpack.c.l.b16 %v3613
        %v4399 = vunpack.c.h.b16 %v3613
        %v4400 = vunpack.c.l.b16 %v3614
        %v4401 = vunpack.c.h.b16 %v3614
        %v4402 = vunpack.c.l.b16 %v3615
        %v4403 = vunpack.c.h.b16 %v3615
        %v4404 = vunpack.c.l.b16 %v3616
        %v4405 = vunpack.c.h.b16 %v3616
        %v4406 = vunpack.c.l.b16 %v3617
        %v4407 = vunpack.c.h.b16 %v3617
        %v4408 = vunpack.c.l.b16 %v3618
        %v4409 = vunpack.c.h.b16 %v3618
        %v4410 = vunpack.c.l.b16 %v3619
        %v4411 = vunpack.c.h.b16 %v3619
        %v4412 = vunpack.c.l.b16 %v3620
        %v4413 = vunpack.c.h.b16 %v3620
        %v4414 = vunpack.c.l.b16 %v3621
        %v4415 = vunpack.c.h.b16 %v3621
        %v4416 = vunpack.c.l.b16 %v3622
        %v4417 = vunpack.c.h.b16 %v3622
        %v4418 = vunpack.c.l.b16 %v3623
        %v4419 = vunpack.c.h.b16 %v3623
        %v4420 = vunpack.c.l.b16 %v3624
        %v4421 = vunpack.c.h.b16 %v3624
        %v4422 = vunpack.c.l.b16 %v3625
        %v4423 = vunpack.c.h.b16 %v3625
        %v4424 = vunpack.c.l.b16 %v3626
        %v4425 = vunpack.c.h.b16 %v3626
        %v4426 = vunpack.c.l.b16 %v3627
        %v4427 = vunpack.c.h.b16 %v3627
        %v4428 = vunpack.c.l.b16 %v3628
        %v4429 = vunpack.c.h.b16 %v3628
        %v4430 = vunpack.c.l.b16 %v3629
        %v4431 = vunpack.c.h.b16 %v3629
        %v4432 = vunpack.c.l.b16 %v3630
        %v4433 = vunpack.c.h.b16 %v3630
        %v4434 = vunpack.c.l.b16 %v3631
        %v4435 = vunpack.c.h.b16 %v3631
        %v4436 = vunpack.c.l.b16 %v3632
        %v4437 = vunpack.c.h.b16 %v3632
        %v4438 = vunpack.c.l.b16 %v3633
        %v4439 = vunpack.c.h.b16 %v3633
        %v4440 = vunpack.c.l.b16 %v3634
        %v4441 = vunpack.c.h.b16 %v3634
        %v4442 = vunpack.c.l.b16 %v3635
        %v4443 = vunpack.c.h.b16 %v3635
        %v4444 = vunpack.c.l.b16 %v3636
        %v4445 = vunpack.c.h.b16 %v3636
        %v4446 = vunpack.c.l.b16 %v3637
        %v4447 = vunpack.c.h.b16 %v3637
        %v4448 = vunpack.c.l.b16 %v3638
        %v4449 = vunpack.c.h.b16 %v3638
        %v4450 = vunpack.c.l.b16 %v3639
        %v4451 = vunpack.c.h.b16 %v3639
        %v4452 = vunpack.c.l.b16 %v3640
        %v4453 = vunpack.c.h.b16 %v3640
        %v4454 = vunpack.c.l.b16 %v3641
        %v4455 = vunpack.c.h.b16 %v3641
        %v4456 = vunpack.c.l.b16 %v3642
        %v4457 = vunpack.c.h.b16 %v3642
        %v4458 = vunpack.c.l.b16 %v3643
        %v4459 = vunpack.c.h.b16 %v3643
        %v4460 = vunpack.c.l.b16 %v3644
        %v4461 = vunpack.c.h.b16 %v3644
        %v4462 = vunpack.c.l.b16 %v3645
        %v4463 = vunpack.c.h.b16 %v3645
        %v4464 = vunpack.c.l.b16 %v3646
        %v4465 = vunpack.c.h.b16 %v3646
        %v4466 = vunpack.c.l.b16 %v3647
        %v4467 = vunpack.c.h.b16 %v3647
        %v4468 = vunpack.c.l.b16 %v3648
        %v4469 = vunpack.c.h.b16 %v3648
        %v4470 = vunpack.c.l.b16 %v3649
        %v4471 = vunpack.c.h.b16 %v3649
        %v4472 = vunpack.c.l.b16 %v3650
        %v4473 = vunpack.c.h.b16 %v3650
        %v4474 = vunpack.c.l.b16 %v3651
        %v4475 = vunpack.c.h.b16 %v3651
        %v4476 = vunpack.c.l.b16 %v3652
        %v4477 = vunpack.c.h.b16 %v3652
        %v4478 = vunpack.c.l.b16 %v3653
        %v4479 = vunpack.c.h.b16 %v3653
        %v4480 = vunpack.c.l.b16 %v3654
        %v4481 = vunpack.c.h.b16 %v3654
        %v4482 = vunpack.c.l.b16 %v3655
        %v4483 = vunpack.c.h.b16 %v3655
        %v4484 = vunpack.c.l.b16 %v3656
        %v4485 = vunpack.c.h.b16 %v3656
        %v4486 = vunpack.c.l.b16 %v3657
        %v4487 = vunpack.c.h.b16 %v3657
        %v4488 = vunpack.c.l.b16 %v3658
        %v4489 = vunpack.c.h.b16 %v3658
        %v4490 = vunpack.c.l.b16 %v3659
        %v4491 = vunpack.c.h.b16 %v3659
        %v4492 = vunpack.c.l.b16 %v3660
        %v4493 = vunpack.c.h.b16 %v3660
        %v4494 = vunpack.c.l.b16 %v3661
        %v4495 = vunpack.c.h.b16 %v3661
        %v4496 = vunpack.c.l.b16 %v3662
        %v4497 = vunpack.c.h.b16 %v3662
        %v4498 = vunpack.c.l.b16 %v3663
        %v4499 = vunpack.c.h.b16 %v3663
        %v4500 = vunpack.c.l.b16 %v3664
        %v4501 = vunpack.c.h.b16 %v3664
        %v4502 = vunpack.c.l.b16 %v3665
        %v4503 = vunpack.c.h.b16 %v3665
        %v4504 = vunpack.c.l.b16 %v3666
        %v4505 = vunpack.c.h.b16 %v3666
        %v4506 = vunpack.c.l.b16 %v3667
        %v4507 = vunpack.c.h.b16 %v3667
        %v4508 = vunpack.c.l.b16 %v3668
        %v4509 = vunpack.c.h.b16 %v3668
        %v4510 = vunpack.c.l.b16 %v3669
        %v4511 = vunpack.c.h.b16 %v3669
        %v4512 = vunpack.c.l.b16 %v3670
        %v4513 = vunpack.c.h.b16 %v3670
        %v4514 = vunpack.c.l.b16 %v3671
        %v4515 = vunpack.c.h.b16 %v3671
        %v4516 = vunpack.c.l.b16 %v3672
        %v4517 = vunpack.c.h.b16 %v3672
        %v4518 = vunpack.c.l.b16 %v3673
        %v4519 = vunpack.c.h.b16 %v3673
        %v4520 = vunpack.c.l.b16 %v3674
        %v4521 = vunpack.c.h.b16 %v3674
        %v4522 = vunpack.c.l.b16 %v3675
        %v4523 = vunpack.c.h.b16 %v3675
        %v4524 = vunpack.c.l.b16 %v3676
        %v4525 = vunpack.c.h.b16 %v3676
        %v4526 = vunpack.c.l.b16 %v3677
        %v4527 = vunpack.c.h.b16 %v3677
        %v4528 = vunpack.c.l.b16 %v3678
        %v4529 = vunpack.c.h.b16 %v3678
        %v4530 = vunpack.c.l.b16 %v3679
        %v4531 = vunpack.c.h.b16 %v3679
        %v4532 = vunpack.c.l.b16 %v3680
        %v4533 = vunpack.c.h.b16 %v3680
        %v4534 = vunpack.c.l.b16 %v3681
        %v4535 = vunpack.c.h.b16 %v3681
        %v4536 = vunpack.c.l.b16 %v3682
        %v4537 = vunpack.c.h.b16 %v3682
        %v4538 = vunpack.c.l.b16 %v3683
        %v4539 = vunpack.c.h.b16 %v3683
        %v4540 = vunpack.c.l.b16 %v3684
        %v4541 = vunpack.c.h.b16 %v3684
        %v4542 = vunpack.c.l.b16 %v3685
        %v4543 = vunpack.c.h.b16 %v3685
        %v4544 = vunpack.c.l.b16 %v3686
        %v4545 = vunpack.c.h.b16 %v3686
        %v4546 = vunpack.c.l.b16 %v3687
        %v4547 = vunpack.c.h.b16 %v3687
        %v4548 = vunpack.c.l.b16 %v3688
        %v4549 = vunpack.c.h.b16 %v3688
        %v4550 = vunpack.c.l.b16 %v3689
        %v4551 = vunpack.c.h.b16 %v3689
        %v4552 = vunpack.c.l.b16 %v3690
        %v4553 = vunpack.c.h.b16 %v3690
        %v4554 = vunpack.c.l.b16 %v3691
        %v4555 = vunpack.c.h.b16 %v3691
        %v4556 = vpack.c.b16 %v3986, %v3980
        %v4557 = vpack.c.b16 %v3987, %v3981
        %v4558 = vpack.c.b16 %v3988, %v3982
        %v4559 = vpack.c.b16 %v3989, %v3983
        %v4560 = vpack.c.b16 %v3990, %v3984
        %v4561 = vpack.c.b16 %v3991, %v3985
        %v4562 = vpack.c.b16 %v3998, %v3992
        %v4563 = vpack.c.b16 %v3999, %v3993
        %v4564 = vpack.c.b16 %v4000, %v3994
        %v4565 = vpack.c.b16 %v4001, %v3995
        %v4566 = vpack.c.b16 %v4002, %v3996
        %v4567 = vpack.c.b16 %v4003, %v3997
        %v4568 = vpack.c.b16 %v4010, %v4004
        %v4569 = vpack.c.b16 %v4011, %v4005
        %v4570 = vpack.c.b16 %v4012, %v4006
        %v4571 = vpack.c.b16 %v4013, %v4007
        %v4572 = vpack.c.b16 %v4014, %v4008
        %v4573 = vpack.c.b16 %v4015, %v4009
        %v4574 = vpack.c.b16 %v4022, %v4016
        %v4575 = vpack.c.b16 %v4023, %v4017
        %v4576 = vpack.c.b16 %v4024, %v4018
        %v4577 = vpack.c.b16 %v4025, %v4019
        %v4578 = vpack.c.b16 %v4026, %v4020
        %v4579 = vpack.c.b16 %v4027, %v4021
        %v4580 = vpack.c.b16 %v4034, %v4028
        %v4581 = vpack.c.b16 %v4035, %v4029
        %v4582 = vpack.c.b16 %v4036, %v4030
        %v4583 = vpack.c.b16 %v4037, %v4031
        %v4584 = vpack.c.b16 %v4038, %v4032
        %v4585 = vpack.c.b16 %v4039, %v4033
        %v4586 = vpack.c.b16 %v4046, %v4040
        %v4587 = vpack.c.b16 %v4047, %v4041
        %v4588 = vpack.c.b16 %v4048, %v4042
        %v4589 = vpack.c.b16 %v4049, %v4043
        %v4590 = vpack.c.b16 %v4050, %v4044
        %v4591 = vpack.c.b16 %v4051, %v4045
        %v4592 = vpack.c.b16 %v4058, %v4052
        %v4593 = vpack.c.b16 %v4059, %v4053
        %v4594 = vpack.c.b16 %v4060, %v4054
        %v4595 = vpack.c.b16 %v4061, %v4055
        %v4596 = vpack.c.b16 %v4062, %v4056
        %v4597 = vpack.c.b16 %v4063, %v4057
        %v4598 = vpack.c.b16 %v4070, %v4064
        %v4599 = vpack.c.b16 %v4071, %v4065
        %v4600 = vpack.c.b16 %v4072, %v4066
        %v4601 = vpack.c.b16 %v4073, %v4067
        %v4602 = vpack.c.b16 %v4074, %v4068
        %v4603 = vpack.c.b16 %v4075, %v4069
        %v4604 = vpack.c.b16 %v4082, %v4076
        %v4605 = vpack.c.b16 %v4083, %v4077
        %v4606 = vpack.c.b16 %v4084, %v4078
        %v4607 = vpack.c.b16 %v4085, %v4079
        %v4608 = vpack.c.b16 %v4086, %v4080
        %v4609 = vpack.c.b16 %v4087, %v4081
        %v4610 = vpack.c.b16 %v4094, %v4088
        %v4611 = vpack.c.b16 %v4095, %v4089
        %v4612 = vpack.c.b16 %v4096, %v4090
        %v4613 = vpack.c.b16 %v4097, %v4091
        %v4614 = vpack.c.b16 %v4098, %v4092
        %v4615 = vpack.c.b16 %v4099, %v4093
        %v4616 = vpack.c.b16 %v4106, %v4100
        %v4617 = vpack.c.b16 %v4107, %v4101
        %v4618 = vpack.c.b16 %v4108, %v4102
        %v4619 = vpack.c.b16 %v4109, %v4103
        %v4620 = vpack.c.b16 %v4110, %v4104
        %v4621 = vpack.c.b16 %v4111, %v4105
        %v4622 = vpack.c.b16 %v4118, %v4112
        %v4623 = vpack.c.b16 %v4119, %v4113
        %v4624 = vpack.c.b16 %v4120, %v4114
        %v4625 = vpack.c.b16 %v4121, %v4115
        %v4626 = vpack.c.b16 %v4122, %v4116
        %v4627 = vpack.c.b16 %v4123, %v4117
        %v4628 = vpack.c.b16 %v4130, %v4124
        %v4629 = vpack.c.b16 %v4131, %v4125
        %v4630 = vpack.c.b16 %v4132, %v4126
        %v4631 = vpack.c.b16 %v4133, %v4127
        %v4632 = vpack.c.b16 %v4134, %v4128
        %v4633 = vpack.c.b16 %v4135, %v4129
        %v4634 = vpack.c.b16 %v4142, %v4136
        %v4635 = vpack.c.b16 %v4143, %v4137
        %v4636 = vpack.c.b16 %v4144, %v4138
        %v4637 = vpack.c.b16 %v4145, %v4139
        %v4638 = vpack.c.b16 %v4146, %v4140
        %v4639 = vpack.c.b16 %v4147, %v4141
        %v4640 = vpack.c.b16 %v4154, %v4148
        %v4641 = vpack.c.b16 %v4155, %v4149
        %v4642 = vpack.c.b16 %v4156, %v4150
        %v4643 = vpack.c.b16 %v4157, %v4151
        %v4644 = vpack.c.b16 %v4158, %v4152
        %v4645 = vpack.c.b16 %v4159, %v4153
        %v4646 = vpack.c.b16 %v4166, %v4160
        %v4647 = vpack.c.b16 %v4167, %v4161
        %v4648 = vpack.c.b16 %v4168, %v4162
        %v4649 = vpack.c.b16 %v4169, %v4163
        %v4650 = vpack.c.b16 %v4170, %v4164
        %v4651 = vpack.c.b16 %v4171, %v4165
        %v4652 = vpack.c.b16 %v4178, %v4172
        %v4653 = vpack.c.b16 %v4179, %v4173
        %v4654 = vpack.c.b16 %v4180, %v4174
        %v4655 = vpack.c.b16 %v4181, %v4175
        %v4656 = vpack.c.b16 %v4182, %v4176
        %v4657 = vpack.c.b16 %v4183, %v4177
        %v4658 = vpack.c.b16 %v4190, %v4184
        %v4659 = vpack.c.b16 %v4191, %v4185
        %v4660 = vpack.c.b16 %v4192, %v4186
        %v4661 = vpack.c.b16 %v4193, %v4187
        %v4662 = vpack.c.b16 %v4194, %v4188
        %v4663 = vpack.c.b16 %v4195, %v4189
        %v4664 = vpack.c.b16 %v4202, %v4196
        %v4665 = vpack.c.b16 %v4203, %v4197
        %v4666 = vpack.c.b16 %v4204, %v4198
        %v4667 = vpack.c.b16 %v4205, %v4199
        %v4668 = vpack.c.b16 %v4206, %v4200
        %v4669 = vpack.c.b16 %v4207, %v4201
        %v4670 = vpack.c.b16 %v4214, %v4208
        %v4671 = vpack.c.b16 %v4215, %v4209
        %v4672 = vpack.c.b16 %v4216, %v4210
        %v4673 = vpack.c.b16 %v4217, %v4211
        %v4674 = vpack.c.b16 %v4218, %v4212
        %v4675 = vpack.c.b16 %v4219, %v4213
        %v4676 = vpack.c.b16 %v4226, %v4220
        %v4677 = vpack.c.b16 %v4227, %v4221
        %v4678 = vpack.c.b16 %v4228, %v4222
        %v4679 = vpack.c.b16 %v4229, %v4223
        %v4680 = vpack.c.b16 %v4230, %v4224
        %v4681 = vpack.c.b16 %v4231, %v4225
        %v4682 = vpack.c.b16 %v4238, %v4232
        %v4683 = vpack.c.b16 %v4239, %v4233
        %v4684 = vpack.c.b16 %v4240, %v4234
        %v4685 = vpack.c.b16 %v4241, %v4235
        %v4686 = vpack.c.b16 %v4242, %v4236
        %v4687 = vpack.c.b16 %v4243, %v4237
        %v4688 = vpack.c.b16 %v4250, %v4244
        %v4689 = vpack.c.b16 %v4251, %v4245
        %v4690 = vpack.c.b16 %v4252, %v4246
        %v4691 = vpack.c.b16 %v4253, %v4247
        %v4692 = vpack.c.b16 %v4254, %v4248
        %v4693 = vpack.c.b16 %v4255, %v4249
        %v4694 = vpack.c.b16 %v4262, %v4256
        %v4695 = vpack.c.b16 %v4263, %v4257
        %v4696 = vpack.c.b16 %v4264, %v4258
        %v4697 = vpack.c.b16 %v4265, %v4259
        %v4698 = vpack.c.b16 %v4266, %v4260
        %v4699 = vpack.c.b16 %v4267, %v4261
        %v4700 = vpack.c.b16 %v4274, %v4268
        %v4701 = vpack.c.b16 %v4275, %v4269
        %v4702 = vpack.c.b16 %v4276, %v4270
        %v4703 = vpack.c.b16 %v4277, %v4271
        %v4704 = vpack.c.b16 %v4278, %v4272
        %v4705 = vpack.c.b16 %v4279, %v4273
        %v4706 = vpack.c.b16 %v4286, %v4280
        %v4707 = vpack.c.b16 %v4287, %v4281
        %v4708 = vpack.c.b16 %v4288, %v4282
        %v4709 = vpack.c.b16 %v4289, %v4283
        %v4710 = vpack.c.b16 %v4290, %v4284
        %v4711 = vpack.c.b16 %v4291, %v4285
        %v4712 = vpack.c.b16 %v4298, %v4292
        %v4713 = vpack.c.b16 %v4299, %v4293
        %v4714 = vpack.c.b16 %v4300, %v4294
        %v4715 = vpack.c.b16 %v4301, %v4295
        %v4716 = vpack.c.b16 %v4302, %v4296
        %v4717 = vpack.c.b16 %v4303, %v4297
        %v4718 = vpack.c.b16 %v4310, %v4304
        %v4719 = vpack.c.b16 %v4311, %v4305
        %v4720 = vpack.c.b16 %v4312, %v4306
        %v4721 = vpack.c.b16 %v4313, %v4307
        %v4722 = vpack.c.b16 %v4314, %v4308
        %v4723 = vpack.c.b16 %v4315, %v4309
        %v4724 = vpack.c.b16 %v4322, %v4316
        %v4725 = vpack.c.b16 %v4323, %v4317
        %v4726 = vpack.c.b16 %v4324, %v4318
        %v4727 = vpack.c.b16 %v4325, %v4319
        %v4728 = vpack.c.b16 %v4326, %v4320
        %v4729 = vpack.c.b16 %v4327, %v4321
        %v4730 = vpack.c.b16 %v4334, %v4328
        %v4731 = vpack.c.b16 %v4335, %v4329
        %v4732 = vpack.c.b16 %v4336, %v4330
        %v4733 = vpack.c.b16 %v4337, %v4331
        %v4734 = vpack.c.b16 %v4338, %v4332
        %v4735 = vpack.c.b16 %v4339, %v4333
        %v4736 = vpack.c.b16 %v4346, %v4340
        %v4737 = vpack.c.b16 %v4347, %v4341
        %v4738 = vpack.c.b16 %v4348, %v4342
        %v4739 = vpack.c.b16 %v4349, %v4343
        %v4740 = vpack.c.b16 %v4350, %v4344
        %v4741 = vpack.c.b16 %v4351, %v4345
        %v4742 = vpack.c.b16 %v4358, %v4352
        %v4743 = vpack.c.b16 %v4359, %v4353
        %v4744 = vpack.c.b16 %v4360, %v4354
        %v4745 = vpack.c.b16 %v4361, %v4355
        %v4746 = vpack.c.b16 %v4362, %v4356
        %v4747 = vpack.c.b16 %v4363, %v4357
        %v4748 = vpack.c.b16 %v4370, %v4364
        %v4749 = vpack.c.b16 %v4371, %v4365
        %v4750 = vpack.c.b16 %v4372, %v4366
        %v4751 = vpack.c.b16 %v4373, %v4367
        %v4752 = vpack.c.b16 %v4374, %v4368
        %v4753 = vpack.c.b16 %v4375, %v4369
        %v4754 = vpack.c.b16 %v4382, %v4376
        %v4755 = vpack.c.b16 %v4383, %v4377
        %v4756 = vpack.c.b16 %v4384, %v4378
        %v4757 = vpack.c.b16 %v4385, %v4379
        %v4758 = vpack.c.b16 %v4386, %v4380
        %v4759 = vpack.c.b16 %v4387, %v4381
        %v4760 = vpack.c.b16 %v4394, %v4388
        %v4761 = vpack.c.b16 %v4395, %v4389
        %v4762 = vpack.c.b16 %v4396, %v4390
        %v4763 = vpack.c.b16 %v4397, %v4391
        %v4764 = vpack.c.b16 %v4398, %v4392
        %v4765 = vpack.c.b16 %v4399, %v4393
        %v4766 = vpack.c.b16 %v4406, %v4400
        %v4767 = vpack.c.b16 %v4407, %v4401
        %v4768 = vpack.c.b16 %v4408, %v4402
        %v4769 = vpack.c.b16 %v4409, %v4403
        %v4770 = vpack.c.b16 %v4410, %v4404
        %v4771 = vpack.c.b16 %v4411, %v4405
        %v4772 = vpack.c.b16 %v4418, %v4412
        %v4773 = vpack.c.b16 %v4419, %v4413
        %v4774 = vpack.c.b16 %v4420, %v4414
        %v4775 = vpack.c.b16 %v4421, %v4415
        %v4776 = vpack.c.b16 %v4422, %v4416
        %v4777 = vpack.c.b16 %v4423, %v4417
        %v4778 = vpack.c.b16 %v4430, %v4424
        %v4779 = vpack.c.b16 %v4431, %v4425
        %v4780 = vpack.c.b16 %v4432, %v4426
        %v4781 = vpack.c.b16 %v4433, %v4427
        %v4782 = vpack.c.b16 %v4434, %v4428
        %v4783 = vpack.c.b16 %v4435, %v4429
        %v4784 = vpack.c.b16 %v4442, %v4436
        %v4785 = vpack.c.b16 %v4443, %v4437
        %v4786 = vpack.c.b16 %v4444, %v4438
        %v4787 = vpack.c.b16 %v4445, %v4439
        %v4788 = vpack.c.b16 %v4446, %v4440
        %v4789 = vpack.c.b16 %v4447, %v4441
        %v4790 = vpack.c.b16 %v4454, %v4448
        %v4791 = vpack.c.b16 %v4455, %v4449
        %v4792 = vpack.c.b16 %v4456, %v4450
        %v4793 = vpack.c.b16 %v4457, %v4451
        %v4794 = vpack.c.b16 %v4458, %v4452
        %v4795 = vpack.c.b16 %v4459, %v4453
        %v4796 = vpack.c.b16 %v4466, %v4460
        %v4797 = vpack.c.b16 %v4467, %v4461
        %v4798 = vpack.c.b16 %v4468, %v4462
        %v4799 = vpack.c.b16 %v4469, %v4463
        %v4800 = vpack.c.b16 %v4470, %v4464
        %v4801 = vpack.c.b16 %v4471, %v4465
        %v4802 = vpack.c.b16 %v4478, %v4472
        %v4803 = vpack.c.b16 %v4479, %v4473
        %v4804 = vpack.c.b16 %v4480, %v4474
        %v4805 = vpack.c.b16 %v4481, %v4475
        %v4806 = vpack.c.b16 %v4482, %v4476
        %v4807 = vpack.c.b16 %v4483, %v4477
        %v4808 = vpack.c.b16 %v4490, %v4484
        %v4809 = vpack.c.b16 %v4491, %v4485
        %v4810 = vpack.c.b16 %v4492, %v4486
        %v4811 = vpack.c.b16 %v4493, %v4487
        %v4812 = vpack.c.b16 %v4494, %v4488
        %v4813 = vpack.c.b16 %v4495, %v4489
        %v4814 = vpack.c.b16 %v4502, %v4496
        %v4815 = vpack.c.b16 %v4503, %v4497
        %v4816 = vpack.c.b16 %v4504, %v4498
        %v4817 = vpack.c.b16 %v4505, %v4499
        %v4818 = vpack.c.b16 %v4506, %v4500
        %v4819 = vpack.c.b16 %v4507, %v4501
        %v4820 = vpack.c.b16 %v4514, %v4508
        %v4821 = vpack.c.b16 %v4515, %v4509
        %v4822 = vpack.c.b16 %v4516, %v4510
        %v4823 = vpack.c.b16 %v4517, %v4511
        %v4824 = vpack.c.b16 %v4518, %v4512
        %v4825 = vpack.c.b16 %v4519, %v4513
        %v4826 = vpack.c.b16 %v4526, %v4520
        %v4827 = vpack.c.b16 %v4527, %v4521
        %v4828 = vpack.c.b16 %v4528, %v4522
        %v4829 = vpack.c.b16 %v4529, %v4523
        %v4830 = vpack.c.b16 %v4530, %v4524
        %v4831 = vpack.c.b16 %v4531, %v4525
        %v4832 = vpack.c.b16 %v4538, %v4532
        %v4833 = vpack.c.b16 %v4539, %v4533
        %v4834 = vpack.c.b16 %v4540, %v4534
        %v4835 = vpack.c.b16 %v4541, %v4535
        %v4836 = vpack.c.b16 %v4542, %v4536
        %v4837 = vpack.c.b16 %v4543, %v4537
        %v4838 = vpack.c.b16 %v4550, %v4544
        %v4839 = vpack.c.b16 %v4551, %v4545
        %v4840 = vpack.c.b16 %v4552, %v4546
        %v4841 = vpack.c.b16 %v4553, %v4547
        %v4842 = vpack.c.b16 %v4554, %v4548
        %v4843 = vpack.c.b16 %v4555, %v4549
        %5132 = vmatprep.subr.bf16.mxu0 %v4599
        %5133 = vmatpush1.bf16.msra.mxu0 %v4598
        %5134 = vmatprep.subr.bf16.mxu0 %v4593
        %5135 = vmatpush1.bf16.msra.mxu0 %v4592
        %5136 = vmatprep.subr.bf16.mxu0 %v4587
        %5137 = vmatpush1.bf16.msra.mxu0 %v4586
        %5138 = vmatprep.subr.bf16.mxu0 %v4581
        %5139 = vmatpush1.bf16.msra.mxu0 %v4580
        %5140 = vmatprep.subr.bf16.mxu0 %v4575
        %5141 = vmatpush1.bf16.msra.mxu0 %v4574
        %5142 = vmatprep.subr.bf16.mxu0 %v4569
        %5143 = vmatpush1.bf16.msra.mxu0 %v4568
        %5144 = vmatprep.subr.bf16.mxu0 %v4563
        %5145 = vmatpush1.bf16.msra.mxu0 %v4562
        %5146 = vmatprep.subr.bf16.mxu0 %v4557
        %5147 = vmatpush1.bf16.msra.mxu0 %v4556
        %5148 = vmatprep.subr.bf16.mxu0 %v4647
        %5149 = vmatpush2.bf16.msra.mxu0 %v4646
        %5150 = vmatprep.subr.bf16.mxu0 %v4641
        %5151 = vmatpush2.bf16.msra.mxu0 %v4640
        %5152 = vmatprep.subr.bf16.mxu0 %v4635
        %5153 = vmatpush2.bf16.msra.mxu0 %v4634
        %5154 = vmatprep.subr.bf16.mxu0 %v4629
        %5155 = vmatpush2.bf16.msra.mxu0 %v4628
        %5156 = vmatprep.subr.bf16.mxu0 %v4623
        %5157 = vmatpush2.bf16.msra.mxu0 %v4622
        %5158 = vmatprep.subr.bf16.mxu0 %v4617
        %5159 = vmatpush2.bf16.msra.mxu0 %v4616
        %5160 = vmatprep.subr.bf16.mxu0 %v4611
        %5161 = vmatpush2.bf16.msra.mxu0 %v4610
        %5162 = vmatprep.subr.bf16.mxu0 %v4605
        %5163 = vmatpush2.bf16.msra.mxu0 %v4604
        %5164 = vmatprep.mubr.bf16.mxu0 %v3399
        %5165 = vmatmul.mubr.bf16.gmra.mxu0 %v3398
        %v5166 = vpop.f32.mrf.mxu0
        %v5167 = vadd.f32 0.0, %v5166
        %v5168 = vpop.f32.mrf.mxu0
        %v5169 = vadd.f32 0.0, %v5168
        %v5170 = vpop.f32.mrf.mxu0
        %v5171 = vpop.f32.mrf.mxu0
        %5172 = vdwg.mxu0
        %5173 = vmatprep.subr.bf16.mxu0 %v4695
        %5174 = vmatpush1.bf16.msra.mxu0 %v4694
        %5175 = vmatprep.subr.bf16.mxu0 %v4689
        %5176 = vmatpush1.bf16.msra.mxu0 %v4688
        %5177 = vmatprep.subr.bf16.mxu0 %v4683
        %5178 = vmatpush1.bf16.msra.mxu0 %v4682
        %5179 = vmatprep.subr.bf16.mxu0 %v4677
        %5180 = vmatpush1.bf16.msra.mxu0 %v4676
        %5181 = vmatprep.subr.bf16.mxu0 %v4671
        %5182 = vmatpush1.bf16.msra.mxu0 %v4670
        %5183 = vmatprep.subr.bf16.mxu0 %v4665
        %5184 = vmatpush1.bf16.msra.mxu0 %v4664
        %5185 = vmatprep.subr.bf16.mxu0 %v4659
        %5186 = vmatpush1.bf16.msra.mxu0 %v4658
        %5187 = vmatprep.subr.bf16.mxu0 %v4653
        %5188 = vmatpush1.bf16.msra.mxu0 %v4652
        %5189 = vmatprep.subr.bf16.mxu0 %v4743
        %5190 = vmatpush2.bf16.msra.mxu0 %v4742
        %5191 = vmatprep.subr.bf16.mxu0 %v4737
        %5192 = vmatpush2.bf16.msra.mxu0 %v4736
        %5193 = vmatprep.subr.bf16.mxu0 %v4731
        %5194 = vmatpush2.bf16.msra.mxu0 %v4730
        %5195 = vmatprep.subr.bf16.mxu0 %v4725
        %5196 = vmatpush2.bf16.msra.mxu0 %v4724
        %5197 = vmatprep.subr.bf16.mxu0 %v4719
        %5198 = vmatpush2.bf16.msra.mxu0 %v4718
        %5199 = vmatprep.subr.bf16.mxu0 %v4713
        %5200 = vmatpush2.bf16.msra.mxu0 %v4712
        %5201 = vmatprep.subr.bf16.mxu0 %v4707
        %5202 = vmatpush2.bf16.msra.mxu0 %v4706
        %5203 = vmatprep.subr.bf16.mxu0 %v4701
        %5204 = vmatpush2.bf16.msra.mxu0 %v4700
        %5205 = vmatprep.mubr.bf16.mxu0 %v3401
        %5206 = vmatmul.mubr.bf16.gmra.mxu0 %v3400
        %v5207 = vpop.f32.mrf.mxu0
        %v5208 = vadd.f32 %v5167, %v5207
        %v5209 = vpop.f32.mrf.mxu0
        %v5210 = vadd.f32 %v5169, %v5209
        %v5211 = vpop.f32.mrf.mxu0
        %v5212 = vpop.f32.mrf.mxu0
        %5213 = vdwg.mxu0
        %5214 = vmatprep.subr.bf16.mxu0 %v4791
        %5215 = vmatpush1.bf16.msra.mxu0 %v4790
        %5216 = vmatprep.subr.bf16.mxu0 %v4785
        %5217 = vmatpush1.bf16.msra.mxu0 %v4784
        %5218 = vmatprep.subr.bf16.mxu0 %v4779
        %5219 = vmatpush1.bf16.msra.mxu0 %v4778
        %5220 = vmatprep.subr.bf16.mxu0 %v4773
        %5221 = vmatpush1.bf16.msra.mxu0 %v4772
        %5222 = vmatprep.subr.bf16.mxu0 %v4767
        %5223 = vmatpush1.bf16.msra.mxu0 %v4766
        %5224 = vmatprep.subr.bf16.mxu0 %v4761
        %5225 = vmatpush1.bf16.msra.mxu0 %v4760
        %5226 = vmatprep.subr.bf16.mxu0 %v4755
        %5227 = vmatpush1.bf16.msra.mxu0 %v4754
        %5228 = vmatprep.subr.bf16.mxu0 %v4749
        %5229 = vmatpush1.bf16.msra.mxu0 %v4748
        %5230 = vmatprep.subr.bf16.mxu0 %v4839
        %5231 = vmatpush2.bf16.msra.mxu0 %v4838
        %5232 = vmatprep.subr.bf16.mxu0 %v4833
        %5233 = vmatpush2.bf16.msra.mxu0 %v4832
        %5234 = vmatprep.subr.bf16.mxu0 %v4827
        %5235 = vmatpush2.bf16.msra.mxu0 %v4826
        %5236 = vmatprep.subr.bf16.mxu0 %v4821
        %5237 = vmatpush2.bf16.msra.mxu0 %v4820
        %5238 = vmatprep.subr.bf16.mxu0 %v4815
        %5239 = vmatpush2.bf16.msra.mxu0 %v4814
        %5240 = vmatprep.subr.bf16.mxu0 %v4809
        %5241 = vmatpush2.bf16.msra.mxu0 %v4808
        %5242 = vmatprep.subr.bf16.mxu0 %v4803
        %5243 = vmatpush2.bf16.msra.mxu0 %v4802
        %5244 = vmatprep.subr.bf16.mxu0 %v4797
        %5245 = vmatpush2.bf16.msra.mxu0 %v4796
        %5246 = vmatprep.mubr.bf16.mxu0 %v3403
        %5247 = vmatmul.mubr.bf16.gmra.mxu0 %v3402
        %v5248 = vpop.f32.mrf.mxu0
        %v5249 = vadd.f32 %v5208, %v5248
        %v5250 = vpop.f32.mrf.mxu0
        %v5251 = vadd.f32 %v5210, %v5250
        %v5252 = vpop.f32.mrf.mxu0
        %v5253 = vpop.f32.mrf.mxu0
        %5254 = vdwg.mxu0
        %5255 = vmatprep.subr.bf16.mxu0 %v4601
        %5256 = vmatpush1.bf16.msra.mxu0 %v4600
        %5257 = vmatprep.subr.bf16.mxu0 %v4595
        %5258 = vmatpush1.bf16.msra.mxu0 %v4594
        %5259 = vmatprep.subr.bf16.mxu0 %v4589
        %5260 = vmatpush1.bf16.msra.mxu0 %v4588
        %5261 = vmatprep.subr.bf16.mxu0 %v4583
        %5262 = vmatpush1.bf16.msra.mxu0 %v4582
        %5263 = vmatprep.subr.bf16.mxu0 %v4577
        %5264 = vmatpush1.bf16.msra.mxu0 %v4576
        %5265 = vmatprep.subr.bf16.mxu0 %v4571
        %5266 = vmatpush1.bf16.msra.mxu0 %v4570
        %5267 = vmatprep.subr.bf16.mxu0 %v4565
        %5268 = vmatpush1.bf16.msra.mxu0 %v4564
        %5269 = vmatprep.subr.bf16.mxu0 %v4559
        %5270 = vmatpush1.bf16.msra.mxu0 %v4558
        %5271 = vmatprep.subr.bf16.mxu0 %v4649
        %5272 = vmatpush2.bf16.msra.mxu0 %v4648
        %5273 = vmatprep.subr.bf16.mxu0 %v4643
        %5274 = vmatpush2.bf16.msra.mxu0 %v4642
        %5275 = vmatprep.subr.bf16.mxu0 %v4637
        %5276 = vmatpush2.bf16.msra.mxu0 %v4636
        %5277 = vmatprep.subr.bf16.mxu0 %v4631
        %5278 = vmatpush2.bf16.msra.mxu0 %v4630
        %5279 = vmatprep.subr.bf16.mxu0 %v4625
        %5280 = vmatpush2.bf16.msra.mxu0 %v4624
        %5281 = vmatprep.subr.bf16.mxu0 %v4619
        %5282 = vmatpush2.bf16.msra.mxu0 %v4618
        %5283 = vmatprep.subr.bf16.mxu0 %v4613
        %5284 = vmatpush2.bf16.msra.mxu0 %v4612
        %5285 = vmatprep.subr.bf16.mxu0 %v4607
        %5286 = vmatpush2.bf16.msra.mxu0 %v4606
        %5287 = vmatprep.mubr.bf16.mxu0 %v3399
        %5288 = vmatmul.mubr.bf16.gmra.mxu0 %v3398
        %v5289 = vpop.f32.mrf.mxu0
        %v5290 = vadd.f32 0.0, %v5289
        %v5291 = vpop.f32.mrf.mxu0
        %v5292 = vadd.f32 0.0, %v5291
        %v5293 = vpop.f32.mrf.mxu0
        %v5294 = vpop.f32.mrf.mxu0
        %5295 = vdwg.mxu0
        %5296 = vmatprep.subr.bf16.mxu0 %v4697
        %5297 = vmatpush1.bf16.msra.mxu0 %v4696
        %5298 = vmatprep.subr.bf16.mxu0 %v4691
        %5299 = vmatpush1.bf16.msra.mxu0 %v4690
        %5300 = vmatprep.subr.bf16.mxu0 %v4685
        %5301 = vmatpush1.bf16.msra.mxu0 %v4684
        %5302 = vmatprep.subr.bf16.mxu0 %v4679
        %5303 = vmatpush1.bf16.msra.mxu0 %v4678
        %5304 = vmatprep.subr.bf16.mxu0 %v4673
        %5305 = vmatpush1.bf16.msra.mxu0 %v4672
        %5306 = vmatprep.subr.bf16.mxu0 %v4667
        %5307 = vmatpush1.bf16.msra.mxu0 %v4666
        %5308 = vmatprep.subr.bf16.mxu0 %v4661
        %5309 = vmatpush1.bf16.msra.mxu0 %v4660
        %5310 = vmatprep.subr.bf16.mxu0 %v4655
        %5311 = vmatpush1.bf16.msra.mxu0 %v4654
        %5312 = vmatprep.subr.bf16.mxu0 %v4745
        %5313 = vmatpush2.bf16.msra.mxu0 %v4744
        %5314 = vmatprep.subr.bf16.mxu0 %v4739
        %5315 = vmatpush2.bf16.msra.mxu0 %v4738
        %5316 = vmatprep.subr.bf16.mxu0 %v4733
        %5317 = vmatpush2.bf16.msra.mxu0 %v4732
        %5318 = vmatprep.subr.bf16.mxu0 %v4727
        %5319 = vmatpush2.bf16.msra.mxu0 %v4726
        %5320 = vmatprep.subr.bf16.mxu0 %v4721
        %5321 = vmatpush2.bf16.msra.mxu0 %v4720
        %5322 = vmatprep.subr.bf16.mxu0 %v4715
        %5323 = vmatpush2.bf16.msra.mxu0 %v4714
        %5324 = vmatprep.subr.bf16.mxu0 %v4709
        %5325 = vmatpush2.bf16.msra.mxu0 %v4708
        %5326 = vmatprep.subr.bf16.mxu0 %v4703
        %5327 = vmatpush2.bf16.msra.mxu0 %v4702
        %5328 = vmatprep.mubr.bf16.mxu0 %v3401
        %5329 = vmatmul.mubr.bf16.gmra.mxu0 %v3400
        %v5330 = vpop.f32.mrf.mxu0
        %v5331 = vadd.f32 %v5290, %v5330
        %v5332 = vpop.f32.mrf.mxu0
        %v5333 = vadd.f32 %v5292, %v5332
        %v5334 = vpop.f32.mrf.mxu0
        %v5335 = vpop.f32.mrf.mxu0
        %5336 = vdwg.mxu0
        %5337 = vmatprep.subr.bf16.mxu0 %v4793
        %5338 = vmatpush1.bf16.msra.mxu0 %v4792
        %5339 = vmatprep.subr.bf16.mxu0 %v4787
        %5340 = vmatpush1.bf16.msra.mxu0 %v4786
        %5341 = vmatprep.subr.bf16.mxu0 %v4781
        %5342 = vmatpush1.bf16.msra.mxu0 %v4780
        %5343 = vmatprep.subr.bf16.mxu0 %v4775
        %5344 = vmatpush1.bf16.msra.mxu0 %v4774
        %5345 = vmatprep.subr.bf16.mxu0 %v4769
        %5346 = vmatpush1.bf16.msra.mxu0 %v4768
        %5347 = vmatprep.subr.bf16.mxu0 %v4763
        %5348 = vmatpush1.bf16.msra.mxu0 %v4762
        %5349 = vmatprep.subr.bf16.mxu0 %v4757
        %5350 = vmatpush1.bf16.msra.mxu0 %v4756
        %5351 = vmatprep.subr.bf16.mxu0 %v4751
        %5352 = vmatpush1.bf16.msra.mxu0 %v4750
        %5353 = vmatprep.subr.bf16.mxu0 %v4841
        %5354 = vmatpush2.bf16.msra.mxu0 %v4840
        %5355 = vmatprep.subr.bf16.mxu0 %v4835
        %5356 = vmatpush2.bf16.msra.mxu0 %v4834
        %5357 = vmatprep.subr.bf16.mxu0 %v4829
        %5358 = vmatpush2.bf16.msra.mxu0 %v4828
        %5359 = vmatprep.subr.bf16.mxu0 %v4823
        %5360 = vmatpush2.bf16.msra.mxu0 %v4822
        %5361 = vmatprep.subr.bf16.mxu0 %v4817
        %5362 = vmatpush2.bf16.msra.mxu0 %v4816
        %5363 = vmatprep.subr.bf16.mxu0 %v4811
        %5364 = vmatpush2.bf16.msra.mxu0 %v4810
        %5365 = vmatprep.subr.bf16.mxu0 %v4805
        %5366 = vmatpush2.bf16.msra.mxu0 %v4804
        %5367 = vmatprep.subr.bf16.mxu0 %v4799
        %5368 = vmatpush2.bf16.msra.mxu0 %v4798
        %5369 = vmatprep.mubr.bf16.mxu0 %v3403
        %5370 = vmatmul.mubr.bf16.gmra.mxu0 %v3402
        %v5371 = vpop.f32.mrf.mxu0
        %v5372 = vadd.f32 %v5331, %v5371
        %v5373 = vpop.f32.mrf.mxu0
        %v5374 = vadd.f32 %v5333, %v5373
        %v5375 = vpop.f32.mrf.mxu0
        %v5376 = vpop.f32.mrf.mxu0
        %5377 = vdwg.mxu0
        %5378 = vmatprep.subr.bf16.mxu0 %v4603
        %5379 = vmatpush1.bf16.msra.mxu0 %v4602
        %5380 = vmatprep.subr.bf16.mxu0 %v4597
        %5381 = vmatpush1.bf16.msra.mxu0 %v4596
        %5382 = vmatprep.subr.bf16.mxu0 %v4591
        %5383 = vmatpush1.bf16.msra.mxu0 %v4590
        %5384 = vmatprep.subr.bf16.mxu0 %v4585
        %5385 = vmatpush1.bf16.msra.mxu0 %v4584
        %5386 = vmatprep.subr.bf16.mxu0 %v4579
        %5387 = vmatpush1.bf16.msra.mxu0 %v4578
        %5388 = vmatprep.subr.bf16.mxu0 %v4573
        %5389 = vmatpush1.bf16.msra.mxu0 %v4572
        %5390 = vmatprep.subr.bf16.mxu0 %v4567
        %5391 = vmatpush1.bf16.msra.mxu0 %v4566
        %5392 = vmatprep.subr.bf16.mxu0 %v4561
        %5393 = vmatpush1.bf16.msra.mxu0 %v4560
        %5394 = vmatprep.subr.bf16.mxu0 %v4651
        %5395 = vmatpush2.bf16.msra.mxu0 %v4650
        %5396 = vmatprep.subr.bf16.mxu0 %v4645
        %5397 = vmatpush2.bf16.msra.mxu0 %v4644
        %5398 = vmatprep.subr.bf16.mxu0 %v4639
        %5399 = vmatpush2.bf16.msra.mxu0 %v4638
        %5400 = vmatprep.subr.bf16.mxu0 %v4633
        %5401 = vmatpush2.bf16.msra.mxu0 %v4632
        %5402 = vmatprep.subr.bf16.mxu0 %v4627
        %5403 = vmatpush2.bf16.msra.mxu0 %v4626
        %5404 = vmatprep.subr.bf16.mxu0 %v4621
        %5405 = vmatpush2.bf16.msra.mxu0 %v4620
        %5406 = vmatprep.subr.bf16.mxu0 %v4615
        %5407 = vmatpush2.bf16.msra.mxu0 %v4614
        %5408 = vmatprep.subr.bf16.mxu0 %v4609
        %5409 = vmatpush2.bf16.msra.mxu0 %v4608
        %5410 = vmatprep.mubr.bf16.mxu0 %v3399
        %5411 = vmatmul.mubr.bf16.gmra.mxu0 %v3398
        %v5412 = vpop.f32.mrf.mxu0
        %v5413 = vadd.f32 0.0, %v5412
        %v5414 = vpop.f32.mrf.mxu0
        %v5415 = vadd.f32 0.0, %v5414
        %v5416 = vpop.f32.mrf.mxu0
        %v5417 = vpop.f32.mrf.mxu0
        %5418 = vdwg.mxu0
        %5419 = vmatprep.subr.bf16.mxu0 %v4699
        %5420 = vmatpush1.bf16.msra.mxu0 %v4698
        %5421 = vmatprep.subr.bf16.mxu0 %v4693
        %5422 = vmatpush1.bf16.msra.mxu0 %v4692
        %5423 = vmatprep.subr.bf16.mxu0 %v4687
        %5424 = vmatpush1.bf16.msra.mxu0 %v4686
        %5425 = vmatprep.subr.bf16.mxu0 %v4681
        %5426 = vmatpush1.bf16.msra.mxu0 %v4680
        %5427 = vmatprep.subr.bf16.mxu0 %v4675
        %5428 = vmatpush1.bf16.msra.mxu0 %v4674
        %5429 = vmatprep.subr.bf16.mxu0 %v4669
        %5430 = vmatpush1.bf16.msra.mxu0 %v4668
        %5431 = vmatprep.subr.bf16.mxu0 %v4663
        %5432 = vmatpush1.bf16.msra.mxu0 %v4662
        %5433 = vmatprep.subr.bf16.mxu0 %v4657
        %5434 = vmatpush1.bf16.msra.mxu0 %v4656
        %5435 = vmatprep.subr.bf16.mxu0 %v4747
        %5436 = vmatpush2.bf16.msra.mxu0 %v4746
        %5437 = vmatprep.subr.bf16.mxu0 %v4741
        %5438 = vmatpush2.bf16.msra.mxu0 %v4740
        %5439 = vmatprep.subr.bf16.mxu0 %v4735
        %5440 = vmatpush2.bf16.msra.mxu0 %v4734
        %5441 = vmatprep.subr.bf16.mxu0 %v4729
        %5442 = vmatpush2.bf16.msra.mxu0 %v4728
        %5443 = vmatprep.subr.bf16.mxu0 %v4723
        %5444 = vmatpush2.bf16.msra.mxu0 %v4722
        %5445 = vmatprep.subr.bf16.mxu0 %v4717
        %5446 = vmatpush2.bf16.msra.mxu0 %v4716
        %5447 = vmatprep.subr.bf16.mxu0 %v4711
        %5448 = vmatpush2.bf16.msra.mxu0 %v4710
        %5449 = vmatprep.subr.bf16.mxu0 %v4705
        %5450 = vmatpush2.bf16.msra.mxu0 %v4704
        %5451 = vmatprep.mubr.bf16.mxu0 %v3401
        %5452 = vmatmul.mubr.bf16.gmra.mxu0 %v3400
        %v5453 = vpop.f32.mrf.mxu0
        %v5454 = vadd.f32 %v5413, %v5453
        %v5455 = vpop.f32.mrf.mxu0
        %v5456 = vadd.f32 %v5415, %v5455
        %v5457 = vpop.f32.mrf.mxu0
        %v5458 = vpop.f32.mrf.mxu0
        %5459 = vdwg.mxu0
        %5460 = vmatprep.subr.bf16.mxu0 %v4795
        %5461 = vmatpush1.bf16.msra.mxu0 %v4794
        %5462 = vmatprep.subr.bf16.mxu0 %v4789
        %5463 = vmatpush1.bf16.msra.mxu0 %v4788
        %5464 = vmatprep.subr.bf16.mxu0 %v4783
        %5465 = vmatpush1.bf16.msra.mxu0 %v4782
        %5466 = vmatprep.subr.bf16.mxu0 %v4777
        %5467 = vmatpush1.bf16.msra.mxu0 %v4776
        %5468 = vmatprep.subr.bf16.mxu0 %v4771
        %5469 = vmatpush1.bf16.msra.mxu0 %v4770
        %5470 = vmatprep.subr.bf16.mxu0 %v4765
        %5471 = vmatpush1.bf16.msra.mxu0 %v4764
        %5472 = vmatprep.subr.bf16.mxu0 %v4759
        %5473 = vmatpush1.bf16.msra.mxu0 %v4758
        %5474 = vmatprep.subr.bf16.mxu0 %v4753
        %5475 = vmatpush1.bf16.msra.mxu0 %v4752
        %5476 = vmatprep.subr.bf16.mxu0 %v4843
        %5477 = vmatpush2.bf16.msra.mxu0 %v4842
        %5478 = vmatprep.subr.bf16.mxu0 %v4837
        %5479 = vmatpush2.bf16.msra.mxu0 %v4836
        %5480 = vmatprep.subr.bf16.mxu0 %v4831
        %5481 = vmatpush2.bf16.msra.mxu0 %v4830
        %5482 = vmatprep.subr.bf16.mxu0 %v4825
        %5483 = vmatpush2.bf16.msra.mxu0 %v4824
        %5484 = vmatprep.subr.bf16.mxu0 %v4819
        %5485 = vmatpush2.bf16.msra.mxu0 %v4818
        %5486 = vmatprep.subr.bf16.mxu0 %v4813
        %5487 = vmatpush2.bf16.msra.mxu0 %v4812
        %5488 = vmatprep.subr.bf16.mxu0 %v4807
        %5489 = vmatpush2.bf16.msra.mxu0 %v4806
        %5490 = vmatprep.subr.bf16.mxu0 %v4801
        %5491 = vmatpush2.bf16.msra.mxu0 %v4800
        %5492 = vmatprep.mubr.bf16.mxu0 %v3403
        %5493 = vmatmul.mubr.bf16.gmra.mxu0 %v3402
        %v5494 = vpop.f32.mrf.mxu0
        %v5495 = vadd.f32 %v5454, %v5494
        %v5496 = vpop.f32.mrf.mxu0
        %v5497 = vadd.f32 %v5456, %v5496
        %v5498 = vpop.f32.mrf.mxu0
        %v5499 = vpop.f32.mrf.mxu0
        %5500 = vdwg.mxu0
        %v5501 = vld [vmem:[#allocation19] sm:$0x3f]
        %v5503 = vlaneseq
        %v5504 = vshrl.u32 %v5503, 7
        %v5505 = vsub.s32 0, %v5504
        %v5506 = vrot.slane %v5501, %v5505
        %v5507 = vlaneseq
        %v5508 = vshrl.u32 %v5507, 7
        %v5509 = vsub.s32 1, %v5508
        %v5510 = vrot.slane %v5501, %v5509
        %v5511 = vlaneseq
        %v5512 = vshrl.u32 %v5511, 7
        %v5513 = vsub.s32 2, %v5512
        %v5514 = vrot.slane %v5501, %v5513
        %v5515 = vlaneseq
        %v5516 = vshrl.u32 %v5515, 7
        %v5517 = vsub.s32 3, %v5516
        %v5518 = vrot.slane %v5501, %v5517
        %v5519 = vlaneseq
        %v5520 = vshrl.u32 %v5519, 7
        %v5521 = vsub.s32 4, %v5520
        %v5522 = vrot.slane %v5501, %v5521
        %v5523 = vlaneseq
        %v5524 = vshrl.u32 %v5523, 7
        %v5525 = vsub.s32 5, %v5524
        %v5526 = vrot.slane %v5501, %v5525
        %v5533 = vmul.f32 %v5249, %v5506
        %v5534 = vmul.f32 %v5251, %v5510
        %v5535 = vmul.f32 %v5372, %v5514
        %v5536 = vmul.f32 %v5374, %v5518
        %v5537 = vmul.f32 %v5495, %v5522
        %v5538 = vmul.f32 %v5497, %v5526
        %v5539 = vld [vmem:[#allocation28] sm:$0x3f]
        %v5541 = vlaneseq
        %v5542 = vshrl.u32 %v5541, 7
        %v5543 = vsub.s32 0, %v5542
        %v5544 = vrot.slane %v5539, %v5543
        %v5545 = vlaneseq
        %v5546 = vshrl.u32 %v5545, 7
        %v5547 = vsub.s32 1, %v5546
        %v5548 = vrot.slane %v5539, %v5547
        %v5549 = vlaneseq
        %v5550 = vshrl.u32 %v5549, 7
        %v5551 = vsub.s32 2, %v5550
        %v5552 = vrot.slane %v5539, %v5551
        %v5553 = vlaneseq
        %v5554 = vshrl.u32 %v5553, 7
        %v5555 = vsub.s32 3, %v5554
        %v5556 = vrot.slane %v5539, %v5555
        %v5557 = vlaneseq
        %v5558 = vshrl.u32 %v5557, 7
        %v5559 = vsub.s32 4, %v5558
        %v5560 = vrot.slane %v5539, %v5559
        %v5561 = vlaneseq
        %v5562 = vshrl.u32 %v5561, 7
        %v5563 = vsub.s32 5, %v5562
        %v5564 = vrot.slane %v5539, %v5563
        %v5571 = vadd.f32 %v5533, %v5544
        %v5572 = vadd.f32 %v5534, %v5548
        %v5573 = vadd.f32 %v5535, %v5552
        %v5574 = vadd.f32 %v5536, %v5556
        %v5575 = vadd.f32 %v5537, %v5560
        %v5576 = vadd.f32 %v5538, %v5564
        %5577 = vst [vmem:[%s840] sm:$0xff] %v5571
        %5578 = vst [vmem:[%s840 + $0x8] sm:$0xff] %v5572
        %5579 = vst [vmem:[%s840 + $0x10] sm:$0xff] %v5573
        %5580 = vst [vmem:[%s840 + $0x18] sm:$0xff] %v5574
        %5581 = vst [vmem:[%s840 + $0x20] sm:$0xff] %v5575
        %5582 = vst [vmem:[%s840 + $0x28] sm:$0xff] %v5576
        %p5583 = scmp.lt.s32.totalorder %s40, 1
        %s5584 = scalar_select %p5583, %s40, 1
        %s5585 = smul.addr %s5584, 6
        %s5586 = smul.addr %s5585, 8
        %s5587 = scalar_lea.vmem %s19, %s5586
        // Predicated region
        $region169: #{_forward_impl.1} parent=95 // pred_check
          %p5588 = pneg %p462
        $region170: #{_forward_impl.1} parent=95 // pred_check_branch
          %5590 = sbr.rel (%p5588) target = $region172
        $region171: #{_forward_impl.1} parent=95 // pred_region
          _
        $region172: #{_forward_impl.1} parent=95 // pred_fallthru
          _
      $region96: #{_forward_impl.1} parent=5 // pred_fallthru
        _
      %p5591 = scmp.le.s32.totalorder 2, %s35
      // Predicated region
      $region173: #{_forward_impl.1} parent=5 // pred_check
        %p5592 = pneg %p5591
      $region174: #{_forward_impl.1} parent=5 // pred_check_branch
        %5594 = sbr.rel (%p5592) target = $region176
      $region175: #{_forward_impl.1} parent=5 // pred_region
        %s5595 = ssub.s32 %s35, 2
        // Predicated region
        $region177: #{_forward_impl.1} parent=175 // pred_check
          %p5596 = pneg %p468
        $region178: #{_forward_impl.1} parent=175 // pred_check_branch
          %5598 = sbr.rel (%p5596) target = $region180
        $region179: #{_forward_impl.1} parent=175 // pred_region
          %p5599 = scmp.lt.s32.totalorder %s41, 1
          %s5600 = scalar_select %p5599, %s41, 1
          %s5601 = smul.addr %s5600, 6
          %s5602 = smul.addr %s5601, 8
          %s5603 = scalar_lea.vmem %s19, %s5602
        $region180: #{_forward_impl.1} parent=175 // pred_fallthru
          _
      $region176: #{_forward_impl.1} parent=5 // pred_fallthru
        _
    $region6: #{_forward_impl.1} parent=1 // loop_footer
      %s39 = sadd.s32 1, %s35
    $region7: #{_forward_impl.1} parent=1 // loop_footer_branch
      %34 = sbr.rel target = $region3
    $region8: #{_forward_impl.1} parent=1 // loop_exit
      _
    %5604 = vsyncpa [#allocation3], 1
    %s5605 = scalar_lea.sflag [#allocation3], 1
    %5606 = vsyncpa %s5605, 1
    %5607 = vsyncpa [#allocation5], 1
    %5608 = vsyncpa [#allocation8], 1
    %5609 = vsyncpa [#allocation11], 1
    %5610 = vsyncpa [#allocation14], 1
    %5611 = vsyncpa [#allocation17], 1
    %5612 = vsyncpa [#allocation20], 1
    %5613 = vsyncpa [#allocation23], 1
    %5614 = vsyncpa [#allocation26], 1
    %5615 = vsyncpa [#allocation29], 1

</llo_original>
